<compile_context>
chip_gen: v6e
topology: v6e:2x2x1
jax: 0.10.0
libtpu: 0.0.40
codegen_flags: <defaults>
</compile_context>

<pallas_src>
import jax
import jax.numpy as jnp
from jax import lax
from jax.experimental import pallas as pl
from jax.experimental.pallas import tpu as pltpu

K = 5          # kernel_size
C = 4          # out_channels of the first conv
PAD = 2        # int((1*(5-1)+1-1)/2)


def _make_kernel(D, H, W, NB):
    """Builds the kernel for fixed spatial sizes and NB batch elems per step."""
    HW = H * W
    DP = D + 2 * PAD                       # depth incl. halo
    HP = H + 2 * PAD
    WP = W + 2 * PAD
    LCORE = HP * WP                        # fused (padded h, padded w) lane axis
    LCOREP = ((LCORE + 127) // 128) * 128  # rounded to a full number of vregs

    def kernel(w_ref, b_ref, x_ref, y_ref, out_ref, zbuf_ref):
        # w_ref   : SMEM (K*K*K,) fused conv weights, (kd,kh,kw) row-major  [prefetch]
        # b_ref   : SMEM (1,)     fused bias                                 [prefetch]
        # x_ref   : VMEM (NB, D, H*W)
        # y_ref   : VMEM (NB, D, H*W)
        # out_ref : VMEM (NB, D, LCOREP) padded fused coords (lane-dense)
        # zbuf_ref: VMEM (DP, LCOREP)    padded z plane stack (scratch)

        # Halo / pad / tail lanes must read as zero.  Kept per-step (megacore-
        # safe); interior lanes are fully rewritten below for every nb.
        zbuf_ref[...] = jnp.zeros((DP, LCOREP), jnp.float32)

        for nb in range(NB):
            # ---- z = x + y, packed into the padded fused-lane layout --------
            zsum = x_ref[nb] + y_ref[nb]                 # (D, H*W)
            for h in range(H):
                dst = (h + PAD) * WP + PAD
                zbuf_ref[pl.ds(PAD, D), pl.ds(dst, W)] = zsum[:, h * W:(h + 1) * W]

            # ---- 125-tap FMA with the fused 5x5x5 weights --------------------
            # One lane-aligned load per kd; the 25 (kh, kw) shifts are in-register
            # lane rotations (XLU), which co-issue with the VALU mul/adds.
            acc = jnp.full((D, LCOREP), b_ref[0], jnp.float32)
            for kd in range(K):
                plane = zbuf_ref[pl.ds(kd, D), :]        # (D, LCOREP), lane-aligned
                for kh in range(K):
                    for kw in range(K):
                        delta = (kh - PAD) * WP + (kw - PAD)
                        wv = w_ref[kd * K * K + kh * K + kw]
                        if delta == 0:
                            patch = plane
                        else:
                            # patch[L] = plane[L + delta]; interior output lanes
                            # satisfy 0 <= L+delta < LCORE <= LCOREP, so the
                            # cyclic wrap never pollutes lanes we keep.
                            patch = pltpu.roll(plane, shift=(-delta) % LCOREP, axis=1)
                        acc = acc + wv * patch
            out_ref[nb] = acc

    return kernel, DP, LCOREP


def linear_m_loc_3d(x, y, w, b, cw, cb, *, batch_block=None):
    """x, y: (N, D, H, W) f32. w: (C,1,K,K,K), b: (C,), cw: (C,), cb: (1,)."""
    N, D, H, W = x.shape
    HW = H * W
    HP, WP = H + 2 * PAD, W + 2 * PAD
    LCORE = HP * WP

    # Exact fusion of the 1x1x1 channel mix into the 5x5x5 conv (both linear).
    w_eff = jnp.einsum("c,cdhw->dhw", cw, w[:, 0]).reshape(-1)   # (K*K*K,)
    b_eff = (jnp.dot(cw, b) + cb[0]).reshape(1)                  # (1,)

    # Batch elements per grid step: amortise per-step overhead, but keep >= 2
    # grid iterations whenever possible so the "parallel" axis feeds both v7x TCs.
    if batch_block is None:
        batch_block = 1
        for nb in (4, 2):
            if N % nb == 0 and N // nb >= 2:
                batch_block = nb
                break
    NB = batch_block
    assert N % NB == 0, (N, NB)

    kernel, DP, LCOREP = _make_kernel(D, H, W, NB)

    x2 = x.reshape(N, D, HW)      # free, contiguous reshapes
    y2 = y.reshape(N, D, HW)

    # VMEM budget with headroom (review: raise the scoped limit, keep big blocks).
    block_bytes = (2 * NB * D * HW + NB * D * LCOREP) * 4
    vmem_need = DP * LCOREP * 4 + 2 * block_bytes
    vmem_limit = int(min(max(2 * vmem_need, 32 * 2**20), 128 * 2**20))

    out_padded = pl.pallas_call(
        kernel,
        out_shape=jax.ShapeDtypeStruct((N, D, LCOREP), jnp.float32),
        grid_spec=pltpu.PrefetchScalarGridSpec(
            num_scalar_prefetch=2,                        # w_eff, b_eff -> SMEM once
            grid=(N // NB,),
            in_specs=[
                pl.BlockSpec((NB, D, HW), lambda n, w_s, b_s: (n, 0, 0)),   # x
                pl.BlockSpec((NB, D, HW), lambda n, w_s, b_s: (n, 0, 0)),   # y
            ],
            out_specs=pl.BlockSpec((NB, D, LCOREP), lambda n, w_s, b_s: (n, 0, 0)),
            scratch_shapes=[pltpu.VMEM((DP, LCOREP), jnp.float32)],
        ),
        compiler_params=pltpu.CompilerParams(
            dimension_semantics=("parallel",),            # batch elems independent
            vmem_limit_bytes=vmem_limit),
        cost_estimate=pl.CostEstimate(
            flops=2 * (K ** 3) * N * D * H * W,
            transcendentals=0,
            bytes_accessed=(2 * N * D * HW + N * D * LCOREP) * 4),
    )(w_eff, b_eff, x2, y2)

    # Drop the (h, w) halo (results are in padded fused coordinates).
    out = out_padded[:, :, :LCORE].reshape(N, D, HP, WP)[:, :, PAD:PAD + H, PAD:PAD + W]
    return out


def reference(x, y, w, b, cw, cb):
    """Pure-JAX reference matching the PyTorch module semantics."""
    z = (x + y)[:, None]  # (N, 1, D, H, W)
    out1 = lax.conv_general_dilated(
        z, w, window_strides=(1, 1, 1),
        padding=[(PAD, PAD)] * 3,
        dimension_numbers=("NCDHW", "OIDHW", "NCDHW"),
        precision=lax.Precision.HIGHEST)
    out1 = out1 + b[None, :, None, None, None]
    out2 = jnp.einsum("ncdhw,c->ndhw", out1, cw) + cb[0]
    return out2


if __name__ == "__main__":
    key = jax.random.PRNGKey(0)
    kx, ky, kw_, kb, kcw, kcb = jax.random.split(key, 6)

    N, D, H, W = 2, 8, 16, 16
    x = jax.random.normal(kx, (N, D, H, W), jnp.float32)
    y = jax.random.normal(ky, (N, D, H, W), jnp.float32)

    # Deterministic parameter init (mimics Conv3d uniform(-1/sqrt(fan_in), +)):
    bound1 = 1.0 / (1 * K * K * K) ** 0.5
    w = jax.random.uniform(kw_, (C, 1, K, K, K), jnp.float32, -bound1, bound1)
    b = jax.random.uniform(kb, (C,), jnp.float32, -bound1, bound1)
    bound2 = 1.0 / (C * 1 * 1 * 1) ** 0.5
    cw = jax.random.uniform(kcw, (C,), jnp.float32, -bound2, bound2)
    cb = jax.random.uniform(kcb, (1,), jnp.float32, -bound2, bound2)

    out = jax.block_until_ready(linear_m_loc_3d(x, y, w, b, cw, cb))
    ref = jax.block_until_ready(reference(x, y, w, b, cw, cb))

    assert out.shape == (N, D, H, W), out.shape
    err = float(jnp.max(jnp.abs(out - ref)))
    assert jnp.allclose(out, ref, rtol=1e-4, atol=1e-4), err

    print("KERNEL_OK")
</pallas_src>

<mosaic_0001>
module attributes {stable_mosaic.version = 11 : i64} {
  func.func @kernel(%arg0: i32, %arg1: memref<125xf32, #tpu.memory_space<smem>>, %arg2: memref<1xf32, #tpu.memory_space<smem>>, %arg3: memref<1x8x256xf32, #tpu.memory_space<vmem>>, %arg4: memref<1x8x256xf32, #tpu.memory_space<vmem>>, %arg5: memref<1x8x512xf32, #tpu.memory_space<vmem>>, %arg6: memref<12x512xf32, #tpu.memory_space<vmem>>) attributes {dimension_semantics = [#tpu.dimension_semantics<parallel>], iteration_bounds = array<i64: 2>, scalar_prefetch = 2 : i64, scratch_operands = 1 : i64, tpu.core_type = #tpu.core_type<tc>, window_params = [{transform_indices = @transform_0, window_bounds = array<i64: 1, 8, 256>}, {transform_indices = @transform_1, window_bounds = array<i64: 1, 8, 256>}, {transform_indices = @transform_2, window_bounds = array<i64: 1, 8, 512>}]} {
    %cst = arith.constant 0.000000e+00 : f32
    %0 = vector.broadcast %cst : f32 to vector<12x512xf32>
    %c0 = arith.constant 0 : index
    %c0_0 = arith.constant 0 : index
    %1 = vector.load %arg6[%c0, %c0_0] : memref<12x512xf32, #tpu.memory_space<vmem>>, vector<12x512xf32>
    tpu.vector_store %arg6[%c0, %c0_0], %0 {strides = array<i32>} : memref<12x512xf32, #tpu.memory_space<vmem>>, vector<12x512xf32>,
    %c0_1 = arith.constant 0 : index
    %c0_2 = arith.constant 0 : index
    %c0_3 = arith.constant 0 : index
    %2 = vector.load %arg3[%c0_1, %c0_2, %c0_3] : memref<1x8x256xf32, #tpu.memory_space<vmem>>, vector<1x8x256xf32>
    %3 = vector.shape_cast %2 : vector<1x8x256xf32> to vector<8x256xf32>
    %c0_4 = arith.constant 0 : index
    %c0_5 = arith.constant 0 : index
    %c0_6 = arith.constant 0 : index
    %4 = vector.load %arg4[%c0_4, %c0_5, %c0_6] : memref<1x8x256xf32, #tpu.memory_space<vmem>>, vector<1x8x256xf32>
    %5 = vector.shape_cast %4 : vector<1x8x256xf32> to vector<8x256xf32>
    %6 = arith.addf %3, %5 : vector<8x256xf32>
    %7 = vector.extract_strided_slice %6 {offsets = [0, 0], sizes = [8, 16], strides = [1, 1]} : vector<8x256xf32> to vector<8x16xf32>
    %c2 = arith.constant 2 : index
    %c42 = arith.constant 42 : index
    %8 = vector.load %arg6[%c2, %c42] : memref<12x512xf32, #tpu.memory_space<vmem>>, vector<8x16xf32>
    tpu.vector_store %arg6[%c2, %c42], %7 {strides = array<i32>} : memref<12x512xf32, #tpu.memory_space<vmem>>, vector<8x16xf32>,
    %9 = vector.extract_strided_slice %6 {offsets = [0, 16], sizes = [8, 16], strides = [1, 1]} : vector<8x256xf32> to vector<8x16xf32>
    %c2_7 = arith.constant 2 : index
    %c62 = arith.constant 62 : index
    %10 = vector.load %arg6[%c2_7, %c62] : memref<12x512xf32, #tpu.memory_space<vmem>>, vector<8x16xf32>
    tpu.vector_store %arg6[%c2_7, %c62], %9 {strides = array<i32>} : memref<12x512xf32, #tpu.memory_space<vmem>>, vector<8x16xf32>,
    %11 = vector.extract_strided_slice %6 {offsets = [0, 32], sizes = [8, 16], strides = [1, 1]} : vector<8x256xf32> to vector<8x16xf32>
    %c2_8 = arith.constant 2 : index
    %c82 = arith.constant 82 : index
    %12 = vector.load %arg6[%c2_8, %c82] : memref<12x512xf32, #tpu.memory_space<vmem>>, vector<8x16xf32>
    tpu.vector_store %arg6[%c2_8, %c82], %11 {strides = array<i32>} : memref<12x512xf32, #tpu.memory_space<vmem>>, vector<8x16xf32>,
    %13 = vector.extract_strided_slice %6 {offsets = [0, 48], sizes = [8, 16], strides = [1, 1]} : vector<8x256xf32> to vector<8x16xf32>
    %c2_9 = arith.constant 2 : index
    %c102 = arith.constant 102 : index
    %14 = vector.load %arg6[%c2_9, %c102] : memref<12x512xf32, #tpu.memory_space<vmem>>, vector<8x16xf32>
    tpu.vector_store %arg6[%c2_9, %c102], %13 {strides = array<i32>} : memref<12x512xf32, #tpu.memory_space<vmem>>, vector<8x16xf32>,
    %15 = vector.extract_strided_slice %6 {offsets = [0, 64], sizes = [8, 16], strides = [1, 1]} : vector<8x256xf32> to vector<8x16xf32>
    %c2_10 = arith.constant 2 : index
    %c122 = arith.constant 122 : index
    %16 = vector.load %arg6[%c2_10, %c122] : memref<12x512xf32, #tpu.memory_space<vmem>>, vector<8x16xf32>
    tpu.vector_store %arg6[%c2_10, %c122], %15 {strides = array<i32>} : memref<12x512xf32, #tpu.memory_space<vmem>>, vector<8x16xf32>,
    %17 = vector.extract_strided_slice %6 {offsets = [0, 80], sizes = [8, 16], strides = [1, 1]} : vector<8x256xf32> to vector<8x16xf32>
    %c2_11 = arith.constant 2 : index
    %c142 = arith.constant 142 : index
    %18 = vector.load %arg6[%c2_11, %c142] : memref<12x512xf32, #tpu.memory_space<vmem>>, vector<8x16xf32>
    tpu.vector_store %arg6[%c2_11, %c142], %17 {strides = array<i32>} : memref<12x512xf32, #tpu.memory_space<vmem>>, vector<8x16xf32>,
    %19 = vector.extract_strided_slice %6 {offsets = [0, 96], sizes = [8, 16], strides = [1, 1]} : vector<8x256xf32> to vector<8x16xf32>
    %c2_12 = arith.constant 2 : index
    %c162 = arith.constant 162 : index
    %20 = vector.load %arg6[%c2_12, %c162] : memref<12x512xf32, #tpu.memory_space<vmem>>, vector<8x16xf32>
    tpu.vector_store %arg6[%c2_12, %c162], %19 {strides = array<i32>} : memref<12x512xf32, #tpu.memory_space<vmem>>, vector<8x16xf32>,
    %21 = vector.extract_strided_slice %6 {offsets = [0, 112], sizes = [8, 16], strides = [1, 1]} : vector<8x256xf32> to vector<8x16xf32>
    %c2_13 = arith.constant 2 : index
    %c182 = arith.constant 182 : index
    %22 = vector.load %arg6[%c2_13, %c182] : memref<12x512xf32, #tpu.memory_space<vmem>>, vector<8x16xf32>
    tpu.vector_store %arg6[%c2_13, %c182], %21 {strides = array<i32>} : memref<12x512xf32, #tpu.memory_space<vmem>>, vector<8x16xf32>,
    %23 = vector.extract_strided_slice %6 {offsets = [0, 128], sizes = [8, 16], strides = [1, 1]} : vector<8x256xf32> to vector<8x16xf32>
    %c2_14 = arith.constant 2 : index
    %c202 = arith.constant 202 : index
    %24 = vector.load %arg6[%c2_14, %c202] : memref<12x512xf32, #tpu.memory_space<vmem>>, vector<8x16xf32>
    tpu.vector_store %arg6[%c2_14, %c202], %23 {strides = array<i32>} : memref<12x512xf32, #tpu.memory_space<vmem>>, vector<8x16xf32>,
    %25 = vector.extract_strided_slice %6 {offsets = [0, 144], sizes = [8, 16], strides = [1, 1]} : vector<8x256xf32> to vector<8x16xf32>
    %c2_15 = arith.constant 2 : index
    %c222 = arith.constant 222 : index
    %26 = vector.load %arg6[%c2_15, %c222] : memref<12x512xf32, #tpu.memory_space<vmem>>, vector<8x16xf32>
    tpu.vector_store %arg6[%c2_15, %c222], %25 {strides = array<i32>} : memref<12x512xf32, #tpu.memory_space<vmem>>, vector<8x16xf32>,
    %27 = vector.extract_strided_slice %6 {offsets = [0, 160], sizes = [8, 16], strides = [1, 1]} : vector<8x256xf32> to vector<8x16xf32>
    %c2_16 = arith.constant 2 : index
    %c242 = arith.constant 242 : index
    %28 = vector.load %arg6[%c2_16, %c242] : memref<12x512xf32, #tpu.memory_space<vmem>>, vector<8x16xf32>
    tpu.vector_store %arg6[%c2_16, %c242], %27 {strides = array<i32>} : memref<12x512xf32, #tpu.memory_space<vmem>>, vector<8x16xf32>,
    %29 = vector.extract_strided_slice %6 {offsets = [0, 176], sizes = [8, 16], strides = [1, 1]} : vector<8x256xf32> to vector<8x16xf32>
    %c2_17 = arith.constant 2 : index
    %c262 = arith.constant 262 : index
    %30 = vector.load %arg6[%c2_17, %c262] : memref<12x512xf32, #tpu.memory_space<vmem>>, vector<8x16xf32>
    tpu.vector_store %arg6[%c2_17, %c262], %29 {strides = array<i32>} : memref<12x512xf32, #tpu.memory_space<vmem>>, vector<8x16xf32>,
    %31 = vector.extract_strided_slice %6 {offsets = [0, 192], sizes = [8, 16], strides = [1, 1]} : vector<8x256xf32> to vector<8x16xf32>
    %c2_18 = arith.constant 2 : index
    %c282 = arith.constant 282 : index
    %32 = vector.load %arg6[%c2_18, %c282] : memref<12x512xf32, #tpu.memory_space<vmem>>, vector<8x16xf32>
    tpu.vector_store %arg6[%c2_18, %c282], %31 {strides = array<i32>} : memref<12x512xf32, #tpu.memory_space<vmem>>, vector<8x16xf32>,
    %33 = vector.extract_strided_slice %6 {offsets = [0, 208], sizes = [8, 16], strides = [1, 1]} : vector<8x256xf32> to vector<8x16xf32>
    %c2_19 = arith.constant 2 : index
    %c302 = arith.constant 302 : index
    %34 = vector.load %arg6[%c2_19, %c302] : memref<12x512xf32, #tpu.memory_space<vmem>>, vector<8x16xf32>
    tpu.vector_store %arg6[%c2_19, %c302], %33 {strides = array<i32>} : memref<12x512xf32, #tpu.memory_space<vmem>>, vector<8x16xf32>,
    %35 = vector.extract_strided_slice %6 {offsets = [0, 224], sizes = [8, 16], strides = [1, 1]} : vector<8x256xf32> to vector<8x16xf32>
    %c2_20 = arith.constant 2 : index
    %c322 = arith.constant 322 : index
    %36 = vector.load %arg6[%c2_20, %c322] : memref<12x512xf32, #tpu.memory_space<vmem>>, vector<8x16xf32>
    tpu.vector_store %arg6[%c2_20, %c322], %35 {strides = array<i32>} : memref<12x512xf32, #tpu.memory_space<vmem>>, vector<8x16xf32>,
    %37 = vector.extract_strided_slice %6 {offsets = [0, 240], sizes = [8, 16], strides = [1, 1]} : vector<8x256xf32> to vector<8x16xf32>
    %c2_21 = arith.constant 2 : index
    %c342 = arith.constant 342 : index
    %38 = vector.load %arg6[%c2_21, %c342] : memref<12x512xf32, #tpu.memory_space<vmem>>, vector<8x16xf32>
    tpu.vector_store %arg6[%c2_21, %c342], %37 {strides = array<i32>} : memref<12x512xf32, #tpu.memory_space<vmem>>, vector<8x16xf32>,
    %c0_22 = arith.constant 0 : index
    %39 = memref.load %arg2[%c0_22] : memref<1xf32, #tpu.memory_space<smem>>
    %40 = vector.broadcast %39 : f32 to vector<8x512xf32>
    %c0_23 = arith.constant 0 : index
    %c0_24 = arith.constant 0 : index
    %41 = vector.load %arg6[%c0_23, %c0_24] : memref<12x512xf32, #tpu.memory_space<vmem>>, vector<8x512xf32>
    %c0_25 = arith.constant 0 : index
    %42 = memref.load %arg1[%c0_25] : memref<125xf32, #tpu.memory_space<smem>>
    %c42_i32 = arith.constant 42 : i32
    %43 = tpu.dynamic_rotate %41 by %c42_i32 dim 1 : vector<8x512xf32>, i32 -> vector<8x512xf32>
    %44 = vector.broadcast %42 : f32 to vector<8x512xf32>
    %45 = arith.mulf %44, %43 : vector<8x512xf32>
    %46 = arith.addf %40, %45 : vector<8x512xf32>
    %c1 = arith.constant 1 : index
    %47 = memref.load %arg1[%c1] : memref<125xf32, #tpu.memory_space<smem>>
    %c41_i32 = arith.constant 41 : i32
    %48 = tpu.dynamic_rotate %41 by %c41_i32 dim 1 : vector<8x512xf32>, i32 -> vector<8x512xf32>
    %49 = vector.broadcast %47 : f32 to vector<8x512xf32>
    %50 = arith.mulf %49, %48 : vector<8x512xf32>
    %51 = arith.addf %46, %50 : vector<8x512xf32>
    %c2_26 = arith.constant 2 : index
    %52 = memref.load %arg1[%c2_26] : memref<125xf32, #tpu.memory_space<smem>>
    %c40_i32 = arith.constant 40 : i32
    %53 = tpu.dynamic_rotate %41 by %c40_i32 dim 1 : vector<8x512xf32>, i32 -> vector<8x512xf32>
    %54 = vector.broadcast %52 : f32 to vector<8x512xf32>
    %55 = arith.mulf %54, %53 : vector<8x512xf32>
    %56 = arith.addf %51, %55 : vector<8x512xf32>
    %c3 = arith.constant 3 : index
    %57 = memref.load %arg1[%c3] : memref<125xf32, #tpu.memory_space<smem>>
    %c39_i32 = arith.constant 39 : i32
    %58 = tpu.dynamic_rotate %41 by %c39_i32 dim 1 : vector<8x512xf32>, i32 -> vector<8x512xf32>
    %59 = vector.broadcast %57 : f32 to vector<8x512xf32>
    %60 = arith.mulf %59, %58 : vector<8x512xf32>
    %61 = arith.addf %56, %60 : vector<8x512xf32>
    %c4 = arith.constant 4 : index
    %62 = memref.load %arg1[%c4] : memref<125xf32, #tpu.memory_space<smem>>
    %c38_i32 = arith.constant 38 : i32
    %63 = tpu.dynamic_rotate %41 by %c38_i32 dim 1 : vector<8x512xf32>, i32 -> vector<8x512xf32>
    %64 = vector.broadcast %62 : f32 to vector<8x512xf32>
    %65 = arith.mulf %64, %63 : vector<8x512xf32>
    %66 = arith.addf %61, %65 : vector<8x512xf32>
    %c5 = arith.constant 5 : index
    %67 = memref.load %arg1[%c5] : memref<125xf32, #tpu.memory_space<smem>>
    %c22_i32 = arith.constant 22 : i32
    %68 = tpu.dynamic_rotate %41 by %c22_i32 dim 1 : vector<8x512xf32>, i32 -> vector<8x512xf32>
    %69 = vector.broadcast %67 : f32 to vector<8x512xf32>
    %70 = arith.mulf %69, %68 : vector<8x512xf32>
    %71 = arith.addf %66, %70 : vector<8x512xf32>
    %c6 = arith.constant 6 : index
    %72 = memref.load %arg1[%c6] : memref<125xf32, #tpu.memory_space<smem>>
    %c21_i32 = arith.constant 21 : i32
    %73 = tpu.dynamic_rotate %41 by %c21_i32 dim 1 : vector<8x512xf32>, i32 -> vector<8x512xf32>
    %74 = vector.broadcast %72 : f32 to vector<8x512xf32>
    %75 = arith.mulf %74, %73 : vector<8x512xf32>
    %76 = arith.addf %71, %75 : vector<8x512xf32>
    %c7 = arith.constant 7 : index
    %77 = memref.load %arg1[%c7] : memref<125xf32, #tpu.memory_space<smem>>
    %c20_i32 = arith.constant 20 : i32
    %78 = tpu.dynamic_rotate %41 by %c20_i32 dim 1 : vector<8x512xf32>, i32 -> vector<8x512xf32>
    %79 = vector.broadcast %77 : f32 to vector<8x512xf32>
    %80 = arith.mulf %79, %78 : vector<8x512xf32>
    %81 = arith.addf %76, %80 : vector<8x512xf32>
    %c8 = arith.constant 8 : index
    %82 = memref.load %arg1[%c8] : memref<125xf32, #tpu.memory_space<smem>>
    %c19_i32 = arith.constant 19 : i32
    %83 = tpu.dynamic_rotate %41 by %c19_i32 dim 1 : vector<8x512xf32>, i32 -> vector<8x512xf32>
    %84 = vector.broadcast %82 : f32 to vector<8x512xf32>
    %85 = arith.mulf %84, %83 : vector<8x512xf32>
    %86 = arith.addf %81, %85 : vector<8x512xf32>
    %c9 = arith.constant 9 : index
    %87 = memref.load %arg1[%c9] : memref<125xf32, #tpu.memory_space<smem>>
    %c18_i32 = arith.constant 18 : i32
    %88 = tpu.dynamic_rotate %41 by %c18_i32 dim 1 : vector<8x512xf32>, i32 -> vector<8x512xf32>
    %89 = vector.broadcast %87 : f32 to vector<8x512xf32>
    %90 = arith.mulf %89, %88 : vector<8x512xf32>
    %91 = arith.addf %86, %90 : vector<8x512xf32>
    %c10 = arith.constant 10 : index
    %92 = memref.load %arg1[%c10] : memref<125xf32, #tpu.memory_space<smem>>
    %c2_i32 = arith.constant 2 : i32
    %93 = tpu.dynamic_rotate %41 by %c2_i32 dim 1 : vector<8x512xf32>, i32 -> vector<8x512xf32>
    %94 = vector.broadcast %92 : f32 to vector<8x512xf32>
    %95 = arith.mulf %94, %93 : vector<8x512xf32>
    %96 = arith.addf %91, %95 : vector<8x512xf32>
    %c11 = arith.constant 11 : index
    %97 = memref.load %arg1[%c11] : memref<125xf32, #tpu.memory_space<smem>>
    %c1_i32 = arith.constant 1 : i32
    %98 = tpu.dynamic_rotate %41 by %c1_i32 dim 1 : vector<8x512xf32>, i32 -> vector<8x512xf32>
    %99 = vector.broadcast %97 : f32 to vector<8x512xf32>
    %100 = arith.mulf %99, %98 : vector<8x512xf32>
    %101 = arith.addf %96, %100 : vector<8x512xf32>
    %c12 = arith.constant 12 : index
    %102 = memref.load %arg1[%c12] : memref<125xf32, #tpu.memory_space<smem>>
    %103 = vector.broadcast %102 : f32 to vector<8x512xf32>
    %104 = arith.mulf %103, %41 : vector<8x512xf32>
    %105 = arith.addf %101, %104 : vector<8x512xf32>
    %c13 = arith.constant 13 : index
    %106 = memref.load %arg1[%c13] : memref<125xf32, #tpu.memory_space<smem>>
    %c511_i32 = arith.constant 511 : i32
    %107 = tpu.dynamic_rotate %41 by %c511_i32 dim 1 : vector<8x512xf32>, i32 -> vector<8x512xf32>
    %108 = vector.broadcast %106 : f32 to vector<8x512xf32>
    %109 = arith.mulf %108, %107 : vector<8x512xf32>
    %110 = arith.addf %105, %109 : vector<8x512xf32>
    %c14 = arith.constant 14 : index
    %111 = memref.load %arg1[%c14] : memref<125xf32, #tpu.memory_space<smem>>
    %c510_i32 = arith.constant 510 : i32
    %112 = tpu.dynamic_rotate %41 by %c510_i32 dim 1 : vector<8x512xf32>, i32 -> vector<8x512xf32>
    %113 = vector.broadcast %111 : f32 to vector<8x512xf32>
    %114 = arith.mulf %113, %112 : vector<8x512xf32>
    %115 = arith.addf %110, %114 : vector<8x512xf32>
    %c15 = arith.constant 15 : index
    %116 = memref.load %arg1[%c15] : memref<125xf32, #tpu.memory_space<smem>>
    %c494_i32 = arith.constant 494 : i32
    %117 = tpu.dynamic_rotate %41 by %c494_i32 dim 1 : vector<8x512xf32>, i32 -> vector<8x512xf32>
    %118 = vector.broadcast %116 : f32 to vector<8x512xf32>
    %119 = arith.mulf %118, %117 : vector<8x512xf32>
    %120 = arith.addf %115, %119 : vector<8x512xf32>
    %c16 = arith.constant 16 : index
    %121 = memref.load %arg1[%c16] : memref<125xf32, #tpu.memory_space<smem>>
    %c493_i32 = arith.constant 493 : i32
    %122 = tpu.dynamic_rotate %41 by %c493_i32 dim 1 : vector<8x512xf32>, i32 -> vector<8x512xf32>
    %123 = vector.broadcast %121 : f32 to vector<8x512xf32>
    %124 = arith.mulf %123, %122 : vector<8x512xf32>
    %125 = arith.addf %120, %124 : vector<8x512xf32>
    %c17 = arith.constant 17 : index
    %126 = memref.load %arg1[%c17] : memref<125xf32, #tpu.memory_space<smem>>
    %c492_i32 = arith.constant 492 : i32
    %127 = tpu.dynamic_rotate %41 by %c492_i32 dim 1 : vector<8x512xf32>, i32 -> vector<8x512xf32>
    %128 = vector.broadcast %126 : f32 to vector<8x512xf32>
    %129 = arith.mulf %128, %127 : vector<8x512xf32>
    %130 = arith.addf %125, %129 : vector<8x512xf32>
    %c18 = arith.constant 18 : index
    %131 = memref.load %arg1[%c18] : memref<125xf32, #tpu.memory_space<smem>>
    %c491_i32 = arith.constant 491 : i32
    %132 = tpu.dynamic_rotate %41 by %c491_i32 dim 1 : vector<8x512xf32>, i32 -> vector<8x512xf32>
    %133 = vector.broadcast %131 : f32 to vector<8x512xf32>
    %134 = arith.mulf %133, %132 : vector<8x512xf32>
    %135 = arith.addf %130, %134 : vector<8x512xf32>
    %c19 = arith.constant 19 : index
    %136 = memref.load %arg1[%c19] : memref<125xf32, #tpu.memory_space<smem>>
    %c490_i32 = arith.constant 490 : i32
    %137 = tpu.dynamic_rotate %41 by %c490_i32 dim 1 : vector<8x512xf32>, i32 -> vector<8x512xf32>
    %138 = vector.broadcast %136 : f32 to vector<8x512xf32>
    %139 = arith.mulf %138, %137 : vector<8x512xf32>
    %140 = arith.addf %135, %139 : vector<8x512xf32>
    %c20 = arith.constant 20 : index
    %141 = memref.load %arg1[%c20] : memref<125xf32, #tpu.memory_space<smem>>
    %c474_i32 = arith.constant 474 : i32
    %142 = tpu.dynamic_rotate %41 by %c474_i32 dim 1 : vector<8x512xf32>, i32 -> vector<8x512xf32>
    %143 = vector.broadcast %141 : f32 to vector<8x512xf32>
    %144 = arith.mulf %143, %142 : vector<8x512xf32>
    %145 = arith.addf %140, %144 : vector<8x512xf32>
    %c21 = arith.constant 21 : index
    %146 = memref.load %arg1[%c21] : memref<125xf32, #tpu.memory_space<smem>>
    %c473_i32 = arith.constant 473 : i32
    %147 = tpu.dynamic_rotate %41 by %c473_i32 dim 1 : vector<8x512xf32>, i32 -> vector<8x512xf32>
    %148 = vector.broadcast %146 : f32 to vector<8x512xf32>
    %149 = arith.mulf %148, %147 : vector<8x512xf32>
    %150 = arith.addf %145, %149 : vector<8x512xf32>
    %c22 = arith.constant 22 : index
    %151 = memref.load %arg1[%c22] : memref<125xf32, #tpu.memory_space<smem>>
    %c472_i32 = arith.constant 472 : i32
    %152 = tpu.dynamic_rotate %41 by %c472_i32 dim 1 : vector<8x512xf32>, i32 -> vector<8x512xf32>
    %153 = vector.broadcast %151 : f32 to vector<8x512xf32>
    %154 = arith.mulf %153, %152 : vector<8x512xf32>
    %155 = arith.addf %150, %154 : vector<8x512xf32>
    %c23 = arith.constant 23 : index
    %156 = memref.load %arg1[%c23] : memref<125xf32, #tpu.memory_space<smem>>
    %c471_i32 = arith.constant 471 : i32
    %157 = tpu.dynamic_rotate %41 by %c471_i32 dim 1 : vector<8x512xf32>, i32 -> vector<8x512xf32>
    %158 = vector.broadcast %156 : f32 to vector<8x512xf32>
    %159 = arith.mulf %158, %157 : vector<8x512xf32>
    %160 = arith.addf %155, %159 : vector<8x512xf32>
    %c24 = arith.constant 24 : index
    %161 = memref.load %arg1[%c24] : memref<125xf32, #tpu.memory_space<smem>>
    %c470_i32 = arith.constant 470 : i32
    %162 = tpu.dynamic_rotate %41 by %c470_i32 dim 1 : vector<8x512xf32>, i32 -> vector<8x512xf32>
    %163 = vector.broadcast %161 : f32 to vector<8x512xf32>
    %164 = arith.mulf %163, %162 : vector<8x512xf32>
    %165 = arith.addf %160, %164 : vector<8x512xf32>
    %c1_27 = arith.constant 1 : index
    %c0_28 = arith.constant 0 : index
    %166 = vector.load %arg6[%c1_27, %c0_28] : memref<12x512xf32, #tpu.memory_space<vmem>>, vector<8x512xf32>
    %c25 = arith.constant 25 : index
    %167 = memref.load %arg1[%c25] : memref<125xf32, #tpu.memory_space<smem>>
    %c42_i32_29 = arith.constant 42 : i32
    %168 = tpu.dynamic_rotate %166 by %c42_i32_29 dim 1 : vector<8x512xf32>, i32 -> vector<8x512xf32>
    %169 = vector.broadcast %167 : f32 to vector<8x512xf32>
    %170 = arith.mulf %169, %168 : vector<8x512xf32>
    %171 = arith.addf %165, %170 : vector<8x512xf32>
    %c26 = arith.constant 26 : index
    %172 = memref.load %arg1[%c26] : memref<125xf32, #tpu.memory_space<smem>>
    %c41_i32_30 = arith.constant 41 : i32
    %173 = tpu.dynamic_rotate %166 by %c41_i32_30 dim 1 : vector<8x512xf32>, i32 -> vector<8x512xf32>
    %174 = vector.broadcast %172 : f32 to vector<8x512xf32>
    %175 = arith.mulf %174, %173 : vector<8x512xf32>
    %176 = arith.addf %171, %175 : vector<8x512xf32>
    %c27 = arith.constant 27 : index
    %177 = memref.load %arg1[%c27] : memref<125xf32, #tpu.memory_space<smem>>
    %c40_i32_31 = arith.constant 40 : i32
    %178 = tpu.dynamic_rotate %166 by %c40_i32_31 dim 1 : vector<8x512xf32>, i32 -> vector<8x512xf32>
    %179 = vector.broadcast %177 : f32 to vector<8x512xf32>
    %180 = arith.mulf %179, %178 : vector<8x512xf32>
    %181 = arith.addf %176, %180 : vector<8x512xf32>
    %c28 = arith.constant 28 : index
    %182 = memref.load %arg1[%c28] : memref<125xf32, #tpu.memory_space<smem>>
    %c39_i32_32 = arith.constant 39 : i32
    %183 = tpu.dynamic_rotate %166 by %c39_i32_32 dim 1 : vector<8x512xf32>, i32 -> vector<8x512xf32>
    %184 = vector.broadcast %182 : f32 to vector<8x512xf32>
    %185 = arith.mulf %184, %183 : vector<8x512xf32>
    %186 = arith.addf %181, %185 : vector<8x512xf32>
    %c29 = arith.constant 29 : index
    %187 = memref.load %arg1[%c29] : memref<125xf32, #tpu.memory_space<smem>>
    %c38_i32_33 = arith.constant 38 : i32
    %188 = tpu.dynamic_rotate %166 by %c38_i32_33 dim 1 : vector<8x512xf32>, i32 -> vector<8x512xf32>
    %189 = vector.broadcast %187 : f32 to vector<8x512xf32>
    %190 = arith.mulf %189, %188 : vector<8x512xf32>
    %191 = arith.addf %186, %190 : vector<8x512xf32>
    %c30 = arith.constant 30 : index
    %192 = memref.load %arg1[%c30] : memref<125xf32, #tpu.memory_space<smem>>
    %c22_i32_34 = arith.constant 22 : i32
    %193 = tpu.dynamic_rotate %166 by %c22_i32_34 dim 1 : vector<8x512xf32>, i32 -> vector<8x512xf32>
    %194 = vector.broadcast %192 : f32 to vector<8x512xf32>
    %195 = arith.mulf %194, %193 : vector<8x512xf32>
    %196 = arith.addf %191, %195 : vector<8x512xf32>
    %c31 = arith.constant 31 : index
    %197 = memref.load %arg1[%c31] : memref<125xf32, #tpu.memory_space<smem>>
    %c21_i32_35 = arith.constant 21 : i32
    %198 = tpu.dynamic_rotate %166 by %c21_i32_35 dim 1 : vector<8x512xf32>, i32 -> vector<8x512xf32>
    %199 = vector.broadcast %197 : f32 to vector<8x512xf32>
    %200 = arith.mulf %199, %198 : vector<8x512xf32>
    %201 = arith.addf %196, %200 : vector<8x512xf32>
    %c32 = arith.constant 32 : index
    %202 = memref.load %arg1[%c32] : memref<125xf32, #tpu.memory_space<smem>>
    %c20_i32_36 = arith.constant 20 : i32
    %203 = tpu.dynamic_rotate %166 by %c20_i32_36 dim 1 : vector<8x512xf32>, i32 -> vector<8x512xf32>
    %204 = vector.broadcast %202 : f32 to vector<8x512xf32>
    %205 = arith.mulf %204, %203 : vector<8x512xf32>
    %206 = arith.addf %201, %205 : vector<8x512xf32>
    %c33 = arith.constant 33 : index
    %207 = memref.load %arg1[%c33] : memref<125xf32, #tpu.memory_space<smem>>
    %c19_i32_37 = arith.constant 19 : i32
    %208 = tpu.dynamic_rotate %166 by %c19_i32_37 dim 1 : vector<8x512xf32>, i32 -> vector<8x512xf32>
    %209 = vector.broadcast %207 : f32 to vector<8x512xf32>
    %210 = arith.mulf %209, %208 : vector<8x512xf32>
    %211 = arith.addf %206, %210 : vector<8x512xf32>
    %c34 = arith.constant 34 : index
    %212 = memref.load %arg1[%c34] : memref<125xf32, #tpu.memory_space<smem>>
    %c18_i32_38 = arith.constant 18 : i32
    %213 = tpu.dynamic_rotate %166 by %c18_i32_38 dim 1 : vector<8x512xf32>, i32 -> vector<8x512xf32>
    %214 = vector.broadcast %212 : f32 to vector<8x512xf32>
    %215 = arith.mulf %214, %213 : vector<8x512xf32>
    %216 = arith.addf %211, %215 : vector<8x512xf32>
    %c35 = arith.constant 35 : index
    %217 = memref.load %arg1[%c35] : memref<125xf32, #tpu.memory_space<smem>>
    %c2_i32_39 = arith.constant 2 : i32
    %218 = tpu.dynamic_rotate %166 by %c2_i32_39 dim 1 : vector<8x512xf32>, i32 -> vector<8x512xf32>
    %219 = vector.broadcast %217 : f32 to vector<8x512xf32>
    %220 = arith.mulf %219, %218 : vector<8x512xf32>
    %221 = arith.addf %216, %220 : vector<8x512xf32>
    %c36 = arith.constant 36 : index
    %222 = memref.load %arg1[%c36] : memref<125xf32, #tpu.memory_space<smem>>
    %c1_i32_40 = arith.constant 1 : i32
    %223 = tpu.dynamic_rotate %166 by %c1_i32_40 dim 1 : vector<8x512xf32>, i32 -> vector<8x512xf32>
    %224 = vector.broadcast %222 : f32 to vector<8x512xf32>
    %225 = arith.mulf %224, %223 : vector<8x512xf32>
    %226 = arith.addf %221, %225 : vector<8x512xf32>
    %c37 = arith.constant 37 : index
    %227 = memref.load %arg1[%c37] : memref<125xf32, #tpu.memory_space<smem>>
    %228 = vector.broadcast %227 : f32 to vector<8x512xf32>
    %229 = arith.mulf %228, %166 : vector<8x512xf32>
    %230 = arith.addf %226, %229 : vector<8x512xf32>
    %c38 = arith.constant 38 : index
    %231 = memref.load %arg1[%c38] : memref<125xf32, #tpu.memory_space<smem>>
    %c511_i32_41 = arith.constant 511 : i32
    %232 = tpu.dynamic_rotate %166 by %c511_i32_41 dim 1 : vector<8x512xf32>, i32 -> vector<8x512xf32>
    %233 = vector.broadcast %231 : f32 to vector<8x512xf32>
    %234 = arith.mulf %233, %232 : vector<8x512xf32>
    %235 = arith.addf %230, %234 : vector<8x512xf32>
    %c39 = arith.constant 39 : index
    %236 = memref.load %arg1[%c39] : memref<125xf32, #tpu.memory_space<smem>>
    %c510_i32_42 = arith.constant 510 : i32
    %237 = tpu.dynamic_rotate %166 by %c510_i32_42 dim 1 : vector<8x512xf32>, i32 -> vector<8x512xf32>
    %238 = vector.broadcast %236 : f32 to vector<8x512xf32>
    %239 = arith.mulf %238, %237 : vector<8x512xf32>
    %240 = arith.addf %235, %239 : vector<8x512xf32>
    %c40 = arith.constant 40 : index
    %241 = memref.load %arg1[%c40] : memref<125xf32, #tpu.memory_space<smem>>
    %c494_i32_43 = arith.constant 494 : i32
    %242 = tpu.dynamic_rotate %166 by %c494_i32_43 dim 1 : vector<8x512xf32>, i32 -> vector<8x512xf32>
    %243 = vector.broadcast %241 : f32 to vector<8x512xf32>
    %244 = arith.mulf %243, %242 : vector<8x512xf32>
    %245 = arith.addf %240, %244 : vector<8x512xf32>
    %c41 = arith.constant 41 : index
    %246 = memref.load %arg1[%c41] : memref<125xf32, #tpu.memory_space<smem>>
    %c493_i32_44 = arith.constant 493 : i32
    %247 = tpu.dynamic_rotate %166 by %c493_i32_44 dim 1 : vector<8x512xf32>, i32 -> vector<8x512xf32>
    %248 = vector.broadcast %246 : f32 to vector<8x512xf32>
    %249 = arith.mulf %248, %247 : vector<8x512xf32>
    %250 = arith.addf %245, %249 : vector<8x512xf32>
    %c42_45 = arith.constant 42 : index
    %251 = memref.load %arg1[%c42_45] : memref<125xf32, #tpu.memory_space<smem>>
    %c492_i32_46 = arith.constant 492 : i32
    %252 = tpu.dynamic_rotate %166 by %c492_i32_46 dim 1 : vector<8x512xf32>, i32 -> vector<8x512xf32>
    %253 = vector.broadcast %251 : f32 to vector<8x512xf32>
    %254 = arith.mulf %253, %252 : vector<8x512xf32>
    %255 = arith.addf %250, %254 : vector<8x512xf32>
    %c43 = arith.constant 43 : index
    %256 = memref.load %arg1[%c43] : memref<125xf32, #tpu.memory_space<smem>>
    %c491_i32_47 = arith.constant 491 : i32
    %257 = tpu.dynamic_rotate %166 by %c491_i32_47 dim 1 : vector<8x512xf32>, i32 -> vector<8x512xf32>
    %258 = vector.broadcast %256 : f32 to vector<8x512xf32>
    %259 = arith.mulf %258, %257 : vector<8x512xf32>
    %260 = arith.addf %255, %259 : vector<8x512xf32>
    %c44 = arith.constant 44 : index
    %261 = memref.load %arg1[%c44] : memref<125xf32, #tpu.memory_space<smem>>
    %c490_i32_48 = arith.constant 490 : i32
    %262 = tpu.dynamic_rotate %166 by %c490_i32_48 dim 1 : vector<8x512xf32>, i32 -> vector<8x512xf32>
    %263 = vector.broadcast %261 : f32 to vector<8x512xf32>
    %264 = arith.mulf %263, %262 : vector<8x512xf32>
    %265 = arith.addf %260, %264 : vector<8x512xf32>
    %c45 = arith.constant 45 : index
    %266 = memref.load %arg1[%c45] : memref<125xf32, #tpu.memory_space<smem>>
    %c474_i32_49 = arith.constant 474 : i32
    %267 = tpu.dynamic_rotate %166 by %c474_i32_49 dim 1 : vector<8x512xf32>, i32 -> vector<8x512xf32>
    %268 = vector.broadcast %266 : f32 to vector<8x512xf32>
    %269 = arith.mulf %268, %267 : vector<8x512xf32>
    %270 = arith.addf %265, %269 : vector<8x512xf32>
    %c46 = arith.constant 46 : index
    %271 = memref.load %arg1[%c46] : memref<125xf32, #tpu.memory_space<smem>>
    %c473_i32_50 = arith.constant 473 : i32
    %272 = tpu.dynamic_rotate %166 by %c473_i32_50 dim 1 : vector<8x512xf32>, i32 -> vector<8x512xf32>
    %273 = vector.broadcast %271 : f32 to vector<8x512xf32>
    %274 = arith.mulf %273, %272 : vector<8x512xf32>
    %275 = arith.addf %270, %274 : vector<8x512xf32>
    %c47 = arith.constant 47 : index
    %276 = memref.load %arg1[%c47] : memref<125xf32, #tpu.memory_space<smem>>
    %c472_i32_51 = arith.constant 472 : i32
    %277 = tpu.dynamic_rotate %166 by %c472_i32_51 dim 1 : vector<8x512xf32>, i32 -> vector<8x512xf32>
    %278 = vector.broadcast %276 : f32 to vector<8x512xf32>
    %279 = arith.mulf %278, %277 : vector<8x512xf32>
    %280 = arith.addf %275, %279 : vector<8x512xf32>
    %c48 = arith.constant 48 : index
    %281 = memref.load %arg1[%c48] : memref<125xf32, #tpu.memory_space<smem>>
    %c471_i32_52 = arith.constant 471 : i32
    %282 = tpu.dynamic_rotate %166 by %c471_i32_52 dim 1 : vector<8x512xf32>, i32 -> vector<8x512xf32>
    %283 = vector.broadcast %281 : f32 to vector<8x512xf32>
    %284 = arith.mulf %283, %282 : vector<8x512xf32>
    %285 = arith.addf %280, %284 : vector<8x512xf32>
    %c49 = arith.constant 49 : index
    %286 = memref.load %arg1[%c49] : memref<125xf32, #tpu.memory_space<smem>>
    %c470_i32_53 = arith.constant 470 : i32
    %287 = tpu.dynamic_rotate %166 by %c470_i32_53 dim 1 : vector<8x512xf32>, i32 -> vector<8x512xf32>
    %288 = vector.broadcast %286 : f32 to vector<8x512xf32>
    %289 = arith.mulf %288, %287 : vector<8x512xf32>
    %290 = arith.addf %285, %289 : vector<8x512xf32>
    %c2_54 = arith.constant 2 : index
    %c0_55 = arith.constant 0 : index
    %291 = vector.load %arg6[%c2_54, %c0_55] : memref<12x512xf32, #tpu.memory_space<vmem>>, vector<8x512xf32>
    %c50 = arith.constant 50 : index
    %292 = memref.load %arg1[%c50] : memref<125xf32, #tpu.memory_space<smem>>
    %c42_i32_56 = arith.constant 42 : i32
    %293 = tpu.dynamic_rotate %291 by %c42_i32_56 dim 1 : vector<8x512xf32>, i32 -> vector<8x512xf32>
    %294 = vector.broadcast %292 : f32 to vector<8x512xf32>
    %295 = arith.mulf %294, %293 : vector<8x512xf32>
    %296 = arith.addf %290, %295 : vector<8x512xf32>
    %c51 = arith.constant 51 : index
    %297 = memref.load %arg1[%c51] : memref<125xf32, #tpu.memory_space<smem>>
    %c41_i32_57 = arith.constant 41 : i32
    %298 = tpu.dynamic_rotate %291 by %c41_i32_57 dim 1 : vector<8x512xf32>, i32 -> vector<8x512xf32>
    %299 = vector.broadcast %297 : f32 to vector<8x512xf32>
    %300 = arith.mulf %299, %298 : vector<8x512xf32>
    %301 = arith.addf %296, %300 : vector<8x512xf32>
    %c52 = arith.constant 52 : index
    %302 = memref.load %arg1[%c52] : memref<125xf32, #tpu.memory_space<smem>>
    %c40_i32_58 = arith.constant 40 : i32
    %303 = tpu.dynamic_rotate %291 by %c40_i32_58 dim 1 : vector<8x512xf32>, i32 -> vector<8x512xf32>
    %304 = vector.broadcast %302 : f32 to vector<8x512xf32>
    %305 = arith.mulf %304, %303 : vector<8x512xf32>
    %306 = arith.addf %301, %305 : vector<8x512xf32>
    %c53 = arith.constant 53 : index
    %307 = memref.load %arg1[%c53] : memref<125xf32, #tpu.memory_space<smem>>
    %c39_i32_59 = arith.constant 39 : i32
    %308 = tpu.dynamic_rotate %291 by %c39_i32_59 dim 1 : vector<8x512xf32>, i32 -> vector<8x512xf32>
    %309 = vector.broadcast %307 : f32 to vector<8x512xf32>
    %310 = arith.mulf %309, %308 : vector<8x512xf32>
    %311 = arith.addf %306, %310 : vector<8x512xf32>
    %c54 = arith.constant 54 : index
    %312 = memref.load %arg1[%c54] : memref<125xf32, #tpu.memory_space<smem>>
    %c38_i32_60 = arith.constant 38 : i32
    %313 = tpu.dynamic_rotate %291 by %c38_i32_60 dim 1 : vector<8x512xf32>, i32 -> vector<8x512xf32>
    %314 = vector.broadcast %312 : f32 to vector<8x512xf32>
    %315 = arith.mulf %314, %313 : vector<8x512xf32>
    %316 = arith.addf %311, %315 : vector<8x512xf32>
    %c55 = arith.constant 55 : index
    %317 = memref.load %arg1[%c55] : memref<125xf32, #tpu.memory_space<smem>>
    %c22_i32_61 = arith.constant 22 : i32
    %318 = tpu.dynamic_rotate %291 by %c22_i32_61 dim 1 : vector<8x512xf32>, i32 -> vector<8x512xf32>
    %319 = vector.broadcast %317 : f32 to vector<8x512xf32>
    %320 = arith.mulf %319, %318 : vector<8x512xf32>
    %321 = arith.addf %316, %320 : vector<8x512xf32>
    %c56 = arith.constant 56 : index
    %322 = memref.load %arg1[%c56] : memref<125xf32, #tpu.memory_space<smem>>
    %c21_i32_62 = arith.constant 21 : i32
    %323 = tpu.dynamic_rotate %291 by %c21_i32_62 dim 1 : vector<8x512xf32>, i32 -> vector<8x512xf32>
    %324 = vector.broadcast %322 : f32 to vector<8x512xf32>
    %325 = arith.mulf %324, %323 : vector<8x512xf32>
    %326 = arith.addf %321, %325 : vector<8x512xf32>
    %c57 = arith.constant 57 : index
    %327 = memref.load %arg1[%c57] : memref<125xf32, #tpu.memory_space<smem>>
    %c20_i32_63 = arith.constant 20 : i32
    %328 = tpu.dynamic_rotate %291 by %c20_i32_63 dim 1 : vector<8x512xf32>, i32 -> vector<8x512xf32>
    %329 = vector.broadcast %327 : f32 to vector<8x512xf32>
    %330 = arith.mulf %329, %328 : vector<8x512xf32>
    %331 = arith.addf %326, %330 : vector<8x512xf32>
    %c58 = arith.constant 58 : index
    %332 = memref.load %arg1[%c58] : memref<125xf32, #tpu.memory_space<smem>>
    %c19_i32_64 = arith.constant 19 : i32
    %333 = tpu.dynamic_rotate %291 by %c19_i32_64 dim 1 : vector<8x512xf32>, i32 -> vector<8x512xf32>
    %334 = vector.broadcast %332 : f32 to vector<8x512xf32>
    %335 = arith.mulf %334, %333 : vector<8x512xf32>
    %336 = arith.addf %331, %335 : vector<8x512xf32>
    %c59 = arith.constant 59 : index
    %337 = memref.load %arg1[%c59] : memref<125xf32, #tpu.memory_space<smem>>
    %c18_i32_65 = arith.constant 18 : i32
    %338 = tpu.dynamic_rotate %291 by %c18_i32_65 dim 1 : vector<8x512xf32>, i32 -> vector<8x512xf32>
    %339 = vector.broadcast %337 : f32 to vector<8x512xf32>
    %340 = arith.mulf %339, %338 : vector<8x512xf32>
    %341 = arith.addf %336, %340 : vector<8x512xf32>
    %c60 = arith.constant 60 : index
    %342 = memref.load %arg1[%c60] : memref<125xf32, #tpu.memory_space<smem>>
    %c2_i32_66 = arith.constant 2 : i32
    %343 = tpu.dynamic_rotate %291 by %c2_i32_66 dim 1 : vector<8x512xf32>, i32 -> vector<8x512xf32>
    %344 = vector.broadcast %342 : f32 to vector<8x512xf32>
    %345 = arith.mulf %344, %343 : vector<8x512xf32>
    %346 = arith.addf %341, %345 : vector<8x512xf32>
    %c61 = arith.constant 61 : index
    %347 = memref.load %arg1[%c61] : memref<125xf32, #tpu.memory_space<smem>>
    %c1_i32_67 = arith.constant 1 : i32
    %348 = tpu.dynamic_rotate %291 by %c1_i32_67 dim 1 : vector<8x512xf32>, i32 -> vector<8x512xf32>
    %349 = vector.broadcast %347 : f32 to vector<8x512xf32>
    %350 = arith.mulf %349, %348 : vector<8x512xf32>
    %351 = arith.addf %346, %350 : vector<8x512xf32>
    %c62_68 = arith.constant 62 : index
    %352 = memref.load %arg1[%c62_68] : memref<125xf32, #tpu.memory_space<smem>>
    %353 = vector.broadcast %352 : f32 to vector<8x512xf32>
    %354 = arith.mulf %353, %291 : vector<8x512xf32>
    %355 = arith.addf %351, %354 : vector<8x512xf32>
    %c63 = arith.constant 63 : index
    %356 = memref.load %arg1[%c63] : memref<125xf32, #tpu.memory_space<smem>>
    %c511_i32_69 = arith.constant 511 : i32
    %357 = tpu.dynamic_rotate %291 by %c511_i32_69 dim 1 : vector<8x512xf32>, i32 -> vector<8x512xf32>
    %358 = vector.broadcast %356 : f32 to vector<8x512xf32>
    %359 = arith.mulf %358, %357 : vector<8x512xf32>
    %360 = arith.addf %355, %359 : vector<8x512xf32>
    %c64 = arith.constant 64 : index
    %361 = memref.load %arg1[%c64] : memref<125xf32, #tpu.memory_space<smem>>
    %c510_i32_70 = arith.constant 510 : i32
    %362 = tpu.dynamic_rotate %291 by %c510_i32_70 dim 1 : vector<8x512xf32>, i32 -> vector<8x512xf32>
    %363 = vector.broadcast %361 : f32 to vector<8x512xf32>
    %364 = arith.mulf %363, %362 : vector<8x512xf32>
    %365 = arith.addf %360, %364 : vector<8x512xf32>
    %c65 = arith.constant 65 : index
    %366 = memref.load %arg1[%c65] : memref<125xf32, #tpu.memory_space<smem>>
    %c494_i32_71 = arith.constant 494 : i32
    %367 = tpu.dynamic_rotate %291 by %c494_i32_71 dim 1 : vector<8x512xf32>, i32 -> vector<8x512xf32>
    %368 = vector.broadcast %366 : f32 to vector<8x512xf32>
    %369 = arith.mulf %368, %367 : vector<8x512xf32>
    %370 = arith.addf %365, %369 : vector<8x512xf32>
    %c66 = arith.constant 66 : index
    %371 = memref.load %arg1[%c66] : memref<125xf32, #tpu.memory_space<smem>>
    %c493_i32_72 = arith.constant 493 : i32
    %372 = tpu.dynamic_rotate %291 by %c493_i32_72 dim 1 : vector<8x512xf32>, i32 -> vector<8x512xf32>
    %373 = vector.broadcast %371 : f32 to vector<8x512xf32>
    %374 = arith.mulf %373, %372 : vector<8x512xf32>
    %375 = arith.addf %370, %374 : vector<8x512xf32>
    %c67 = arith.constant 67 : index
    %376 = memref.load %arg1[%c67] : memref<125xf32, #tpu.memory_space<smem>>
    %c492_i32_73 = arith.constant 492 : i32
    %377 = tpu.dynamic_rotate %291 by %c492_i32_73 dim 1 : vector<8x512xf32>, i32 -> vector<8x512xf32>
    %378 = vector.broadcast %376 : f32 to vector<8x512xf32>
    %379 = arith.mulf %378, %377 : vector<8x512xf32>
    %380 = arith.addf %375, %379 : vector<8x512xf32>
    %c68 = arith.constant 68 : index
    %381 = memref.load %arg1[%c68] : memref<125xf32, #tpu.memory_space<smem>>
    %c491_i32_74 = arith.constant 491 : i32
    %382 = tpu.dynamic_rotate %291 by %c491_i32_74 dim 1 : vector<8x512xf32>, i32 -> vector<8x512xf32>
    %383 = vector.broadcast %381 : f32 to vector<8x512xf32>
    %384 = arith.mulf %383, %382 : vector<8x512xf32>
    %385 = arith.addf %380, %384 : vector<8x512xf32>
    %c69 = arith.constant 69 : index
    %386 = memref.load %arg1[%c69] : memref<125xf32, #tpu.memory_space<smem>>
    %c490_i32_75 = arith.constant 490 : i32
    %387 = tpu.dynamic_rotate %291 by %c490_i32_75 dim 1 : vector<8x512xf32>, i32 -> vector<8x512xf32>
    %388 = vector.broadcast %386 : f32 to vector<8x512xf32>
    %389 = arith.mulf %388, %387 : vector<8x512xf32>
    %390 = arith.addf %385, %389 : vector<8x512xf32>
    %c70 = arith.constant 70 : index
    %391 = memref.load %arg1[%c70] : memref<125xf32, #tpu.memory_space<smem>>
    %c474_i32_76 = arith.constant 474 : i32
    %392 = tpu.dynamic_rotate %291 by %c474_i32_76 dim 1 : vector<8x512xf32>, i32 -> vector<8x512xf32>
    %393 = vector.broadcast %391 : f32 to vector<8x512xf32>
    %394 = arith.mulf %393, %392 : vector<8x512xf32>
    %395 = arith.addf %390, %394 : vector<8x512xf32>
    %c71 = arith.constant 71 : index
    %396 = memref.load %arg1[%c71] : memref<125xf32, #tpu.memory_space<smem>>
    %c473_i32_77 = arith.constant 473 : i32
    %397 = tpu.dynamic_rotate %291 by %c473_i32_77 dim 1 : vector<8x512xf32>, i32 -> vector<8x512xf32>
    %398 = vector.broadcast %396 : f32 to vector<8x512xf32>
    %399 = arith.mulf %398, %397 : vector<8x512xf32>
    %400 = arith.addf %395, %399 : vector<8x512xf32>
    %c72 = arith.constant 72 : index
    %401 = memref.load %arg1[%c72] : memref<125xf32, #tpu.memory_space<smem>>
    %c472_i32_78 = arith.constant 472 : i32
    %402 = tpu.dynamic_rotate %291 by %c472_i32_78 dim 1 : vector<8x512xf32>, i32 -> vector<8x512xf32>
    %403 = vector.broadcast %401 : f32 to vector<8x512xf32>
    %404 = arith.mulf %403, %402 : vector<8x512xf32>
    %405 = arith.addf %400, %404 : vector<8x512xf32>
    %c73 = arith.constant 73 : index
    %406 = memref.load %arg1[%c73] : memref<125xf32, #tpu.memory_space<smem>>
    %c471_i32_79 = arith.constant 471 : i32
    %407 = tpu.dynamic_rotate %291 by %c471_i32_79 dim 1 : vector<8x512xf32>, i32 -> vector<8x512xf32>
    %408 = vector.broadcast %406 : f32 to vector<8x512xf32>
    %409 = arith.mulf %408, %407 : vector<8x512xf32>
    %410 = arith.addf %405, %409 : vector<8x512xf32>
    %c74 = arith.constant 74 : index
    %411 = memref.load %arg1[%c74] : memref<125xf32, #tpu.memory_space<smem>>
    %c470_i32_80 = arith.constant 470 : i32
    %412 = tpu.dynamic_rotate %291 by %c470_i32_80 dim 1 : vector<8x512xf32>, i32 -> vector<8x512xf32>
    %413 = vector.broadcast %411 : f32 to vector<8x512xf32>
    %414 = arith.mulf %413, %412 : vector<8x512xf32>
    %415 = arith.addf %410, %414 : vector<8x512xf32>
    %c3_81 = arith.constant 3 : index
    %c0_82 = arith.constant 0 : index
    %416 = vector.load %arg6[%c3_81, %c0_82] : memref<12x512xf32, #tpu.memory_space<vmem>>, vector<8x512xf32>
    %c75 = arith.constant 75 : index
    %417 = memref.load %arg1[%c75] : memref<125xf32, #tpu.memory_space<smem>>
    %c42_i32_83 = arith.constant 42 : i32
    %418 = tpu.dynamic_rotate %416 by %c42_i32_83 dim 1 : vector<8x512xf32>, i32 -> vector<8x512xf32>
    %419 = vector.broadcast %417 : f32 to vector<8x512xf32>
    %420 = arith.mulf %419, %418 : vector<8x512xf32>
    %421 = arith.addf %415, %420 : vector<8x512xf32>
    %c76 = arith.constant 76 : index
    %422 = memref.load %arg1[%c76] : memref<125xf32, #tpu.memory_space<smem>>
    %c41_i32_84 = arith.constant 41 : i32
    %423 = tpu.dynamic_rotate %416 by %c41_i32_84 dim 1 : vector<8x512xf32>, i32 -> vector<8x512xf32>
    %424 = vector.broadcast %422 : f32 to vector<8x512xf32>
    %425 = arith.mulf %424, %423 : vector<8x512xf32>
    %426 = arith.addf %421, %425 : vector<8x512xf32>
    %c77 = arith.constant 77 : index
    %427 = memref.load %arg1[%c77] : memref<125xf32, #tpu.memory_space<smem>>
    %c40_i32_85 = arith.constant 40 : i32
    %428 = tpu.dynamic_rotate %416 by %c40_i32_85 dim 1 : vector<8x512xf32>, i32 -> vector<8x512xf32>
    %429 = vector.broadcast %427 : f32 to vector<8x512xf32>
    %430 = arith.mulf %429, %428 : vector<8x512xf32>
    %431 = arith.addf %426, %430 : vector<8x512xf32>
    %c78 = arith.constant 78 : index
    %432 = memref.load %arg1[%c78] : memref<125xf32, #tpu.memory_space<smem>>
    %c39_i32_86 = arith.constant 39 : i32
    %433 = tpu.dynamic_rotate %416 by %c39_i32_86 dim 1 : vector<8x512xf32>, i32 -> vector<8x512xf32>
    %434 = vector.broadcast %432 : f32 to vector<8x512xf32>
    %435 = arith.mulf %434, %433 : vector<8x512xf32>
    %436 = arith.addf %431, %435 : vector<8x512xf32>
    %c79 = arith.constant 79 : index
    %437 = memref.load %arg1[%c79] : memref<125xf32, #tpu.memory_space<smem>>
    %c38_i32_87 = arith.constant 38 : i32
    %438 = tpu.dynamic_rotate %416 by %c38_i32_87 dim 1 : vector<8x512xf32>, i32 -> vector<8x512xf32>
    %439 = vector.broadcast %437 : f32 to vector<8x512xf32>
    %440 = arith.mulf %439, %438 : vector<8x512xf32>
    %441 = arith.addf %436, %440 : vector<8x512xf32>
    %c80 = arith.constant 80 : index
    %442 = memref.load %arg1[%c80] : memref<125xf32, #tpu.memory_space<smem>>
    %c22_i32_88 = arith.constant 22 : i32
    %443 = tpu.dynamic_rotate %416 by %c22_i32_88 dim 1 : vector<8x512xf32>, i32 -> vector<8x512xf32>
    %444 = vector.broadcast %442 : f32 to vector<8x512xf32>
    %445 = arith.mulf %444, %443 : vector<8x512xf32>
    %446 = arith.addf %441, %445 : vector<8x512xf32>
    %c81 = arith.constant 81 : index
    %447 = memref.load %arg1[%c81] : memref<125xf32, #tpu.memory_space<smem>>
    %c21_i32_89 = arith.constant 21 : i32
    %448 = tpu.dynamic_rotate %416 by %c21_i32_89 dim 1 : vector<8x512xf32>, i32 -> vector<8x512xf32>
    %449 = vector.broadcast %447 : f32 to vector<8x512xf32>
    %450 = arith.mulf %449, %448 : vector<8x512xf32>
    %451 = arith.addf %446, %450 : vector<8x512xf32>
    %c82_90 = arith.constant 82 : index
    %452 = memref.load %arg1[%c82_90] : memref<125xf32, #tpu.memory_space<smem>>
    %c20_i32_91 = arith.constant 20 : i32
    %453 = tpu.dynamic_rotate %416 by %c20_i32_91 dim 1 : vector<8x512xf32>, i32 -> vector<8x512xf32>
    %454 = vector.broadcast %452 : f32 to vector<8x512xf32>
    %455 = arith.mulf %454, %453 : vector<8x512xf32>
    %456 = arith.addf %451, %455 : vector<8x512xf32>
    %c83 = arith.constant 83 : index
    %457 = memref.load %arg1[%c83] : memref<125xf32, #tpu.memory_space<smem>>
    %c19_i32_92 = arith.constant 19 : i32
    %458 = tpu.dynamic_rotate %416 by %c19_i32_92 dim 1 : vector<8x512xf32>, i32 -> vector<8x512xf32>
    %459 = vector.broadcast %457 : f32 to vector<8x512xf32>
    %460 = arith.mulf %459, %458 : vector<8x512xf32>
    %461 = arith.addf %456, %460 : vector<8x512xf32>
    %c84 = arith.constant 84 : index
    %462 = memref.load %arg1[%c84] : memref<125xf32, #tpu.memory_space<smem>>
    %c18_i32_93 = arith.constant 18 : i32
    %463 = tpu.dynamic_rotate %416 by %c18_i32_93 dim 1 : vector<8x512xf32>, i32 -> vector<8x512xf32>
    %464 = vector.broadcast %462 : f32 to vector<8x512xf32>
    %465 = arith.mulf %464, %463 : vector<8x512xf32>
    %466 = arith.addf %461, %465 : vector<8x512xf32>
    %c85 = arith.constant 85 : index
    %467 = memref.load %arg1[%c85] : memref<125xf32, #tpu.memory_space<smem>>
    %c2_i32_94 = arith.constant 2 : i32
    %468 = tpu.dynamic_rotate %416 by %c2_i32_94 dim 1 : vector<8x512xf32>, i32 -> vector<8x512xf32>
    %469 = vector.broadcast %467 : f32 to vector<8x512xf32>
    %470 = arith.mulf %469, %468 : vector<8x512xf32>
    %471 = arith.addf %466, %470 : vector<8x512xf32>
    %c86 = arith.constant 86 : index
    %472 = memref.load %arg1[%c86] : memref<125xf32, #tpu.memory_space<smem>>
    %c1_i32_95 = arith.constant 1 : i32
    %473 = tpu.dynamic_rotate %416 by %c1_i32_95 dim 1 : vector<8x512xf32>, i32 -> vector<8x512xf32>
    %474 = vector.broadcast %472 : f32 to vector<8x512xf32>
    %475 = arith.mulf %474, %473 : vector<8x512xf32>
    %476 = arith.addf %471, %475 : vector<8x512xf32>
    %c87 = arith.constant 87 : index
    %477 = memref.load %arg1[%c87] : memref<125xf32, #tpu.memory_space<smem>>
    %478 = vector.broadcast %477 : f32 to vector<8x512xf32>
    %479 = arith.mulf %478, %416 : vector<8x512xf32>
    %480 = arith.addf %476, %479 : vector<8x512xf32>
    %c88 = arith.constant 88 : index
    %481 = memref.load %arg1[%c88] : memref<125xf32, #tpu.memory_space<smem>>
    %c511_i32_96 = arith.constant 511 : i32
    %482 = tpu.dynamic_rotate %416 by %c511_i32_96 dim 1 : vector<8x512xf32>, i32 -> vector<8x512xf32>
    %483 = vector.broadcast %481 : f32 to vector<8x512xf32>
    %484 = arith.mulf %483, %482 : vector<8x512xf32>
    %485 = arith.addf %480, %484 : vector<8x512xf32>
    %c89 = arith.constant 89 : index
    %486 = memref.load %arg1[%c89] : memref<125xf32, #tpu.memory_space<smem>>
    %c510_i32_97 = arith.constant 510 : i32
    %487 = tpu.dynamic_rotate %416 by %c510_i32_97 dim 1 : vector<8x512xf32>, i32 -> vector<8x512xf32>
    %488 = vector.broadcast %486 : f32 to vector<8x512xf32>
    %489 = arith.mulf %488, %487 : vector<8x512xf32>
    %490 = arith.addf %485, %489 : vector<8x512xf32>
    %c90 = arith.constant 90 : index
    %491 = memref.load %arg1[%c90] : memref<125xf32, #tpu.memory_space<smem>>
    %c494_i32_98 = arith.constant 494 : i32
    %492 = tpu.dynamic_rotate %416 by %c494_i32_98 dim 1 : vector<8x512xf32>, i32 -> vector<8x512xf32>
    %493 = vector.broadcast %491 : f32 to vector<8x512xf32>
    %494 = arith.mulf %493, %492 : vector<8x512xf32>
    %495 = arith.addf %490, %494 : vector<8x512xf32>
    %c91 = arith.constant 91 : index
    %496 = memref.load %arg1[%c91] : memref<125xf32, #tpu.memory_space<smem>>
    %c493_i32_99 = arith.constant 493 : i32
    %497 = tpu.dynamic_rotate %416 by %c493_i32_99 dim 1 : vector<8x512xf32>, i32 -> vector<8x512xf32>
    %498 = vector.broadcast %496 : f32 to vector<8x512xf32>
    %499 = arith.mulf %498, %497 : vector<8x512xf32>
    %500 = arith.addf %495, %499 : vector<8x512xf32>
    %c92 = arith.constant 92 : index
    %501 = memref.load %arg1[%c92] : memref<125xf32, #tpu.memory_space<smem>>
    %c492_i32_100 = arith.constant 492 : i32
    %502 = tpu.dynamic_rotate %416 by %c492_i32_100 dim 1 : vector<8x512xf32>, i32 -> vector<8x512xf32>
    %503 = vector.broadcast %501 : f32 to vector<8x512xf32>
    %504 = arith.mulf %503, %502 : vector<8x512xf32>
    %505 = arith.addf %500, %504 : vector<8x512xf32>
    %c93 = arith.constant 93 : index
    %506 = memref.load %arg1[%c93] : memref<125xf32, #tpu.memory_space<smem>>
    %c491_i32_101 = arith.constant 491 : i32
    %507 = tpu.dynamic_rotate %416 by %c491_i32_101 dim 1 : vector<8x512xf32>, i32 -> vector<8x512xf32>
    %508 = vector.broadcast %506 : f32 to vector<8x512xf32>
    %509 = arith.mulf %508, %507 : vector<8x512xf32>
    %510 = arith.addf %505, %509 : vector<8x512xf32>
    %c94 = arith.constant 94 : index
    %511 = memref.load %arg1[%c94] : memref<125xf32, #tpu.memory_space<smem>>
    %c490_i32_102 = arith.constant 490 : i32
    %512 = tpu.dynamic_rotate %416 by %c490_i32_102 dim 1 : vector<8x512xf32>, i32 -> vector<8x512xf32>
    %513 = vector.broadcast %511 : f32 to vector<8x512xf32>
    %514 = arith.mulf %513, %512 : vector<8x512xf32>
    %515 = arith.addf %510, %514 : vector<8x512xf32>
    %c95 = arith.constant 95 : index
    %516 = memref.load %arg1[%c95] : memref<125xf32, #tpu.memory_space<smem>>
    %c474_i32_103 = arith.constant 474 : i32
    %517 = tpu.dynamic_rotate %416 by %c474_i32_103 dim 1 : vector<8x512xf32>, i32 -> vector<8x512xf32>
    %518 = vector.broadcast %516 : f32 to vector<8x512xf32>
    %519 = arith.mulf %518, %517 : vector<8x512xf32>
    %520 = arith.addf %515, %519 : vector<8x512xf32>
    %c96 = arith.constant 96 : index
    %521 = memref.load %arg1[%c96] : memref<125xf32, #tpu.memory_space<smem>>
    %c473_i32_104 = arith.constant 473 : i32
    %522 = tpu.dynamic_rotate %416 by %c473_i32_104 dim 1 : vector<8x512xf32>, i32 -> vector<8x512xf32>
    %523 = vector.broadcast %521 : f32 to vector<8x512xf32>
    %524 = arith.mulf %523, %522 : vector<8x512xf32>
    %525 = arith.addf %520, %524 : vector<8x512xf32>
    %c97 = arith.constant 97 : index
    %526 = memref.load %arg1[%c97] : memref<125xf32, #tpu.memory_space<smem>>
    %c472_i32_105 = arith.constant 472 : i32
    %527 = tpu.dynamic_rotate %416 by %c472_i32_105 dim 1 : vector<8x512xf32>, i32 -> vector<8x512xf32>
    %528 = vector.broadcast %526 : f32 to vector<8x512xf32>
    %529 = arith.mulf %528, %527 : vector<8x512xf32>
    %530 = arith.addf %525, %529 : vector<8x512xf32>
    %c98 = arith.constant 98 : index
    %531 = memref.load %arg1[%c98] : memref<125xf32, #tpu.memory_space<smem>>
    %c471_i32_106 = arith.constant 471 : i32
    %532 = tpu.dynamic_rotate %416 by %c471_i32_106 dim 1 : vector<8x512xf32>, i32 -> vector<8x512xf32>
    %533 = vector.broadcast %531 : f32 to vector<8x512xf32>
    %534 = arith.mulf %533, %532 : vector<8x512xf32>
    %535 = arith.addf %530, %534 : vector<8x512xf32>
    %c99 = arith.constant 99 : index
    %536 = memref.load %arg1[%c99] : memref<125xf32, #tpu.memory_space<smem>>
    %c470_i32_107 = arith.constant 470 : i32
    %537 = tpu.dynamic_rotate %416 by %c470_i32_107 dim 1 : vector<8x512xf32>, i32 -> vector<8x512xf32>
    %538 = vector.broadcast %536 : f32 to vector<8x512xf32>
    %539 = arith.mulf %538, %537 : vector<8x512xf32>
    %540 = arith.addf %535, %539 : vector<8x512xf32>
    %c4_108 = arith.constant 4 : index
    %c0_109 = arith.constant 0 : index
    %541 = vector.load %arg6[%c4_108, %c0_109] : memref<12x512xf32, #tpu.memory_space<vmem>>, vector<8x512xf32>
    %c100 = arith.constant 100 : index
    %542 = memref.load %arg1[%c100] : memref<125xf32, #tpu.memory_space<smem>>
    %c42_i32_110 = arith.constant 42 : i32
    %543 = tpu.dynamic_rotate %541 by %c42_i32_110 dim 1 : vector<8x512xf32>, i32 -> vector<8x512xf32>
    %544 = vector.broadcast %542 : f32 to vector<8x512xf32>
    %545 = arith.mulf %544, %543 : vector<8x512xf32>
    %546 = arith.addf %540, %545 : vector<8x512xf32>
    %c101 = arith.constant 101 : index
    %547 = memref.load %arg1[%c101] : memref<125xf32, #tpu.memory_space<smem>>
    %c41_i32_111 = arith.constant 41 : i32
    %548 = tpu.dynamic_rotate %541 by %c41_i32_111 dim 1 : vector<8x512xf32>, i32 -> vector<8x512xf32>
    %549 = vector.broadcast %547 : f32 to vector<8x512xf32>
    %550 = arith.mulf %549, %548 : vector<8x512xf32>
    %551 = arith.addf %546, %550 : vector<8x512xf32>
    %c102_112 = arith.constant 102 : index
    %552 = memref.load %arg1[%c102_112] : memref<125xf32, #tpu.memory_space<smem>>
    %c40_i32_113 = arith.constant 40 : i32
    %553 = tpu.dynamic_rotate %541 by %c40_i32_113 dim 1 : vector<8x512xf32>, i32 -> vector<8x512xf32>
    %554 = vector.broadcast %552 : f32 to vector<8x512xf32>
    %555 = arith.mulf %554, %553 : vector<8x512xf32>
    %556 = arith.addf %551, %555 : vector<8x512xf32>
    %c103 = arith.constant 103 : index
    %557 = memref.load %arg1[%c103] : memref<125xf32, #tpu.memory_space<smem>>
    %c39_i32_114 = arith.constant 39 : i32
    %558 = tpu.dynamic_rotate %541 by %c39_i32_114 dim 1 : vector<8x512xf32>, i32 -> vector<8x512xf32>
    %559 = vector.broadcast %557 : f32 to vector<8x512xf32>
    %560 = arith.mulf %559, %558 : vector<8x512xf32>
    %561 = arith.addf %556, %560 : vector<8x512xf32>
    %c104 = arith.constant 104 : index
    %562 = memref.load %arg1[%c104] : memref<125xf32, #tpu.memory_space<smem>>
    %c38_i32_115 = arith.constant 38 : i32
    %563 = tpu.dynamic_rotate %541 by %c38_i32_115 dim 1 : vector<8x512xf32>, i32 -> vector<8x512xf32>
    %564 = vector.broadcast %562 : f32 to vector<8x512xf32>
    %565 = arith.mulf %564, %563 : vector<8x512xf32>
    %566 = arith.addf %561, %565 : vector<8x512xf32>
    %c105 = arith.constant 105 : index
    %567 = memref.load %arg1[%c105] : memref<125xf32, #tpu.memory_space<smem>>
    %c22_i32_116 = arith.constant 22 : i32
    %568 = tpu.dynamic_rotate %541 by %c22_i32_116 dim 1 : vector<8x512xf32>, i32 -> vector<8x512xf32>
    %569 = vector.broadcast %567 : f32 to vector<8x512xf32>
    %570 = arith.mulf %569, %568 : vector<8x512xf32>
    %571 = arith.addf %566, %570 : vector<8x512xf32>
    %c106 = arith.constant 106 : index
    %572 = memref.load %arg1[%c106] : memref<125xf32, #tpu.memory_space<smem>>
    %c21_i32_117 = arith.constant 21 : i32
    %573 = tpu.dynamic_rotate %541 by %c21_i32_117 dim 1 : vector<8x512xf32>, i32 -> vector<8x512xf32>
    %574 = vector.broadcast %572 : f32 to vector<8x512xf32>
    %575 = arith.mulf %574, %573 : vector<8x512xf32>
    %576 = arith.addf %571, %575 : vector<8x512xf32>
    %c107 = arith.constant 107 : index
    %577 = memref.load %arg1[%c107] : memref<125xf32, #tpu.memory_space<smem>>
    %c20_i32_118 = arith.constant 20 : i32
    %578 = tpu.dynamic_rotate %541 by %c20_i32_118 dim 1 : vector<8x512xf32>, i32 -> vector<8x512xf32>
    %579 = vector.broadcast %577 : f32 to vector<8x512xf32>
    %580 = arith.mulf %579, %578 : vector<8x512xf32>
    %581 = arith.addf %576, %580 : vector<8x512xf32>
    %c108 = arith.constant 108 : index
    %582 = memref.load %arg1[%c108] : memref<125xf32, #tpu.memory_space<smem>>
    %c19_i32_119 = arith.constant 19 : i32
    %583 = tpu.dynamic_rotate %541 by %c19_i32_119 dim 1 : vector<8x512xf32>, i32 -> vector<8x512xf32>
    %584 = vector.broadcast %582 : f32 to vector<8x512xf32>
    %585 = arith.mulf %584, %583 : vector<8x512xf32>
    %586 = arith.addf %581, %585 : vector<8x512xf32>
    %c109 = arith.constant 109 : index
    %587 = memref.load %arg1[%c109] : memref<125xf32, #tpu.memory_space<smem>>
    %c18_i32_120 = arith.constant 18 : i32
    %588 = tpu.dynamic_rotate %541 by %c18_i32_120 dim 1 : vector<8x512xf32>, i32 -> vector<8x512xf32>
    %589 = vector.broadcast %587 : f32 to vector<8x512xf32>
    %590 = arith.mulf %589, %588 : vector<8x512xf32>
    %591 = arith.addf %586, %590 : vector<8x512xf32>
    %c110 = arith.constant 110 : index
    %592 = memref.load %arg1[%c110] : memref<125xf32, #tpu.memory_space<smem>>
    %c2_i32_121 = arith.constant 2 : i32
    %593 = tpu.dynamic_rotate %541 by %c2_i32_121 dim 1 : vector<8x512xf32>, i32 -> vector<8x512xf32>
    %594 = vector.broadcast %592 : f32 to vector<8x512xf32>
    %595 = arith.mulf %594, %593 : vector<8x512xf32>
    %596 = arith.addf %591, %595 : vector<8x512xf32>
    %c111 = arith.constant 111 : index
    %597 = memref.load %arg1[%c111] : memref<125xf32, #tpu.memory_space<smem>>
    %c1_i32_122 = arith.constant 1 : i32
    %598 = tpu.dynamic_rotate %541 by %c1_i32_122 dim 1 : vector<8x512xf32>, i32 -> vector<8x512xf32>
    %599 = vector.broadcast %597 : f32 to vector<8x512xf32>
    %600 = arith.mulf %599, %598 : vector<8x512xf32>
    %601 = arith.addf %596, %600 : vector<8x512xf32>
    %c112 = arith.constant 112 : index
    %602 = memref.load %arg1[%c112] : memref<125xf32, #tpu.memory_space<smem>>
    %603 = vector.broadcast %602 : f32 to vector<8x512xf32>
    %604 = arith.mulf %603, %541 : vector<8x512xf32>
    %605 = arith.addf %601, %604 : vector<8x512xf32>
    %c113 = arith.constant 113 : index
    %606 = memref.load %arg1[%c113] : memref<125xf32, #tpu.memory_space<smem>>
    %c511_i32_123 = arith.constant 511 : i32
    %607 = tpu.dynamic_rotate %541 by %c511_i32_123 dim 1 : vector<8x512xf32>, i32 -> vector<8x512xf32>
    %608 = vector.broadcast %606 : f32 to vector<8x512xf32>
    %609 = arith.mulf %608, %607 : vector<8x512xf32>
    %610 = arith.addf %605, %609 : vector<8x512xf32>
    %c114 = arith.constant 114 : index
    %611 = memref.load %arg1[%c114] : memref<125xf32, #tpu.memory_space<smem>>
    %c510_i32_124 = arith.constant 510 : i32
    %612 = tpu.dynamic_rotate %541 by %c510_i32_124 dim 1 : vector<8x512xf32>, i32 -> vector<8x512xf32>
    %613 = vector.broadcast %611 : f32 to vector<8x512xf32>
    %614 = arith.mulf %613, %612 : vector<8x512xf32>
    %615 = arith.addf %610, %614 : vector<8x512xf32>
    %c115 = arith.constant 115 : index
    %616 = memref.load %arg1[%c115] : memref<125xf32, #tpu.memory_space<smem>>
    %c494_i32_125 = arith.constant 494 : i32
    %617 = tpu.dynamic_rotate %541 by %c494_i32_125 dim 1 : vector<8x512xf32>, i32 -> vector<8x512xf32>
    %618 = vector.broadcast %616 : f32 to vector<8x512xf32>
    %619 = arith.mulf %618, %617 : vector<8x512xf32>
    %620 = arith.addf %615, %619 : vector<8x512xf32>
    %c116 = arith.constant 116 : index
    %621 = memref.load %arg1[%c116] : memref<125xf32, #tpu.memory_space<smem>>
    %c493_i32_126 = arith.constant 493 : i32
    %622 = tpu.dynamic_rotate %541 by %c493_i32_126 dim 1 : vector<8x512xf32>, i32 -> vector<8x512xf32>
    %623 = vector.broadcast %621 : f32 to vector<8x512xf32>
    %624 = arith.mulf %623, %622 : vector<8x512xf32>
    %625 = arith.addf %620, %624 : vector<8x512xf32>
    %c117 = arith.constant 117 : index
    %626 = memref.load %arg1[%c117] : memref<125xf32, #tpu.memory_space<smem>>
    %c492_i32_127 = arith.constant 492 : i32
    %627 = tpu.dynamic_rotate %541 by %c492_i32_127 dim 1 : vector<8x512xf32>, i32 -> vector<8x512xf32>
    %628 = vector.broadcast %626 : f32 to vector<8x512xf32>
    %629 = arith.mulf %628, %627 : vector<8x512xf32>
    %630 = arith.addf %625, %629 : vector<8x512xf32>
    %c118 = arith.constant 118 : index
    %631 = memref.load %arg1[%c118] : memref<125xf32, #tpu.memory_space<smem>>
    %c491_i32_128 = arith.constant 491 : i32
    %632 = tpu.dynamic_rotate %541 by %c491_i32_128 dim 1 : vector<8x512xf32>, i32 -> vector<8x512xf32>
    %633 = vector.broadcast %631 : f32 to vector<8x512xf32>
    %634 = arith.mulf %633, %632 : vector<8x512xf32>
    %635 = arith.addf %630, %634 : vector<8x512xf32>
    %c119 = arith.constant 119 : index
    %636 = memref.load %arg1[%c119] : memref<125xf32, #tpu.memory_space<smem>>
    %c490_i32_129 = arith.constant 490 : i32
    %637 = tpu.dynamic_rotate %541 by %c490_i32_129 dim 1 : vector<8x512xf32>, i32 -> vector<8x512xf32>
    %638 = vector.broadcast %636 : f32 to vector<8x512xf32>
    %639 = arith.mulf %638, %637 : vector<8x512xf32>
    %640 = arith.addf %635, %639 : vector<8x512xf32>
    %c120 = arith.constant 120 : index
    %641 = memref.load %arg1[%c120] : memref<125xf32, #tpu.memory_space<smem>>
    %c474_i32_130 = arith.constant 474 : i32
    %642 = tpu.dynamic_rotate %541 by %c474_i32_130 dim 1 : vector<8x512xf32>, i32 -> vector<8x512xf32>
    %643 = vector.broadcast %641 : f32 to vector<8x512xf32>
    %644 = arith.mulf %643, %642 : vector<8x512xf32>
    %645 = arith.addf %640, %644 : vector<8x512xf32>
    %c121 = arith.constant 121 : index
    %646 = memref.load %arg1[%c121] : memref<125xf32, #tpu.memory_space<smem>>
    %c473_i32_131 = arith.constant 473 : i32
    %647 = tpu.dynamic_rotate %541 by %c473_i32_131 dim 1 : vector<8x512xf32>, i32 -> vector<8x512xf32>
    %648 = vector.broadcast %646 : f32 to vector<8x512xf32>
    %649 = arith.mulf %648, %647 : vector<8x512xf32>
    %650 = arith.addf %645, %649 : vector<8x512xf32>
    %c122_132 = arith.constant 122 : index
    %651 = memref.load %arg1[%c122_132] : memref<125xf32, #tpu.memory_space<smem>>
    %c472_i32_133 = arith.constant 472 : i32
    %652 = tpu.dynamic_rotate %541 by %c472_i32_133 dim 1 : vector<8x512xf32>, i32 -> vector<8x512xf32>
    %653 = vector.broadcast %651 : f32 to vector<8x512xf32>
    %654 = arith.mulf %653, %652 : vector<8x512xf32>
    %655 = arith.addf %650, %654 : vector<8x512xf32>
    %c123 = arith.constant 123 : index
    %656 = memref.load %arg1[%c123] : memref<125xf32, #tpu.memory_space<smem>>
    %c471_i32_134 = arith.constant 471 : i32
    %657 = tpu.dynamic_rotate %541 by %c471_i32_134 dim 1 : vector<8x512xf32>, i32 -> vector<8x512xf32>
    %658 = vector.broadcast %656 : f32 to vector<8x512xf32>
    %659 = arith.mulf %658, %657 : vector<8x512xf32>
    %660 = arith.addf %655, %659 : vector<8x512xf32>
    %c124 = arith.constant 124 : index
    %661 = memref.load %arg1[%c124] : memref<125xf32, #tpu.memory_space<smem>>
    %c470_i32_135 = arith.constant 470 : i32
    %662 = tpu.dynamic_rotate %541 by %c470_i32_135 dim 1 : vector<8x512xf32>, i32 -> vector<8x512xf32>
    %663 = vector.broadcast %661 : f32 to vector<8x512xf32>
    %664 = arith.mulf %663, %662 : vector<8x512xf32>
    %665 = arith.addf %660, %664 : vector<8x512xf32>
    %c0_136 = arith.constant 0 : index
    %c0_137 = arith.constant 0 : index
    %c0_138 = arith.constant 0 : index
    %666 = vector.load %arg5[%c0_136, %c0_137, %c0_138] : memref<1x8x512xf32, #tpu.memory_space<vmem>>, vector<1x8x512xf32>
    %667 = vector.shape_cast %666 : vector<1x8x512xf32> to vector<8x512xf32>
    %668 = vector.shape_cast %665 : vector<8x512xf32> to vector<1x8x512xf32>
    tpu.vector_store %arg5[%c0_136, %c0_137, %c0_138], %668 {strides = array<i32>} : memref<1x8x512xf32, #tpu.memory_space<vmem>>, vector<1x8x512xf32>,
    return
  }
  func.func @transform_0(%arg0: i32, %arg1: memref<125xf32, #tpu.memory_space<smem>>, %arg2: memref<1xf32, #tpu.memory_space<smem>>) -> (i32, i32, i32) {
    %c0_i32 = arith.constant 0 : i32
    %c0_i32_0 = arith.constant 0 : i32
    %c0_i32_1 = arith.constant 0 : i32
    return %arg0, %c0_i32, %c0_i32_0 : i32, i32, i32
  }
  func.func @transform_1(%arg0: i32, %arg1: memref<125xf32, #tpu.memory_space<smem>>, %arg2: memref<1xf32, #tpu.memory_space<smem>>) -> (i32, i32, i32) {
    %c0_i32 = arith.constant 0 : i32
    %c0_i32_0 = arith.constant 0 : i32
    %c0_i32_1 = arith.constant 0 : i32
    return %arg0, %c0_i32, %c0_i32_0 : i32, i32, i32
  }
  func.func @transform_2(%arg0: i32, %arg1: memref<125xf32, #tpu.memory_space<smem>>, %arg2: memref<1xf32, #tpu.memory_space<smem>>) -> (i32, i32, i32) {
    %c0_i32 = arith.constant 0 : i32
    %c0_i32_0 = arith.constant 0 : i32
    %c0_i32_1 = arith.constant 0 : i32
    return %arg0, %c0_i32, %c0_i32_0 : i32, i32, i32
  }
}

</mosaic_0001>

<llo_original>
// kernel: tpu_custom_call.1
$region0: #{tpu_custom_call.1}
  #allocation0 [shape = 'u32[]', space=smem, size = 0x4, offset = 0x4, fixed_abs, tag = 'smem constant byte address 0x4 - core index']
  #allocation1 [shape = 'u32[144,128]{1,0:T(1,128)}', space=vmem, size = 0x12000, scoped, tag = 'internal scratch']
  #allocation2 [shape = 'f32[12,512]{1,0:T(8,128)}', space=vmem, size = 0x8000, scoped, tag = 'scratch operand']
  #allocation3 [shape = 's32[1]{0}', space=sflag, size = 0x4, scoped, tag = 'scoped memory for tpu_custom_call.1']
  #allocation4 [shape = 'u8[512]{0}', space=smem, size = 0x200, scoped, tag = 'prefetched SMEM operand 0']
  #allocation5 [shape = 'f32[1]{0:T(128)S(6)}', space=smem, size = 0x200, scoped, tag = 'prefetched SMEM operand 1']
  %s0 = inlined_call_operand.vmem [shape: f32[125], index: 0, kind: input, shape index: {}]
  %s1 = inlined_call_operand.<no memory space> [shape: f32[1], index: 1, kind: input, shape index: {}]
  %s2 = inlined_call_operand.hbm [shape: f32[2,8,256], index: 2, kind: input, shape index: {}]
  %s3 = inlined_call_operand.hbm [shape: f32[2,8,256], index: 3, kind: input, shape index: {}]
  %s4 = inlined_call_operand.hbm [shape: f32[2,8,512], index: 4, kind: output, shape index: {}]
  %s5 = sld [smem:[#allocation0]]
  $region49: #{tpu_custom_call.1} parent=0
    _
  %s7 = ssub.s32 1, %s5
  %s8 = scalar_select 0, %s7, %s5
  %s9 = sshll.u32 %s0, 4
  %s10 = int_to_ptr.vmem [resolvable:$true] %s9
  %12 = dma.vmem_to_smem %s10, 16, [#allocation4], [#allocation3]
  %13 = sst [smem:[#allocation5]] %s1
  %14 = dma.done [#allocation3], 16
  %15 = sfence
  $region1: #{tpu_custom_call.1} parent=0
    #allocation6 [shape = 'u8[16384]{0}', space=vmem, size = 0x4000, scoped, tag = 'input window, operand 2']
    #allocation7 [shape = 's32[2]{0}', space=sflag, size = 0x8, scoped, tag = 'scoped memory for tpu_custom_call.1']
    #allocation8 [shape = 's32[2]{0}', space=sflag, size = 0x8, scoped, tag = 'scoped memory for tpu_custom_call.1']
    #allocation9 [shape = 'u8[16384]{0}', space=vmem, size = 0x4000, scoped, tag = 'input window, operand 3']
    #allocation10 [shape = 's32[2]{0}', space=sflag, size = 0x8, scoped, tag = 'scoped memory for tpu_custom_call.1']
    #allocation11 [shape = 'u8[32768]{0}', space=vmem, size = 0x8000, scoped, tag = 'output window, operand 0']
    %16 = vsyncpa [#allocation7], 0
    %s17 = scalar_lea.sflag [#allocation7], 1
    %18 = vsyncpa %s17, 0
    %19 = vsyncpa [#allocation10], 0
    %s20 = scalar_lea.sflag [#allocation10], 1
    %21 = vsyncpa %s20, 0
    %22 = vsyncpa [#allocation8], 0
    %s23 = scalar_lea.sflag [#allocation8], 1
    %24 = vsyncpa %s23, 0
    loop: start=0, step=1, limit=4
    $region2: #{tpu_custom_call.1} parent=1 // loop_pre_header
      _
    $region3: #{tpu_custom_call.1} parent=1 // loop_header
      %s26 = sphi 0, %s30
      %p27 = scmp.ge.s32.totalorder %s26, 4
      %s36 = sphi 0, %s38
      %s39 = sphi 0, %s36
      %s40 = sphi 0, %s39
      %s56 = sphi 0, %s40
      %s62 = sphi 0, %s64
      %s65 = sphi 0, %s62
      %s66 = sphi 0, %s65
      %s82 = sphi 0, %s66
      %s88 = sphi 0, %s90
      %s91 = sphi 0, %s88
      %s92 = sphi 0, %s91
      %s108 = sphi 0, %s92
    $region4: #{tpu_custom_call.1} parent=1 // loop_header_branch
      %29 = sbr.rel (%p27) target = $region8
    $region5: #{tpu_custom_call.1} parent=1 // loop_body
      %s31 = ssub.s32 %s26, 1
      %s32 = ssub.s32 %s26, 2
      %s33 = sadd.s32 %s26, 1
      %s34 = ssub.s32 %s26, %s33
      %p35 = scmp.eq.s32.totalorder %s34, 0
      %s37 = sadd.s32 %s36, 1
      %s38 = scalar_select %p35, %s36, %s37
      %p41 = pneg %p35
      %p42 = scmp.eq.s32.totalorder %s26, 1
      %p43 = por %p41, %p42
      %p44 = scmp.ne.s32.totalorder %s36, %s39
      %p45 = scmp.eq.s32.totalorder %s26, 0
      %p46 = por %p44, %p45
      %p47 = scmp.ne.s32.totalorder %s36, %s39
      %p48 = scmp.eq.s32.totalorder %s31, 1
      %p49 = por %p47, %p48
      %p50 = scmp.ne.s32.totalorder %s39, %s40
      %p51 = scmp.eq.s32.totalorder %s31, 0
      %p52 = por %p50, %p51
      %p53 = scmp.ne.s32.totalorder %s39, %s40
      %p54 = scmp.eq.s32.totalorder %s32, 1
      %p55 = por %p53, %p54
      %p57 = scmp.ne.s32.totalorder %s40, %s56
      %p58 = scmp.eq.s32.totalorder %s32, 0
      %p59 = por %p57, %p58
      %s60 = ssub.s32 %s26, %s33
      %p61 = scmp.eq.s32.totalorder %s60, 0
      %s63 = sadd.s32 %s62, 1
      %s64 = scalar_select %p61, %s62, %s63
      %p67 = pneg %p61
      %p68 = scmp.eq.s32.totalorder %s26, 1
      %p69 = por %p67, %p68
      %p70 = scmp.ne.s32.totalorder %s62, %s65
      %p71 = scmp.eq.s32.totalorder %s26, 0
      %p72 = por %p70, %p71
      %p73 = scmp.ne.s32.totalorder %s62, %s65
      %p74 = scmp.eq.s32.totalorder %s31, 1
      %p75 = por %p73, %p74
      %p76 = scmp.ne.s32.totalorder %s65, %s66
      %p77 = scmp.eq.s32.totalorder %s31, 0
      %p78 = por %p76, %p77
      %p79 = scmp.ne.s32.totalorder %s65, %s66
      %p80 = scmp.eq.s32.totalorder %s32, 1
      %p81 = por %p79, %p80
      %p83 = scmp.ne.s32.totalorder %s66, %s82
      %p84 = scmp.eq.s32.totalorder %s32, 0
      %p85 = por %p83, %p84
      %s86 = ssub.s32 %s26, %s33
      %p87 = scmp.eq.s32.totalorder %s86, 0
      %s89 = sadd.s32 %s88, 1
      %s90 = scalar_select %p87, %s88, %s89
      %p93 = pneg %p87
      %p94 = scmp.eq.s32.totalorder %s26, 1
      %p95 = por %p93, %p94
      %p96 = scmp.ne.s32.totalorder %s88, %s91
      %p97 = scmp.eq.s32.totalorder %s26, 0
      %p98 = por %p96, %p97
      %p99 = scmp.ne.s32.totalorder %s88, %s91
      %p100 = scmp.eq.s32.totalorder %s31, 1
      %p101 = por %p99, %p100
      %p102 = scmp.ne.s32.totalorder %s91, %s92
      %p103 = scmp.eq.s32.totalorder %s31, 0
      %p104 = por %p102, %p103
      %p105 = scmp.ne.s32.totalorder %s91, %s92
      %p106 = scmp.eq.s32.totalorder %s32, 1
      %p107 = por %p105, %p106
      %p109 = scmp.ne.s32.totalorder %s92, %s108
      %p110 = scmp.eq.s32.totalorder %s32, 0
      %p111 = por %p109, %p110
      %p112 = scmp.le.s32.totalorder 1, %s26
      %p113 = scmp.lt.s32.totalorder %s26, 3
      %p114 = pnand %p112, %p113
      %p115 = pneg %p114
      // Predicated region
      $region9: #{tpu_custom_call.1} parent=5 // pred_check
        _
      $region10: #{tpu_custom_call.1} parent=5 // pred_check_branch
        %117 = sbr.rel (%p114) target = $region12
      $region11: #{tpu_custom_call.1} parent=5 // pred_region
        %s118 = ssub.s32 %s26, 1
      $region12: #{tpu_custom_call.1} parent=5 // pred_fallthru
        _
      %p119 = scmp.lt.s32.totalorder %s26, 2
      // Predicated region
      $region13: #{tpu_custom_call.1} parent=5 // pred_check
        %p120 = pneg %p119
      $region14: #{tpu_custom_call.1} parent=5 // pred_check_branch
        %122 = sbr.rel (%p120) target = $region16
      $region15: #{tpu_custom_call.1} parent=5 // pred_region
        // Predicated region
        $region17: #{tpu_custom_call.1} parent=15 // pred_check
          %p123 = pneg %p46
        $region18: #{tpu_custom_call.1} parent=15 // pred_check_branch
          %125 = sbr.rel (%p123) target = $region20
        $region19: #{tpu_custom_call.1} parent=15 // pred_region
          %s126 = sand.u32 %s36, 1
          %s127 = scalar_lea.sflag [#allocation7], %s126
          %s128 = sand.u32 %s36, 1
          %s129 = smul.addr %s128, 16
          %s130 = scalar_lea.vmem [#allocation6], %s129
          %s132 = ssub.s32 256, 256
          %133 = vsyncadd %s127, %s132
          %s134 = smul.addr %s26, 2
          %s135 = smul.addr %s134, 128
          %s136 = scalar_lea.hbm %s2, %s135
          %s138 = sshll.u32 %s130, 4
          %s139 = int_to_ptr.vmem [resolvable:$true] %s138
          %141 = dma.hbm_to_vmem [thread:$0]  %s136, 256, %s139, %s127
        $region20: #{tpu_custom_call.1} parent=15 // pred_fallthru
          _
        // Predicated region
        $region21: #{tpu_custom_call.1} parent=15 // pred_check
          %p142 = pneg %p72
        $region22: #{tpu_custom_call.1} parent=15 // pred_check_branch
          %144 = sbr.rel (%p142) target = $region24
        $region23: #{tpu_custom_call.1} parent=15 // pred_region
          %s145 = sand.u32 %s62, 1
          %s146 = scalar_lea.sflag [#allocation10], %s145
          %s147 = sand.u32 %s62, 1
          %s148 = smul.addr %s147, 16
          %s149 = scalar_lea.vmem [#allocation9], %s148
          %s151 = ssub.s32 256, 256
          %152 = vsyncadd %s146, %s151
          %s153 = smul.addr %s26, 2
          %s154 = smul.addr %s153, 128
          %s155 = scalar_lea.hbm %s3, %s154
          %s157 = sshll.u32 %s149, 4
          %s158 = int_to_ptr.vmem [resolvable:$true] %s157
          %160 = dma.hbm_to_vmem [thread:$0]  %s155, 256, %s158, %s146
        $region24: #{tpu_custom_call.1} parent=15 // pred_fallthru
          _
      $region16: #{tpu_custom_call.1} parent=5 // pred_fallthru
        _
      %p161 = scmp.le.s32.totalorder 1, %s26
      %p162 = scmp.lt.s32.totalorder %s26, 3
      %p163 = pnand %p161, %p162
      %p164 = pneg %p163
      // Predicated region
      $region25: #{tpu_custom_call.1} parent=5 // pred_check
        _
      $region26: #{tpu_custom_call.1} parent=5 // pred_check_branch
        %166 = sbr.rel (%p163) target = $region28
      $region27: #{tpu_custom_call.1} parent=5 // pred_region
        %s167 = ssub.s32 %s26, 1
        %s168 = sand.u32 %s39, 1
        %s169 = scalar_lea.sflag [#allocation7], %s168
        %s170 = sand.u32 %s39, 1
        %s171 = smul.addr %s170, 16
        %s172 = scalar_lea.vmem [#allocation6], %s171
        // Predicated region
        $region29: #{tpu_custom_call.1} parent=27 // pred_check
          %p173 = pneg %p52
        $region30: #{tpu_custom_call.1} parent=27 // pred_check_branch
          %175 = sbr.rel (%p173) target = $region32
        $region31: #{tpu_custom_call.1} parent=27 // pred_region
          %176 = dma.done %s169, 256
        $region32: #{tpu_custom_call.1} parent=27 // pred_fallthru
          _
        %s177 = sand.u32 %s65, 1
        %s178 = scalar_lea.sflag [#allocation10], %s177
        %s179 = sand.u32 %s65, 1
        %s180 = smul.addr %s179, 16
        %s181 = scalar_lea.vmem [#allocation9], %s180
        // Predicated region
        $region33: #{tpu_custom_call.1} parent=27 // pred_check
          %p182 = pneg %p78
        $region34: #{tpu_custom_call.1} parent=27 // pred_check_branch
          %184 = sbr.rel (%p182) target = $region36
        $region35: #{tpu_custom_call.1} parent=27 // pred_region
          %185 = dma.done %s178, 256
        $region36: #{tpu_custom_call.1} parent=27 // pred_fallthru
          _
        %s186 = sand.u32 %s39, 1
        %s187 = scalar_lea.sflag [#allocation7], %s186
        %s188 = sand.u32 %s39, 1
        %s189 = smul.addr %s188, 16
        %s190 = scalar_lea.vmem [#allocation6], %s189
        %p191 = pneg %p52
        %p192 = pneg %p49
        %s193 = sand.u32 %s65, 1
        %s194 = scalar_lea.sflag [#allocation10], %s193
        %s195 = sand.u32 %s65, 1
        %s196 = smul.addr %s195, 16
        %s197 = scalar_lea.vmem [#allocation9], %s196
        %p198 = pneg %p78
        %p199 = pneg %p75
        %p200 = pneg %p104
        %p201 = pneg %p101
        %s202 = sand.u32 %s91, 1
        %s203 = scalar_lea.sflag [#allocation8], %s202
        %s204 = sand.u32 %s91, 1
        %s205 = smul.addr %s204, 32
        %s206 = scalar_lea.vmem [#allocation11], %s205
        %207 = vst [vmem:[#allocation2] sm:$0xff] 0.0
        %208 = vst [vmem:[#allocation2 + $0x8] sm:$0xff] 0.0
        %209 = vst [vmem:[#allocation2 + $0x10] sm:$0xff] 0.0
        %210 = vst [vmem:[#allocation2 + $0x18] sm:$0xff] 0.0
        %211 = vst [vmem:[#allocation2 + $0x20] sm:$0xf] 0.0
        %212 = vst [vmem:[#allocation2 + $0x28] sm:$0xf] 0.0
        %213 = vst [vmem:[#allocation2 + $0x30] sm:$0xf] 0.0
        %214 = vst [vmem:[#allocation2 + $0x38] sm:$0xf] 0.0
        %v215 = vld [vmem:[%s172] sm:$0xff]
        %v216 = vld [vmem:[%s172 + $0x8] sm:$0xff]
        %v217 = vld [vmem:[%s181] sm:$0xff]
        %v218 = vld [vmem:[%s181 + $0x8] sm:$0xff]
        %v219 = vadd.f32 %v215, %v217
        %v220 = vadd.f32 %v216, %v218
        %v222 = vrot.slane %v219, 6
        %223 = vrot.lane.b32.xlu0 %v222, 42
        %v224 = vpop.permute.xlu0 %223
        %vm226 = vcmask 474450
        %227 = vst.msk [vmem:[#allocation2] sm:$0xfc] %vm226, %v224
        %vm228 = vcmask 468304
        %229 = vst.msk [vmem:[#allocation2 + $0x20] sm:$0x3] %vm228, %v224
        %230 = vrot.lane.b32.xlu0 %v222, 46
        %v231 = vpop.permute.xlu0 %230
        %vm233 = vcmask 638450
        %234 = vst.msk [vmem:[#allocation2] sm:$0xfc] %vm233, %v231
        %vm235 = vcmask 632304
        %236 = vst.msk [vmem:[#allocation2 + $0x20] sm:$0x3] %vm235, %v231
        %237 = vrot.lane.b32.xlu0 %v222, 50
        %v238 = vpop.permute.xlu0 %237
        %vm240 = vcmask 802450
        %241 = vst.msk [vmem:[#allocation2] sm:$0xfc] %vm240, %v238
        %vm242 = vcmask 796304
        %243 = vst.msk [vmem:[#allocation2 + $0x20] sm:$0x3] %vm242, %v238
        %244 = vrot.lane.b32.xlu0 %v222, 54
        %v245 = vpop.permute.xlu0 %244
        %vm247 = vcmask 966450
        %248 = vst.msk [vmem:[#allocation2] sm:$0xfc] %vm247, %v245
        %vm249 = vcmask 960304
        %250 = vst.msk [vmem:[#allocation2 + $0x20] sm:$0x3] %vm249, %v245
        %251 = vrot.lane.b32.xlu0 %v222, 58
        %v252 = vpop.permute.xlu0 %251
        %vm254 = vcmask 1048530
        %255 = vst.msk [vmem:[#allocation2] sm:$0xfc] %vm254, %v252
        %vm256 = vcmask 80898
        %257 = vst.msk [vmem:[#allocation2 + $0x8] sm:$0xfc] %vm256, %v252
        %vm258 = vcmask 1042384
        %259 = vst.msk [vmem:[#allocation2 + $0x20] sm:$0x3] %vm258, %v252
        %vm260 = vcmask 74752
        %261 = vst.msk [vmem:[#allocation2 + $0x28] sm:$0x3] %vm260, %v252
        %262 = vrot.lane.b32.xlu0 %v222, 62
        %v263 = vpop.permute.xlu0 %262
        %vm265 = vcmask 244850
        %266 = vst.msk [vmem:[#allocation2 + $0x8] sm:$0xfc] %vm265, %v263
        %vm267 = vcmask 238704
        %268 = vst.msk [vmem:[#allocation2 + $0x28] sm:$0x3] %vm267, %v263
        %269 = vrot.lane.b32.xlu0 %v222, 66
        %v270 = vpop.permute.xlu0 %269
        %vm272 = vcmask 408850
        %273 = vst.msk [vmem:[#allocation2 + $0x8] sm:$0xfc] %vm272, %v270
        %vm274 = vcmask 402704
        %275 = vst.msk [vmem:[#allocation2 + $0x28] sm:$0x3] %vm274, %v270
        %276 = vrot.lane.b32.xlu0 %v222, 70
        %v277 = vpop.permute.xlu0 %276
        %vm279 = vcmask 572850
        %280 = vst.msk [vmem:[#allocation2 + $0x8] sm:$0xfc] %vm279, %v277
        %vm281 = vcmask 566704
        %282 = vst.msk [vmem:[#allocation2 + $0x28] sm:$0x3] %vm281, %v277
        %v284 = vrot.slane %v220, 6
        %285 = vrot.lane.b32.xlu0 %v284, 74
        %v286 = vpop.permute.xlu0 %285
        %vm288 = vcmask 736850
        %289 = vst.msk [vmem:[#allocation2 + $0x8] sm:$0xfc] %vm288, %v286
        %vm290 = vcmask 730704
        %291 = vst.msk [vmem:[#allocation2 + $0x28] sm:$0x3] %vm290, %v286
        %292 = vrot.lane.b32.xlu0 %v284, 78
        %v293 = vpop.permute.xlu0 %292
        %vm295 = vcmask 900850
        %296 = vst.msk [vmem:[#allocation2 + $0x8] sm:$0xfc] %vm295, %v293
        %vm297 = vcmask 894704
        %298 = vst.msk [vmem:[#allocation2 + $0x28] sm:$0x3] %vm297, %v293
        %299 = vrot.lane.b32.xlu0 %v284, 82
        %v300 = vpop.permute.xlu0 %299
        %vm302 = vcmask 1048466
        %303 = vst.msk [vmem:[#allocation2 + $0x8] sm:$0xfc] %vm302, %v300
        %vm304 = vcmask 15362
        %305 = vst.msk [vmem:[#allocation2 + $0x10] sm:$0xfc] %vm304, %v300
        %vm306 = vcmask 1042320
        %307 = vst.msk [vmem:[#allocation2 + $0x28] sm:$0x3] %vm306, %v300
        %vm308 = vcmask 9216
        %309 = vst.msk [vmem:[#allocation2 + $0x30] sm:$0x3] %vm308, %v300
        %310 = vrot.lane.b32.xlu0 %v284, 86
        %v311 = vpop.permute.xlu0 %310
        %vm313 = vcmask 179250
        %314 = vst.msk [vmem:[#allocation2 + $0x10] sm:$0xfc] %vm313, %v311
        %vm315 = vcmask 173104
        %316 = vst.msk [vmem:[#allocation2 + $0x30] sm:$0x3] %vm315, %v311
        %317 = vrot.lane.b32.xlu0 %v284, 90
        %v318 = vpop.permute.xlu0 %317
        %vm320 = vcmask 343250
        %321 = vst.msk [vmem:[#allocation2 + $0x10] sm:$0xfc] %vm320, %v318
        %vm322 = vcmask 337104
        %323 = vst.msk [vmem:[#allocation2 + $0x30] sm:$0x3] %vm322, %v318
        %324 = vrot.lane.b32.xlu0 %v284, 94
        %v325 = vpop.permute.xlu0 %324
        %vm327 = vcmask 507250
        %328 = vst.msk [vmem:[#allocation2 + $0x10] sm:$0xfc] %vm327, %v325
        %vm329 = vcmask 501104
        %330 = vst.msk [vmem:[#allocation2 + $0x30] sm:$0x3] %vm329, %v325
        %331 = vrot.lane.b32.xlu0 %v284, 98
        %v332 = vpop.permute.xlu0 %331
        %vm334 = vcmask 671250
        %335 = vst.msk [vmem:[#allocation2 + $0x10] sm:$0xfc] %vm334, %v332
        %vm336 = vcmask 665104
        %337 = vst.msk [vmem:[#allocation2 + $0x30] sm:$0x3] %vm336, %v332
        %338 = vrot.lane.b32.xlu0 %v284, 102
        %v339 = vpop.permute.xlu0 %338
        %vm341 = vcmask 835250
        %342 = vst.msk [vmem:[#allocation2 + $0x10] sm:$0xfc] %vm341, %v339
        %vm343 = vcmask 829104
        %344 = vst.msk [vmem:[#allocation2 + $0x30] sm:$0x3] %vm343, %v339
        %s345 = sld [smem:[#allocation5]]
        %v346 = vstv %s345
        %v347 = vld [vmem:[#allocation2] sm:$0xff]
        %v348 = vld [vmem:[#allocation2 + $0x8] sm:$0xff]
        %v349 = vld [vmem:[#allocation2 + $0x10] sm:$0xff]
        %v350 = vld [vmem:[#allocation2 + $0x18] sm:$0xff]
        %s351 = sld [smem:[#allocation4]]
        %352 = vrot.lane.b32.xlu0 %v347, 42
        %v353 = vpop.permute.xlu0 %352
        %354 = vrot.lane.b32.xlu0 %v348, 42
        %v355 = vpop.permute.xlu0 %354
        %356 = vrot.lane.b32.xlu0 %v349, 42
        %v357 = vpop.permute.xlu0 %356
        %358 = vrot.lane.b32.xlu0 %v350, 42
        %v359 = vpop.permute.xlu0 %358
        %v360 = vlaneseq
        %v361 = vand.u32 %v360, 127
        %vm362 = vcmp.lt.s32.totalorder %v361, 42
        %v363 = vsel %vm362, %v357, %v359
        %v364 = vsel %vm362, %v355, %v357
        %v365 = vsel %vm362, %v353, %v355
        %v366 = vsel %vm362, %v359, %v353
        %v367 = vstv %s351
        %v368 = vmul.f32 %v367, %v366
        %v369 = vmul.f32 %v367, %v365
        %v370 = vmul.f32 %v367, %v364
        %v371 = vmul.f32 %v367, %v363
        %v372 = vadd.f32 %v346, %v368
        %v373 = vadd.f32 %v346, %v369
        %v374 = vadd.f32 %v346, %v370
        %v375 = vadd.f32 %v346, %v371
        %s376 = sld [smem:[#allocation4 + $0x1]]
        %377 = vrot.lane.b32.xlu0 %v347, 41
        %v378 = vpop.permute.xlu0 %377
        %379 = vrot.lane.b32.xlu0 %v348, 41
        %v380 = vpop.permute.xlu0 %379
        %381 = vrot.lane.b32.xlu0 %v349, 41
        %v382 = vpop.permute.xlu0 %381
        %383 = vrot.lane.b32.xlu0 %v350, 41
        %v384 = vpop.permute.xlu0 %383
        %vm385 = vcmp.lt.s32.totalorder %v361, 41
        %v386 = vsel %vm385, %v382, %v384
        %v387 = vsel %vm385, %v380, %v382
        %v388 = vsel %vm385, %v378, %v380
        %v389 = vsel %vm385, %v384, %v378
        %v390 = vstv %s376
        %v391 = vmul.f32 %v390, %v389
        %v392 = vmul.f32 %v390, %v388
        %v393 = vmul.f32 %v390, %v387
        %v394 = vmul.f32 %v390, %v386
        %v395 = vadd.f32 %v372, %v391
        %v396 = vadd.f32 %v373, %v392
        %v397 = vadd.f32 %v374, %v393
        %v398 = vadd.f32 %v375, %v394
        %s399 = sld [smem:[#allocation4 + $0x2]]
        %400 = vrot.lane.b32.xlu0 %v347, 40
        %v401 = vpop.permute.xlu0 %400
        %402 = vrot.lane.b32.xlu0 %v348, 40
        %v403 = vpop.permute.xlu0 %402
        %404 = vrot.lane.b32.xlu0 %v349, 40
        %v405 = vpop.permute.xlu0 %404
        %406 = vrot.lane.b32.xlu0 %v350, 40
        %v407 = vpop.permute.xlu0 %406
        %vm408 = vcmp.lt.s32.totalorder %v361, 40
        %v409 = vsel %vm408, %v405, %v407
        %v410 = vsel %vm408, %v403, %v405
        %v411 = vsel %vm408, %v401, %v403
        %v412 = vsel %vm408, %v407, %v401
        %v413 = vstv %s399
        %v414 = vmul.f32 %v413, %v412
        %v415 = vmul.f32 %v413, %v411
        %v416 = vmul.f32 %v413, %v410
        %v417 = vmul.f32 %v413, %v409
        %v418 = vadd.f32 %v395, %v414
        %v419 = vadd.f32 %v396, %v415
        %v420 = vadd.f32 %v397, %v416
        %v421 = vadd.f32 %v398, %v417
        %s422 = sld [smem:[#allocation4 + $0x3]]
        %423 = vrot.lane.b32.xlu0 %v347, 39
        %v424 = vpop.permute.xlu0 %423
        %425 = vrot.lane.b32.xlu0 %v348, 39
        %v426 = vpop.permute.xlu0 %425
        %427 = vrot.lane.b32.xlu0 %v349, 39
        %v428 = vpop.permute.xlu0 %427
        %429 = vrot.lane.b32.xlu0 %v350, 39
        %v430 = vpop.permute.xlu0 %429
        %vm431 = vcmp.lt.s32.totalorder %v361, 39
        %v432 = vsel %vm431, %v428, %v430
        %v433 = vsel %vm431, %v426, %v428
        %v434 = vsel %vm431, %v424, %v426
        %v435 = vsel %vm431, %v430, %v424
        %v436 = vstv %s422
        %v437 = vmul.f32 %v436, %v435
        %v438 = vmul.f32 %v436, %v434
        %v439 = vmul.f32 %v436, %v433
        %v440 = vmul.f32 %v436, %v432
        %v441 = vadd.f32 %v418, %v437
        %v442 = vadd.f32 %v419, %v438
        %v443 = vadd.f32 %v420, %v439
        %v444 = vadd.f32 %v421, %v440
        %s445 = sld [smem:[#allocation4 + $0x4]]
        %446 = vrot.lane.b32.xlu0 %v347, 38
        %v447 = vpop.permute.xlu0 %446
        %448 = vrot.lane.b32.xlu0 %v348, 38
        %v449 = vpop.permute.xlu0 %448
        %450 = vrot.lane.b32.xlu0 %v349, 38
        %v451 = vpop.permute.xlu0 %450
        %452 = vrot.lane.b32.xlu0 %v350, 38
        %v453 = vpop.permute.xlu0 %452
        %vm454 = vcmp.lt.s32.totalorder %v361, 38
        %v455 = vsel %vm454, %v451, %v453
        %v456 = vsel %vm454, %v449, %v451
        %v457 = vsel %vm454, %v447, %v449
        %v458 = vsel %vm454, %v453, %v447
        %v459 = vstv %s445
        %v460 = vmul.f32 %v459, %v458
        %v461 = vmul.f32 %v459, %v457
        %v462 = vmul.f32 %v459, %v456
        %v463 = vmul.f32 %v459, %v455
        %v464 = vadd.f32 %v441, %v460
        %v465 = vadd.f32 %v442, %v461
        %v466 = vadd.f32 %v443, %v462
        %v467 = vadd.f32 %v444, %v463
        %s468 = sld [smem:[#allocation4 + $0x5]]
        %469 = vrot.lane.b32.xlu0 %v347, 22
        %v470 = vpop.permute.xlu0 %469
        %471 = vrot.lane.b32.xlu0 %v348, 22
        %v472 = vpop.permute.xlu0 %471
        %473 = vrot.lane.b32.xlu0 %v349, 22
        %v474 = vpop.permute.xlu0 %473
        %475 = vrot.lane.b32.xlu0 %v350, 22
        %v476 = vpop.permute.xlu0 %475
        %vm477 = vcmp.lt.s32.totalorder %v361, 22
        %v478 = vsel %vm477, %v474, %v476
        %v479 = vsel %vm477, %v472, %v474
        %v480 = vsel %vm477, %v470, %v472
        %v481 = vsel %vm477, %v476, %v470
        %v482 = vstv %s468
        %v483 = vmul.f32 %v482, %v481
        %v484 = vmul.f32 %v482, %v480
        %v485 = vmul.f32 %v482, %v479
        %v486 = vmul.f32 %v482, %v478
        %v487 = vadd.f32 %v464, %v483
        %v488 = vadd.f32 %v465, %v484
        %v489 = vadd.f32 %v466, %v485
        %v490 = vadd.f32 %v467, %v486
        %s491 = sld [smem:[#allocation4 + $0x6]]
        %492 = vrot.lane.b32.xlu0 %v347, 21
        %v493 = vpop.permute.xlu0 %492
        %494 = vrot.lane.b32.xlu0 %v348, 21
        %v495 = vpop.permute.xlu0 %494
        %496 = vrot.lane.b32.xlu0 %v349, 21
        %v497 = vpop.permute.xlu0 %496
        %498 = vrot.lane.b32.xlu0 %v350, 21
        %v499 = vpop.permute.xlu0 %498
        %vm500 = vcmp.lt.s32.totalorder %v361, 21
        %v501 = vsel %vm500, %v497, %v499
        %v502 = vsel %vm500, %v495, %v497
        %v503 = vsel %vm500, %v493, %v495
        %v504 = vsel %vm500, %v499, %v493
        %v505 = vstv %s491
        %v506 = vmul.f32 %v505, %v504
        %v507 = vmul.f32 %v505, %v503
        %v508 = vmul.f32 %v505, %v502
        %v509 = vmul.f32 %v505, %v501
        %v510 = vadd.f32 %v487, %v506
        %v511 = vadd.f32 %v488, %v507
        %v512 = vadd.f32 %v489, %v508
        %v513 = vadd.f32 %v490, %v509
        %s514 = sld [smem:[#allocation4 + $0x7]]
        %515 = vrot.lane.b32.xlu0 %v347, 20
        %v516 = vpop.permute.xlu0 %515
        %517 = vrot.lane.b32.xlu0 %v348, 20
        %v518 = vpop.permute.xlu0 %517
        %519 = vrot.lane.b32.xlu0 %v349, 20
        %v520 = vpop.permute.xlu0 %519
        %521 = vrot.lane.b32.xlu0 %v350, 20
        %v522 = vpop.permute.xlu0 %521
        %vm523 = vcmp.lt.s32.totalorder %v361, 20
        %v524 = vsel %vm523, %v520, %v522
        %v525 = vsel %vm523, %v518, %v520
        %v526 = vsel %vm523, %v516, %v518
        %v527 = vsel %vm523, %v522, %v516
        %v528 = vstv %s514
        %v529 = vmul.f32 %v528, %v527
        %v530 = vmul.f32 %v528, %v526
        %v531 = vmul.f32 %v528, %v525
        %v532 = vmul.f32 %v528, %v524
        %v533 = vadd.f32 %v510, %v529
        %v534 = vadd.f32 %v511, %v530
        %v535 = vadd.f32 %v512, %v531
        %v536 = vadd.f32 %v513, %v532
        %s537 = sld [smem:[#allocation4 + $0x8]]
        %538 = vrot.lane.b32.xlu0 %v347, 19
        %v539 = vpop.permute.xlu0 %538
        %540 = vrot.lane.b32.xlu0 %v348, 19
        %v541 = vpop.permute.xlu0 %540
        %542 = vrot.lane.b32.xlu0 %v349, 19
        %v543 = vpop.permute.xlu0 %542
        %544 = vrot.lane.b32.xlu0 %v350, 19
        %v545 = vpop.permute.xlu0 %544
        %vm546 = vcmp.lt.s32.totalorder %v361, 19
        %v547 = vsel %vm546, %v543, %v545
        %v548 = vsel %vm546, %v541, %v543
        %v549 = vsel %vm546, %v539, %v541
        %v550 = vsel %vm546, %v545, %v539
        %v551 = vstv %s537
        %v552 = vmul.f32 %v551, %v550
        %v553 = vmul.f32 %v551, %v549
        %v554 = vmul.f32 %v551, %v548
        %v555 = vmul.f32 %v551, %v547
        %v556 = vadd.f32 %v533, %v552
        %v557 = vadd.f32 %v534, %v553
        %v558 = vadd.f32 %v535, %v554
        %v559 = vadd.f32 %v536, %v555
        %s560 = sld [smem:[#allocation4 + $0x9]]
        %561 = vrot.lane.b32.xlu0 %v347, 18
        %v562 = vpop.permute.xlu0 %561
        %563 = vrot.lane.b32.xlu0 %v348, 18
        %v564 = vpop.permute.xlu0 %563
        %565 = vrot.lane.b32.xlu0 %v349, 18
        %v566 = vpop.permute.xlu0 %565
        %567 = vrot.lane.b32.xlu0 %v350, 18
        %v568 = vpop.permute.xlu0 %567
        %vm569 = vcmp.lt.s32.totalorder %v361, 18
        %v570 = vsel %vm569, %v566, %v568
        %v571 = vsel %vm569, %v564, %v566
        %v572 = vsel %vm569, %v562, %v564
        %v573 = vsel %vm569, %v568, %v562
        %v574 = vstv %s560
        %v575 = vmul.f32 %v574, %v573
        %v576 = vmul.f32 %v574, %v572
        %v577 = vmul.f32 %v574, %v571
        %v578 = vmul.f32 %v574, %v570
        %v579 = vadd.f32 %v556, %v575
        %v580 = vadd.f32 %v557, %v576
        %v581 = vadd.f32 %v558, %v577
        %v582 = vadd.f32 %v559, %v578
        %s583 = sld [smem:[#allocation4 + $0xa]]
        %584 = vrot.lane.b32.xlu0 %v347, 2
        %v585 = vpop.permute.xlu0 %584
        %586 = vrot.lane.b32.xlu0 %v348, 2
        %v587 = vpop.permute.xlu0 %586
        %588 = vrot.lane.b32.xlu0 %v349, 2
        %v589 = vpop.permute.xlu0 %588
        %590 = vrot.lane.b32.xlu0 %v350, 2
        %v591 = vpop.permute.xlu0 %590
        %vm592 = vcmp.lt.s32.totalorder %v361, 2
        %v593 = vsel %vm592, %v589, %v591
        %v594 = vsel %vm592, %v587, %v589
        %v595 = vsel %vm592, %v585, %v587
        %v596 = vsel %vm592, %v591, %v585
        %v597 = vstv %s583
        %v598 = vmul.f32 %v597, %v596
        %v599 = vmul.f32 %v597, %v595
        %v600 = vmul.f32 %v597, %v594
        %v601 = vmul.f32 %v597, %v593
        %v602 = vadd.f32 %v579, %v598
        %v603 = vadd.f32 %v580, %v599
        %v604 = vadd.f32 %v581, %v600
        %v605 = vadd.f32 %v582, %v601
        %s606 = sld [smem:[#allocation4 + $0xb]]
        %607 = vrot.lane.b32.xlu0 %v347, 1
        %v608 = vpop.permute.xlu0 %607
        %609 = vrot.lane.b32.xlu0 %v348, 1
        %v610 = vpop.permute.xlu0 %609
        %611 = vrot.lane.b32.xlu0 %v349, 1
        %v612 = vpop.permute.xlu0 %611
        %613 = vrot.lane.b32.xlu0 %v350, 1
        %v614 = vpop.permute.xlu0 %613
        %vm615 = vcmp.lt.s32.totalorder %v361, 1
        %v616 = vsel %vm615, %v612, %v614
        %v617 = vsel %vm615, %v610, %v612
        %v618 = vsel %vm615, %v608, %v610
        %v619 = vsel %vm615, %v614, %v608
        %v620 = vstv %s606
        %v621 = vmul.f32 %v620, %v619
        %v622 = vmul.f32 %v620, %v618
        %v623 = vmul.f32 %v620, %v617
        %v624 = vmul.f32 %v620, %v616
        %v625 = vadd.f32 %v602, %v621
        %v626 = vadd.f32 %v603, %v622
        %v627 = vadd.f32 %v604, %v623
        %v628 = vadd.f32 %v605, %v624
        %s629 = sld [smem:[#allocation4 + $0xc]]
        %v630 = vstv %s629
        %v631 = vmul.f32 %v630, %v347
        %v632 = vmul.f32 %v630, %v348
        %v633 = vmul.f32 %v630, %v349
        %v634 = vmul.f32 %v630, %v350
        %v635 = vadd.f32 %v625, %v631
        %v636 = vadd.f32 %v626, %v632
        %v637 = vadd.f32 %v627, %v633
        %v638 = vadd.f32 %v628, %v634
        %s639 = sld [smem:[#allocation4 + $0xd]]
        %640 = vrot.lane.b32.xlu0 %v347, 127
        %v641 = vpop.permute.xlu0 %640
        %642 = vrot.lane.b32.xlu0 %v348, 127
        %v643 = vpop.permute.xlu0 %642
        %644 = vrot.lane.b32.xlu0 %v349, 127
        %v645 = vpop.permute.xlu0 %644
        %646 = vrot.lane.b32.xlu0 %v350, 127
        %v647 = vpop.permute.xlu0 %646
        %vm648 = vcmp.lt.s32.totalorder %v361, 127
        %v649 = vsel %vm648, %v645, %v647
        %v650 = vsel %vm648, %v643, %v645
        %v651 = vsel %vm648, %v641, %v643
        %v652 = vsel %vm648, %v647, %v641
        %v653 = vstv %s639
        %v654 = vmul.f32 %v653, %v651
        %v655 = vmul.f32 %v653, %v650
        %v656 = vmul.f32 %v653, %v649
        %v657 = vmul.f32 %v653, %v652
        %v658 = vadd.f32 %v635, %v654
        %v659 = vadd.f32 %v636, %v655
        %v660 = vadd.f32 %v637, %v656
        %v661 = vadd.f32 %v638, %v657
        %s662 = sld [smem:[#allocation4 + $0xe]]
        %663 = vrot.lane.b32.xlu0 %v347, 126
        %v664 = vpop.permute.xlu0 %663
        %665 = vrot.lane.b32.xlu0 %v348, 126
        %v666 = vpop.permute.xlu0 %665
        %667 = vrot.lane.b32.xlu0 %v349, 126
        %v668 = vpop.permute.xlu0 %667
        %669 = vrot.lane.b32.xlu0 %v350, 126
        %v670 = vpop.permute.xlu0 %669
        %vm671 = vcmp.lt.s32.totalorder %v361, 126
        %v672 = vsel %vm671, %v668, %v670
        %v673 = vsel %vm671, %v666, %v668
        %v674 = vsel %vm671, %v664, %v666
        %v675 = vsel %vm671, %v670, %v664
        %v676 = vstv %s662
        %v677 = vmul.f32 %v676, %v674
        %v678 = vmul.f32 %v676, %v673
        %v679 = vmul.f32 %v676, %v672
        %v680 = vmul.f32 %v676, %v675
        %v681 = vadd.f32 %v658, %v677
        %v682 = vadd.f32 %v659, %v678
        %v683 = vadd.f32 %v660, %v679
        %v684 = vadd.f32 %v661, %v680
        %s685 = sld [smem:[#allocation4 + $0xf]]
        %686 = vrot.lane.b32.xlu0 %v347, 110
        %v687 = vpop.permute.xlu0 %686
        %688 = vrot.lane.b32.xlu0 %v348, 110
        %v689 = vpop.permute.xlu0 %688
        %690 = vrot.lane.b32.xlu0 %v349, 110
        %v691 = vpop.permute.xlu0 %690
        %692 = vrot.lane.b32.xlu0 %v350, 110
        %v693 = vpop.permute.xlu0 %692
        %vm694 = vcmp.lt.s32.totalorder %v361, 110
        %v695 = vsel %vm694, %v691, %v693
        %v696 = vsel %vm694, %v689, %v691
        %v697 = vsel %vm694, %v687, %v689
        %v698 = vsel %vm694, %v693, %v687
        %v699 = vstv %s685
        %v700 = vmul.f32 %v699, %v697
        %v701 = vmul.f32 %v699, %v696
        %v702 = vmul.f32 %v699, %v695
        %v703 = vmul.f32 %v699, %v698
        %v704 = vadd.f32 %v681, %v700
        %v705 = vadd.f32 %v682, %v701
        %v706 = vadd.f32 %v683, %v702
        %v707 = vadd.f32 %v684, %v703
        %s708 = sld [smem:[#allocation4 + $0x10]]
        %709 = vrot.lane.b32.xlu0 %v347, 109
        %v710 = vpop.permute.xlu0 %709
        %711 = vrot.lane.b32.xlu0 %v348, 109
        %v712 = vpop.permute.xlu0 %711
        %713 = vrot.lane.b32.xlu0 %v349, 109
        %v714 = vpop.permute.xlu0 %713
        %715 = vrot.lane.b32.xlu0 %v350, 109
        %v716 = vpop.permute.xlu0 %715
        %vm717 = vcmp.lt.s32.totalorder %v361, 109
        %v718 = vsel %vm717, %v714, %v716
        %v719 = vsel %vm717, %v712, %v714
        %v720 = vsel %vm717, %v710, %v712
        %v721 = vsel %vm717, %v716, %v710
        %v722 = vstv %s708
        %v723 = vmul.f32 %v722, %v720
        %v724 = vmul.f32 %v722, %v719
        %v725 = vmul.f32 %v722, %v718
        %v726 = vmul.f32 %v722, %v721
        %v727 = vadd.f32 %v704, %v723
        %v728 = vadd.f32 %v705, %v724
        %v729 = vadd.f32 %v706, %v725
        %v730 = vadd.f32 %v707, %v726
        %s731 = sld [smem:[#allocation4 + $0x11]]
        %732 = vrot.lane.b32.xlu0 %v347, 108
        %v733 = vpop.permute.xlu0 %732
        %734 = vrot.lane.b32.xlu0 %v348, 108
        %v735 = vpop.permute.xlu0 %734
        %736 = vrot.lane.b32.xlu0 %v349, 108
        %v737 = vpop.permute.xlu0 %736
        %738 = vrot.lane.b32.xlu0 %v350, 108
        %v739 = vpop.permute.xlu0 %738
        %vm740 = vcmp.lt.s32.totalorder %v361, 108
        %v741 = vsel %vm740, %v737, %v739
        %v742 = vsel %vm740, %v735, %v737
        %v743 = vsel %vm740, %v733, %v735
        %v744 = vsel %vm740, %v739, %v733
        %v745 = vstv %s731
        %v746 = vmul.f32 %v745, %v743
        %v747 = vmul.f32 %v745, %v742
        %v748 = vmul.f32 %v745, %v741
        %v749 = vmul.f32 %v745, %v744
        %v750 = vadd.f32 %v727, %v746
        %v751 = vadd.f32 %v728, %v747
        %v752 = vadd.f32 %v729, %v748
        %v753 = vadd.f32 %v730, %v749
        %s754 = sld [smem:[#allocation4 + $0x12]]
        %755 = vrot.lane.b32.xlu0 %v347, 107
        %v756 = vpop.permute.xlu0 %755
        %757 = vrot.lane.b32.xlu0 %v348, 107
        %v758 = vpop.permute.xlu0 %757
        %759 = vrot.lane.b32.xlu0 %v349, 107
        %v760 = vpop.permute.xlu0 %759
        %761 = vrot.lane.b32.xlu0 %v350, 107
        %v762 = vpop.permute.xlu0 %761
        %vm763 = vcmp.lt.s32.totalorder %v361, 107
        %v764 = vsel %vm763, %v760, %v762
        %v765 = vsel %vm763, %v758, %v760
        %v766 = vsel %vm763, %v756, %v758
        %v767 = vsel %vm763, %v762, %v756
        %v768 = vstv %s754
        %v769 = vmul.f32 %v768, %v766
        %v770 = vmul.f32 %v768, %v765
        %v771 = vmul.f32 %v768, %v764
        %v772 = vmul.f32 %v768, %v767
        %v773 = vadd.f32 %v750, %v769
        %v774 = vadd.f32 %v751, %v770
        %v775 = vadd.f32 %v752, %v771
        %v776 = vadd.f32 %v753, %v772
        %s777 = sld [smem:[#allocation4 + $0x13]]
        %778 = vrot.lane.b32.xlu0 %v347, 106
        %v779 = vpop.permute.xlu0 %778
        %780 = vrot.lane.b32.xlu0 %v348, 106
        %v781 = vpop.permute.xlu0 %780
        %782 = vrot.lane.b32.xlu0 %v349, 106
        %v783 = vpop.permute.xlu0 %782
        %784 = vrot.lane.b32.xlu0 %v350, 106
        %v785 = vpop.permute.xlu0 %784
        %vm786 = vcmp.lt.s32.totalorder %v361, 106
        %v787 = vsel %vm786, %v783, %v785
        %v788 = vsel %vm786, %v781, %v783
        %v789 = vsel %vm786, %v779, %v781
        %v790 = vsel %vm786, %v785, %v779
        %v791 = vstv %s777
        %v792 = vmul.f32 %v791, %v789
        %v793 = vmul.f32 %v791, %v788
        %v794 = vmul.f32 %v791, %v787
        %v795 = vmul.f32 %v791, %v790
        %v796 = vadd.f32 %v773, %v792
        %v797 = vadd.f32 %v774, %v793
        %v798 = vadd.f32 %v775, %v794
        %v799 = vadd.f32 %v776, %v795
        %s800 = sld [smem:[#allocation4 + $0x14]]
        %801 = vrot.lane.b32.xlu0 %v347, 90
        %v802 = vpop.permute.xlu0 %801
        %803 = vrot.lane.b32.xlu0 %v348, 90
        %v804 = vpop.permute.xlu0 %803
        %805 = vrot.lane.b32.xlu0 %v349, 90
        %v806 = vpop.permute.xlu0 %805
        %807 = vrot.lane.b32.xlu0 %v350, 90
        %v808 = vpop.permute.xlu0 %807
        %vm809 = vcmp.lt.s32.totalorder %v361, 90
        %v810 = vsel %vm809, %v806, %v808
        %v811 = vsel %vm809, %v804, %v806
        %v812 = vsel %vm809, %v802, %v804
        %v813 = vsel %vm809, %v808, %v802
        %v814 = vstv %s800
        %v815 = vmul.f32 %v814, %v812
        %v816 = vmul.f32 %v814, %v811
        %v817 = vmul.f32 %v814, %v810
        %v818 = vmul.f32 %v814, %v813
        %v819 = vadd.f32 %v796, %v815
        %v820 = vadd.f32 %v797, %v816
        %v821 = vadd.f32 %v798, %v817
        %v822 = vadd.f32 %v799, %v818
        %s823 = sld [smem:[#allocation4 + $0x15]]
        %824 = vrot.lane.b32.xlu0 %v347, 89
        %v825 = vpop.permute.xlu0 %824
        %826 = vrot.lane.b32.xlu0 %v348, 89
        %v827 = vpop.permute.xlu0 %826
        %828 = vrot.lane.b32.xlu0 %v349, 89
        %v829 = vpop.permute.xlu0 %828
        %830 = vrot.lane.b32.xlu0 %v350, 89
        %v831 = vpop.permute.xlu0 %830
        %vm832 = vcmp.lt.s32.totalorder %v361, 89
        %v833 = vsel %vm832, %v829, %v831
        %v834 = vsel %vm832, %v827, %v829
        %v835 = vsel %vm832, %v825, %v827
        %v836 = vsel %vm832, %v831, %v825
        %v837 = vstv %s823
        %v838 = vmul.f32 %v837, %v835
        %v839 = vmul.f32 %v837, %v834
        %v840 = vmul.f32 %v837, %v833
        %v841 = vmul.f32 %v837, %v836
        %v842 = vadd.f32 %v819, %v838
        %v843 = vadd.f32 %v820, %v839
        %v844 = vadd.f32 %v821, %v840
        %v845 = vadd.f32 %v822, %v841
        %s846 = sld [smem:[#allocation4 + $0x16]]
        %847 = vrot.lane.b32.xlu0 %v347, 88
        %v848 = vpop.permute.xlu0 %847
        %849 = vrot.lane.b32.xlu0 %v348, 88
        %v850 = vpop.permute.xlu0 %849
        %851 = vrot.lane.b32.xlu0 %v349, 88
        %v852 = vpop.permute.xlu0 %851
        %853 = vrot.lane.b32.xlu0 %v350, 88
        %v854 = vpop.permute.xlu0 %853
        %vm855 = vcmp.lt.s32.totalorder %v361, 88
        %v856 = vsel %vm855, %v852, %v854
        %v857 = vsel %vm855, %v850, %v852
        %v858 = vsel %vm855, %v848, %v850
        %v859 = vsel %vm855, %v854, %v848
        %v860 = vstv %s846
        %v861 = vmul.f32 %v860, %v858
        %v862 = vmul.f32 %v860, %v857
        %v863 = vmul.f32 %v860, %v856
        %v864 = vmul.f32 %v860, %v859
        %v865 = vadd.f32 %v842, %v861
        %v866 = vadd.f32 %v843, %v862
        %v867 = vadd.f32 %v844, %v863
        %v868 = vadd.f32 %v845, %v864
        %s869 = sld [smem:[#allocation4 + $0x17]]
        %870 = vrot.lane.b32.xlu0 %v347, 87
        %v871 = vpop.permute.xlu0 %870
        %872 = vrot.lane.b32.xlu0 %v348, 87
        %v873 = vpop.permute.xlu0 %872
        %874 = vrot.lane.b32.xlu0 %v349, 87
        %v875 = vpop.permute.xlu0 %874
        %876 = vrot.lane.b32.xlu0 %v350, 87
        %v877 = vpop.permute.xlu0 %876
        %vm878 = vcmp.lt.s32.totalorder %v361, 87
        %v879 = vsel %vm878, %v875, %v877
        %v880 = vsel %vm878, %v873, %v875
        %v881 = vsel %vm878, %v871, %v873
        %v882 = vsel %vm878, %v877, %v871
        %v883 = vstv %s869
        %v884 = vmul.f32 %v883, %v881
        %v885 = vmul.f32 %v883, %v880
        %v886 = vmul.f32 %v883, %v879
        %v887 = vmul.f32 %v883, %v882
        %v888 = vadd.f32 %v865, %v884
        %v889 = vadd.f32 %v866, %v885
        %v890 = vadd.f32 %v867, %v886
        %v891 = vadd.f32 %v868, %v887
        %s892 = sld [smem:[#allocation4 + $0x18]]
        %893 = vrot.lane.b32.xlu0 %v347, 86
        %v894 = vpop.permute.xlu0 %893
        %895 = vrot.lane.b32.xlu0 %v348, 86
        %v896 = vpop.permute.xlu0 %895
        %897 = vrot.lane.b32.xlu0 %v349, 86
        %v898 = vpop.permute.xlu0 %897
        %899 = vrot.lane.b32.xlu0 %v350, 86
        %v900 = vpop.permute.xlu0 %899
        %vm901 = vcmp.lt.s32.totalorder %v361, 86
        %v902 = vsel %vm901, %v898, %v900
        %v903 = vsel %vm901, %v896, %v898
        %v904 = vsel %vm901, %v894, %v896
        %v905 = vsel %vm901, %v900, %v894
        %v906 = vstv %s892
        %v907 = vmul.f32 %v906, %v904
        %v908 = vmul.f32 %v906, %v903
        %v909 = vmul.f32 %v906, %v902
        %v910 = vmul.f32 %v906, %v905
        %v911 = vadd.f32 %v888, %v907
        %v912 = vadd.f32 %v889, %v908
        %v913 = vadd.f32 %v890, %v909
        %v914 = vadd.f32 %v891, %v910
        %v915 = vld [vmem:[#allocation2] sm:$0xfe]
        %v916 = vld [vmem:[#allocation2 + $0x8] sm:$0xfe]
        %v917 = vld [vmem:[#allocation2 + $0x10] sm:$0xfe]
        %v918 = vld [vmem:[#allocation2 + $0x18] sm:$0xfe]
        %v919 = vld [vmem:[#allocation2 + $0x20] sm:$0x1]
        %v920 = vld [vmem:[#allocation2 + $0x28] sm:$0x1]
        %v921 = vld [vmem:[#allocation2 + $0x30] sm:$0x1]
        %v922 = vld [vmem:[#allocation2 + $0x38] sm:$0x1]
        %s923 = sld [smem:[#allocation4 + $0x19]]
        %vm932 = vcmask 1046528
        %v933 = vrot.slane %v915, 1
        %v934 = vrot.slane %v919, 1
        %v935 = vsel %vm932, %v933, %v934
        %v936 = vrot.slane %v916, 1
        %v937 = vrot.slane %v920, 1
        %v938 = vsel %vm932, %v936, %v937
        %v939 = vrot.slane %v917, 1
        %v940 = vrot.slane %v921, 1
        %v941 = vsel %vm932, %v939, %v940
        %v942 = vrot.slane %v918, 1
        %v943 = vrot.slane %v922, 1
        %v944 = vsel %vm932, %v942, %v943
        %949 = vrot.lane.b32.xlu0 %v935, 42
        %v950 = vpop.permute.xlu0 %949
        %951 = vrot.lane.b32.xlu0 %v938, 42
        %v952 = vpop.permute.xlu0 %951
        %953 = vrot.lane.b32.xlu0 %v941, 42
        %v954 = vpop.permute.xlu0 %953
        %955 = vrot.lane.b32.xlu0 %v944, 42
        %v956 = vpop.permute.xlu0 %955
        %v957 = vsel %vm362, %v954, %v956
        %v958 = vsel %vm362, %v952, %v954
        %v959 = vsel %vm362, %v950, %v952
        %v960 = vsel %vm362, %v956, %v950
        %v961 = vstv %s923
        %v962 = vmul.f32 %v961, %v960
        %v963 = vmul.f32 %v961, %v959
        %v964 = vmul.f32 %v961, %v958
        %v965 = vmul.f32 %v961, %v957
        %v966 = vadd.f32 %v911, %v962
        %v967 = vadd.f32 %v912, %v963
        %v968 = vadd.f32 %v913, %v964
        %v969 = vadd.f32 %v914, %v965
        %s970 = sld [smem:[#allocation4 + $0x1a]]
        %971 = vrot.lane.b32.xlu0 %v935, 41
        %v972 = vpop.permute.xlu0 %971
        %973 = vrot.lane.b32.xlu0 %v938, 41
        %v974 = vpop.permute.xlu0 %973
        %975 = vrot.lane.b32.xlu0 %v941, 41
        %v976 = vpop.permute.xlu0 %975
        %977 = vrot.lane.b32.xlu0 %v944, 41
        %v978 = vpop.permute.xlu0 %977
        %v979 = vsel %vm385, %v976, %v978
        %v980 = vsel %vm385, %v974, %v976
        %v981 = vsel %vm385, %v972, %v974
        %v982 = vsel %vm385, %v978, %v972
        %v983 = vstv %s970
        %v984 = vmul.f32 %v983, %v982
        %v985 = vmul.f32 %v983, %v981
        %v986 = vmul.f32 %v983, %v980
        %v987 = vmul.f32 %v983, %v979
        %v988 = vadd.f32 %v966, %v984
        %v989 = vadd.f32 %v967, %v985
        %v990 = vadd.f32 %v968, %v986
        %v991 = vadd.f32 %v969, %v987
        %s992 = sld [smem:[#allocation4 + $0x1b]]
        %993 = vrot.lane.b32.xlu0 %v935, 40
        %v994 = vpop.permute.xlu0 %993
        %995 = vrot.lane.b32.xlu0 %v938, 40
        %v996 = vpop.permute.xlu0 %995
        %997 = vrot.lane.b32.xlu0 %v941, 40
        %v998 = vpop.permute.xlu0 %997
        %999 = vrot.lane.b32.xlu0 %v944, 40
        %v1000 = vpop.permute.xlu0 %999
        %v1001 = vsel %vm408, %v998, %v1000
        %v1002 = vsel %vm408, %v996, %v998
        %v1003 = vsel %vm408, %v994, %v996
        %v1004 = vsel %vm408, %v1000, %v994
        %v1005 = vstv %s992
        %v1006 = vmul.f32 %v1005, %v1004
        %v1007 = vmul.f32 %v1005, %v1003
        %v1008 = vmul.f32 %v1005, %v1002
        %v1009 = vmul.f32 %v1005, %v1001
        %v1010 = vadd.f32 %v988, %v1006
        %v1011 = vadd.f32 %v989, %v1007
        %v1012 = vadd.f32 %v990, %v1008
        %v1013 = vadd.f32 %v991, %v1009
        %s1014 = sld [smem:[#allocation4 + $0x1c]]
        %1015 = vrot.lane.b32.xlu0 %v935, 39
        %v1016 = vpop.permute.xlu0 %1015
        %1017 = vrot.lane.b32.xlu0 %v938, 39
        %v1018 = vpop.permute.xlu0 %1017
        %1019 = vrot.lane.b32.xlu0 %v941, 39
        %v1020 = vpop.permute.xlu0 %1019
        %1021 = vrot.lane.b32.xlu0 %v944, 39
        %v1022 = vpop.permute.xlu0 %1021
        %v1023 = vsel %vm431, %v1020, %v1022
        %v1024 = vsel %vm431, %v1018, %v1020
        %v1025 = vsel %vm431, %v1016, %v1018
        %v1026 = vsel %vm431, %v1022, %v1016
        %v1027 = vstv %s1014
        %v1028 = vmul.f32 %v1027, %v1026
        %v1029 = vmul.f32 %v1027, %v1025
        %v1030 = vmul.f32 %v1027, %v1024
        %v1031 = vmul.f32 %v1027, %v1023
        %v1032 = vadd.f32 %v1010, %v1028
        %v1033 = vadd.f32 %v1011, %v1029
        %v1034 = vadd.f32 %v1012, %v1030
        %v1035 = vadd.f32 %v1013, %v1031
        %s1036 = sld [smem:[#allocation4 + $0x1d]]
        %1037 = vrot.lane.b32.xlu0 %v935, 38
        %v1038 = vpop.permute.xlu0 %1037
        %1039 = vrot.lane.b32.xlu0 %v938, 38
        %v1040 = vpop.permute.xlu0 %1039
        %1041 = vrot.lane.b32.xlu0 %v941, 38
        %v1042 = vpop.permute.xlu0 %1041
        %1043 = vrot.lane.b32.xlu0 %v944, 38
        %v1044 = vpop.permute.xlu0 %1043
        %v1045 = vsel %vm454, %v1042, %v1044
        %v1046 = vsel %vm454, %v1040, %v1042
        %v1047 = vsel %vm454, %v1038, %v1040
        %v1048 = vsel %vm454, %v1044, %v1038
        %v1049 = vstv %s1036
        %v1050 = vmul.f32 %v1049, %v1048
        %v1051 = vmul.f32 %v1049, %v1047
        %v1052 = vmul.f32 %v1049, %v1046
        %v1053 = vmul.f32 %v1049, %v1045
        %v1054 = vadd.f32 %v1032, %v1050
        %v1055 = vadd.f32 %v1033, %v1051
        %v1056 = vadd.f32 %v1034, %v1052
        %v1057 = vadd.f32 %v1035, %v1053
        %s1058 = sld [smem:[#allocation4 + $0x1e]]
        %1059 = vrot.lane.b32.xlu0 %v935, 22
        %v1060 = vpop.permute.xlu0 %1059
        %1061 = vrot.lane.b32.xlu0 %v938, 22
        %v1062 = vpop.permute.xlu0 %1061
        %1063 = vrot.lane.b32.xlu0 %v941, 22
        %v1064 = vpop.permute.xlu0 %1063
        %1065 = vrot.lane.b32.xlu0 %v944, 22
        %v1066 = vpop.permute.xlu0 %1065
        %v1067 = vsel %vm477, %v1064, %v1066
        %v1068 = vsel %vm477, %v1062, %v1064
        %v1069 = vsel %vm477, %v1060, %v1062
        %v1070 = vsel %vm477, %v1066, %v1060
        %v1071 = vstv %s1058
        %v1072 = vmul.f32 %v1071, %v1070
        %v1073 = vmul.f32 %v1071, %v1069
        %v1074 = vmul.f32 %v1071, %v1068
        %v1075 = vmul.f32 %v1071, %v1067
        %v1076 = vadd.f32 %v1054, %v1072
        %v1077 = vadd.f32 %v1055, %v1073
        %v1078 = vadd.f32 %v1056, %v1074
        %v1079 = vadd.f32 %v1057, %v1075
        %s1080 = sld [smem:[#allocation4 + $0x1f]]
        %1081 = vrot.lane.b32.xlu0 %v935, 21
        %v1082 = vpop.permute.xlu0 %1081
        %1083 = vrot.lane.b32.xlu0 %v938, 21
        %v1084 = vpop.permute.xlu0 %1083
        %1085 = vrot.lane.b32.xlu0 %v941, 21
        %v1086 = vpop.permute.xlu0 %1085
        %1087 = vrot.lane.b32.xlu0 %v944, 21
        %v1088 = vpop.permute.xlu0 %1087
        %v1089 = vsel %vm500, %v1086, %v1088
        %v1090 = vsel %vm500, %v1084, %v1086
        %v1091 = vsel %vm500, %v1082, %v1084
        %v1092 = vsel %vm500, %v1088, %v1082
        %v1093 = vstv %s1080
        %v1094 = vmul.f32 %v1093, %v1092
        %v1095 = vmul.f32 %v1093, %v1091
        %v1096 = vmul.f32 %v1093, %v1090
        %v1097 = vmul.f32 %v1093, %v1089
        %v1098 = vadd.f32 %v1076, %v1094
        %v1099 = vadd.f32 %v1077, %v1095
        %v1100 = vadd.f32 %v1078, %v1096
        %v1101 = vadd.f32 %v1079, %v1097
        %s1102 = sld [smem:[#allocation4 + $0x20]]
        %1103 = vrot.lane.b32.xlu0 %v935, 20
        %v1104 = vpop.permute.xlu0 %1103
        %1105 = vrot.lane.b32.xlu0 %v938, 20
        %v1106 = vpop.permute.xlu0 %1105
        %1107 = vrot.lane.b32.xlu0 %v941, 20
        %v1108 = vpop.permute.xlu0 %1107
        %1109 = vrot.lane.b32.xlu0 %v944, 20
        %v1110 = vpop.permute.xlu0 %1109
        %v1111 = vsel %vm523, %v1108, %v1110
        %v1112 = vsel %vm523, %v1106, %v1108
        %v1113 = vsel %vm523, %v1104, %v1106
        %v1114 = vsel %vm523, %v1110, %v1104
        %v1115 = vstv %s1102
        %v1116 = vmul.f32 %v1115, %v1114
        %v1117 = vmul.f32 %v1115, %v1113
        %v1118 = vmul.f32 %v1115, %v1112
        %v1119 = vmul.f32 %v1115, %v1111
        %v1120 = vadd.f32 %v1098, %v1116
        %v1121 = vadd.f32 %v1099, %v1117
        %v1122 = vadd.f32 %v1100, %v1118
        %v1123 = vadd.f32 %v1101, %v1119
        %s1124 = sld [smem:[#allocation4 + $0x21]]
        %1125 = vrot.lane.b32.xlu0 %v935, 19
        %v1126 = vpop.permute.xlu0 %1125
        %1127 = vrot.lane.b32.xlu0 %v938, 19
        %v1128 = vpop.permute.xlu0 %1127
        %1129 = vrot.lane.b32.xlu0 %v941, 19
        %v1130 = vpop.permute.xlu0 %1129
        %1131 = vrot.lane.b32.xlu0 %v944, 19
        %v1132 = vpop.permute.xlu0 %1131
        %v1133 = vsel %vm546, %v1130, %v1132
        %v1134 = vsel %vm546, %v1128, %v1130
        %v1135 = vsel %vm546, %v1126, %v1128
        %v1136 = vsel %vm546, %v1132, %v1126
        %v1137 = vstv %s1124
        %v1138 = vmul.f32 %v1137, %v1136
        %v1139 = vmul.f32 %v1137, %v1135
        %v1140 = vmul.f32 %v1137, %v1134
        %v1141 = vmul.f32 %v1137, %v1133
        %v1142 = vadd.f32 %v1120, %v1138
        %v1143 = vadd.f32 %v1121, %v1139
        %v1144 = vadd.f32 %v1122, %v1140
        %v1145 = vadd.f32 %v1123, %v1141
        %s1146 = sld [smem:[#allocation4 + $0x22]]
        %1147 = vrot.lane.b32.xlu0 %v935, 18
        %v1148 = vpop.permute.xlu0 %1147
        %1149 = vrot.lane.b32.xlu0 %v938, 18
        %v1150 = vpop.permute.xlu0 %1149
        %1151 = vrot.lane.b32.xlu0 %v941, 18
        %v1152 = vpop.permute.xlu0 %1151
        %1153 = vrot.lane.b32.xlu0 %v944, 18
        %v1154 = vpop.permute.xlu0 %1153
        %v1155 = vsel %vm569, %v1152, %v1154
        %v1156 = vsel %vm569, %v1150, %v1152
        %v1157 = vsel %vm569, %v1148, %v1150
        %v1158 = vsel %vm569, %v1154, %v1148
        %v1159 = vstv %s1146
        %v1160 = vmul.f32 %v1159, %v1158
        %v1161 = vmul.f32 %v1159, %v1157
        %v1162 = vmul.f32 %v1159, %v1156
        %v1163 = vmul.f32 %v1159, %v1155
        %v1164 = vadd.f32 %v1142, %v1160
        %v1165 = vadd.f32 %v1143, %v1161
        %v1166 = vadd.f32 %v1144, %v1162
        %v1167 = vadd.f32 %v1145, %v1163
        %s1168 = sld [smem:[#allocation4 + $0x23]]
        %1169 = vrot.lane.b32.xlu0 %v935, 2
        %v1170 = vpop.permute.xlu0 %1169
        %1171 = vrot.lane.b32.xlu0 %v938, 2
        %v1172 = vpop.permute.xlu0 %1171
        %1173 = vrot.lane.b32.xlu0 %v941, 2
        %v1174 = vpop.permute.xlu0 %1173
        %1175 = vrot.lane.b32.xlu0 %v944, 2
        %v1176 = vpop.permute.xlu0 %1175
        %v1177 = vsel %vm592, %v1174, %v1176
        %v1178 = vsel %vm592, %v1172, %v1174
        %v1179 = vsel %vm592, %v1170, %v1172
        %v1180 = vsel %vm592, %v1176, %v1170
        %v1181 = vstv %s1168
        %v1182 = vmul.f32 %v1181, %v1180
        %v1183 = vmul.f32 %v1181, %v1179
        %v1184 = vmul.f32 %v1181, %v1178
        %v1185 = vmul.f32 %v1181, %v1177
        %v1186 = vadd.f32 %v1164, %v1182
        %v1187 = vadd.f32 %v1165, %v1183
        %v1188 = vadd.f32 %v1166, %v1184
        %v1189 = vadd.f32 %v1167, %v1185
        %s1190 = sld [smem:[#allocation4 + $0x24]]
        %1191 = vrot.lane.b32.xlu0 %v935, 1
        %v1192 = vpop.permute.xlu0 %1191
        %1193 = vrot.lane.b32.xlu0 %v938, 1
        %v1194 = vpop.permute.xlu0 %1193
        %1195 = vrot.lane.b32.xlu0 %v941, 1
        %v1196 = vpop.permute.xlu0 %1195
        %1197 = vrot.lane.b32.xlu0 %v944, 1
        %v1198 = vpop.permute.xlu0 %1197
        %v1199 = vsel %vm615, %v1196, %v1198
        %v1200 = vsel %vm615, %v1194, %v1196
        %v1201 = vsel %vm615, %v1192, %v1194
        %v1202 = vsel %vm615, %v1198, %v1192
        %v1203 = vstv %s1190
        %v1204 = vmul.f32 %v1203, %v1202
        %v1205 = vmul.f32 %v1203, %v1201
        %v1206 = vmul.f32 %v1203, %v1200
        %v1207 = vmul.f32 %v1203, %v1199
        %v1208 = vadd.f32 %v1186, %v1204
        %v1209 = vadd.f32 %v1187, %v1205
        %v1210 = vadd.f32 %v1188, %v1206
        %v1211 = vadd.f32 %v1189, %v1207
        %s1212 = sld [smem:[#allocation4 + $0x25]]
        %v1213 = vstv %s1212
        %v1214 = vmul.f32 %v1213, %v915
        %v1215 = vmul.f32 %v1213, %v916
        %v1216 = vmul.f32 %v1213, %v917
        %v1217 = vmul.f32 %v1213, %v918
        %v1218 = vmul.f32 %v1213, %v919
        %v1219 = vmul.f32 %v1213, %v920
        %v1220 = vmul.f32 %v1213, %v921
        %v1221 = vmul.f32 %v1213, %v922
        %v1230 = vrot.slane %v1214, 1
        %v1231 = vrot.slane %v1218, 1
        %v1232 = vsel %vm932, %v1230, %v1231
        %v1233 = vrot.slane %v1215, 1
        %v1234 = vrot.slane %v1219, 1
        %v1235 = vsel %vm932, %v1233, %v1234
        %v1236 = vrot.slane %v1216, 1
        %v1237 = vrot.slane %v1220, 1
        %v1238 = vsel %vm932, %v1236, %v1237
        %v1239 = vrot.slane %v1217, 1
        %v1240 = vrot.slane %v1221, 1
        %v1241 = vsel %vm932, %v1239, %v1240
        %v1246 = vadd.f32 %v1208, %v1232
        %v1247 = vadd.f32 %v1209, %v1235
        %v1248 = vadd.f32 %v1210, %v1238
        %v1249 = vadd.f32 %v1211, %v1241
        %s1250 = sld [smem:[#allocation4 + $0x26]]
        %1251 = vrot.lane.b32.xlu0 %v935, 127
        %v1252 = vpop.permute.xlu0 %1251
        %1253 = vrot.lane.b32.xlu0 %v938, 127
        %v1254 = vpop.permute.xlu0 %1253
        %1255 = vrot.lane.b32.xlu0 %v941, 127
        %v1256 = vpop.permute.xlu0 %1255
        %1257 = vrot.lane.b32.xlu0 %v944, 127
        %v1258 = vpop.permute.xlu0 %1257
        %v1259 = vsel %vm648, %v1256, %v1258
        %v1260 = vsel %vm648, %v1254, %v1256
        %v1261 = vsel %vm648, %v1252, %v1254
        %v1262 = vsel %vm648, %v1258, %v1252
        %v1263 = vstv %s1250
        %v1264 = vmul.f32 %v1263, %v1261
        %v1265 = vmul.f32 %v1263, %v1260
        %v1266 = vmul.f32 %v1263, %v1259
        %v1267 = vmul.f32 %v1263, %v1262
        %v1268 = vadd.f32 %v1246, %v1264
        %v1269 = vadd.f32 %v1247, %v1265
        %v1270 = vadd.f32 %v1248, %v1266
        %v1271 = vadd.f32 %v1249, %v1267
        %s1272 = sld [smem:[#allocation4 + $0x27]]
        %1273 = vrot.lane.b32.xlu0 %v935, 126
        %v1274 = vpop.permute.xlu0 %1273
        %1275 = vrot.lane.b32.xlu0 %v938, 126
        %v1276 = vpop.permute.xlu0 %1275
        %1277 = vrot.lane.b32.xlu0 %v941, 126
        %v1278 = vpop.permute.xlu0 %1277
        %1279 = vrot.lane.b32.xlu0 %v944, 126
        %v1280 = vpop.permute.xlu0 %1279
        %v1281 = vsel %vm671, %v1278, %v1280
        %v1282 = vsel %vm671, %v1276, %v1278
        %v1283 = vsel %vm671, %v1274, %v1276
        %v1284 = vsel %vm671, %v1280, %v1274
        %v1285 = vstv %s1272
        %v1286 = vmul.f32 %v1285, %v1283
        %v1287 = vmul.f32 %v1285, %v1282
        %v1288 = vmul.f32 %v1285, %v1281
        %v1289 = vmul.f32 %v1285, %v1284
        %v1290 = vadd.f32 %v1268, %v1286
        %v1291 = vadd.f32 %v1269, %v1287
        %v1292 = vadd.f32 %v1270, %v1288
        %v1293 = vadd.f32 %v1271, %v1289
        %s1294 = sld [smem:[#allocation4 + $0x28]]
        %1295 = vrot.lane.b32.xlu0 %v935, 110
        %v1296 = vpop.permute.xlu0 %1295
        %1297 = vrot.lane.b32.xlu0 %v938, 110
        %v1298 = vpop.permute.xlu0 %1297
        %1299 = vrot.lane.b32.xlu0 %v941, 110
        %v1300 = vpop.permute.xlu0 %1299
        %1301 = vrot.lane.b32.xlu0 %v944, 110
        %v1302 = vpop.permute.xlu0 %1301
        %v1303 = vsel %vm694, %v1300, %v1302
        %v1304 = vsel %vm694, %v1298, %v1300
        %v1305 = vsel %vm694, %v1296, %v1298
        %v1306 = vsel %vm694, %v1302, %v1296
        %v1307 = vstv %s1294
        %v1308 = vmul.f32 %v1307, %v1305
        %v1309 = vmul.f32 %v1307, %v1304
        %v1310 = vmul.f32 %v1307, %v1303
        %v1311 = vmul.f32 %v1307, %v1306
        %v1312 = vadd.f32 %v1290, %v1308
        %v1313 = vadd.f32 %v1291, %v1309
        %v1314 = vadd.f32 %v1292, %v1310
        %v1315 = vadd.f32 %v1293, %v1311
        %s1316 = sld [smem:[#allocation4 + $0x29]]
        %1317 = vrot.lane.b32.xlu0 %v935, 109
        %v1318 = vpop.permute.xlu0 %1317
        %1319 = vrot.lane.b32.xlu0 %v938, 109
        %v1320 = vpop.permute.xlu0 %1319
        %1321 = vrot.lane.b32.xlu0 %v941, 109
        %v1322 = vpop.permute.xlu0 %1321
        %1323 = vrot.lane.b32.xlu0 %v944, 109
        %v1324 = vpop.permute.xlu0 %1323
        %v1325 = vsel %vm717, %v1322, %v1324
        %v1326 = vsel %vm717, %v1320, %v1322
        %v1327 = vsel %vm717, %v1318, %v1320
        %v1328 = vsel %vm717, %v1324, %v1318
        %v1329 = vstv %s1316
        %v1330 = vmul.f32 %v1329, %v1327
        %v1331 = vmul.f32 %v1329, %v1326
        %v1332 = vmul.f32 %v1329, %v1325
        %v1333 = vmul.f32 %v1329, %v1328
        %v1334 = vadd.f32 %v1312, %v1330
        %v1335 = vadd.f32 %v1313, %v1331
        %v1336 = vadd.f32 %v1314, %v1332
        %v1337 = vadd.f32 %v1315, %v1333
        %s1338 = sld [smem:[#allocation4 + $0x2a]]
        %1339 = vrot.lane.b32.xlu0 %v935, 108
        %v1340 = vpop.permute.xlu0 %1339
        %1341 = vrot.lane.b32.xlu0 %v938, 108
        %v1342 = vpop.permute.xlu0 %1341
        %1343 = vrot.lane.b32.xlu0 %v941, 108
        %v1344 = vpop.permute.xlu0 %1343
        %1345 = vrot.lane.b32.xlu0 %v944, 108
        %v1346 = vpop.permute.xlu0 %1345
        %v1347 = vsel %vm740, %v1344, %v1346
        %v1348 = vsel %vm740, %v1342, %v1344
        %v1349 = vsel %vm740, %v1340, %v1342
        %v1350 = vsel %vm740, %v1346, %v1340
        %v1351 = vstv %s1338
        %v1352 = vmul.f32 %v1351, %v1349
        %v1353 = vmul.f32 %v1351, %v1348
        %v1354 = vmul.f32 %v1351, %v1347
        %v1355 = vmul.f32 %v1351, %v1350
        %v1356 = vadd.f32 %v1334, %v1352
        %v1357 = vadd.f32 %v1335, %v1353
        %v1358 = vadd.f32 %v1336, %v1354
        %v1359 = vadd.f32 %v1337, %v1355
        %s1360 = sld [smem:[#allocation4 + $0x2b]]
        %1361 = vrot.lane.b32.xlu0 %v935, 107
        %v1362 = vpop.permute.xlu0 %1361
        %1363 = vrot.lane.b32.xlu0 %v938, 107
        %v1364 = vpop.permute.xlu0 %1363
        %1365 = vrot.lane.b32.xlu0 %v941, 107
        %v1366 = vpop.permute.xlu0 %1365
        %1367 = vrot.lane.b32.xlu0 %v944, 107
        %v1368 = vpop.permute.xlu0 %1367
        %v1369 = vsel %vm763, %v1366, %v1368
        %v1370 = vsel %vm763, %v1364, %v1366
        %v1371 = vsel %vm763, %v1362, %v1364
        %v1372 = vsel %vm763, %v1368, %v1362
        %v1373 = vstv %s1360
        %v1374 = vmul.f32 %v1373, %v1371
        %v1375 = vmul.f32 %v1373, %v1370
        %v1376 = vmul.f32 %v1373, %v1369
        %v1377 = vmul.f32 %v1373, %v1372
        %v1378 = vadd.f32 %v1356, %v1374
        %v1379 = vadd.f32 %v1357, %v1375
        %v1380 = vadd.f32 %v1358, %v1376
        %v1381 = vadd.f32 %v1359, %v1377
        %s1382 = sld [smem:[#allocation4 + $0x2c]]
        %1383 = vrot.lane.b32.xlu0 %v935, 106
        %v1384 = vpop.permute.xlu0 %1383
        %1385 = vrot.lane.b32.xlu0 %v938, 106
        %v1386 = vpop.permute.xlu0 %1385
        %1387 = vrot.lane.b32.xlu0 %v941, 106
        %v1388 = vpop.permute.xlu0 %1387
        %1389 = vrot.lane.b32.xlu0 %v944, 106
        %v1390 = vpop.permute.xlu0 %1389
        %v1391 = vsel %vm786, %v1388, %v1390
        %v1392 = vsel %vm786, %v1386, %v1388
        %v1393 = vsel %vm786, %v1384, %v1386
        %v1394 = vsel %vm786, %v1390, %v1384
        %v1395 = vstv %s1382
        %v1396 = vmul.f32 %v1395, %v1393
        %v1397 = vmul.f32 %v1395, %v1392
        %v1398 = vmul.f32 %v1395, %v1391
        %v1399 = vmul.f32 %v1395, %v1394
        %v1400 = vadd.f32 %v1378, %v1396
        %v1401 = vadd.f32 %v1379, %v1397
        %v1402 = vadd.f32 %v1380, %v1398
        %v1403 = vadd.f32 %v1381, %v1399
        %s1404 = sld [smem:[#allocation4 + $0x2d]]
        %1405 = vrot.lane.b32.xlu0 %v935, 90
        %v1406 = vpop.permute.xlu0 %1405
        %1407 = vrot.lane.b32.xlu0 %v938, 90
        %v1408 = vpop.permute.xlu0 %1407
        %1409 = vrot.lane.b32.xlu0 %v941, 90
        %v1410 = vpop.permute.xlu0 %1409
        %1411 = vrot.lane.b32.xlu0 %v944, 90
        %v1412 = vpop.permute.xlu0 %1411
        %v1413 = vsel %vm809, %v1410, %v1412
        %v1414 = vsel %vm809, %v1408, %v1410
        %v1415 = vsel %vm809, %v1406, %v1408
        %v1416 = vsel %vm809, %v1412, %v1406
        %v1417 = vstv %s1404
        %v1418 = vmul.f32 %v1417, %v1415
        %v1419 = vmul.f32 %v1417, %v1414
        %v1420 = vmul.f32 %v1417, %v1413
        %v1421 = vmul.f32 %v1417, %v1416
        %v1422 = vadd.f32 %v1400, %v1418
        %v1423 = vadd.f32 %v1401, %v1419
        %v1424 = vadd.f32 %v1402, %v1420
        %v1425 = vadd.f32 %v1403, %v1421
        %s1426 = sld [smem:[#allocation4 + $0x2e]]
        %1427 = vrot.lane.b32.xlu0 %v935, 89
        %v1428 = vpop.permute.xlu0 %1427
        %1429 = vrot.lane.b32.xlu0 %v938, 89
        %v1430 = vpop.permute.xlu0 %1429
        %1431 = vrot.lane.b32.xlu0 %v941, 89
        %v1432 = vpop.permute.xlu0 %1431
        %1433 = vrot.lane.b32.xlu0 %v944, 89
        %v1434 = vpop.permute.xlu0 %1433
        %v1435 = vsel %vm832, %v1432, %v1434
        %v1436 = vsel %vm832, %v1430, %v1432
        %v1437 = vsel %vm832, %v1428, %v1430
        %v1438 = vsel %vm832, %v1434, %v1428
        %v1439 = vstv %s1426
        %v1440 = vmul.f32 %v1439, %v1437
        %v1441 = vmul.f32 %v1439, %v1436
        %v1442 = vmul.f32 %v1439, %v1435
        %v1443 = vmul.f32 %v1439, %v1438
        %v1444 = vadd.f32 %v1422, %v1440
        %v1445 = vadd.f32 %v1423, %v1441
        %v1446 = vadd.f32 %v1424, %v1442
        %v1447 = vadd.f32 %v1425, %v1443
        %s1448 = sld [smem:[#allocation4 + $0x2f]]
        %1449 = vrot.lane.b32.xlu0 %v935, 88
        %v1450 = vpop.permute.xlu0 %1449
        %1451 = vrot.lane.b32.xlu0 %v938, 88
        %v1452 = vpop.permute.xlu0 %1451
        %1453 = vrot.lane.b32.xlu0 %v941, 88
        %v1454 = vpop.permute.xlu0 %1453
        %1455 = vrot.lane.b32.xlu0 %v944, 88
        %v1456 = vpop.permute.xlu0 %1455
        %v1457 = vsel %vm855, %v1454, %v1456
        %v1458 = vsel %vm855, %v1452, %v1454
        %v1459 = vsel %vm855, %v1450, %v1452
        %v1460 = vsel %vm855, %v1456, %v1450
        %v1461 = vstv %s1448
        %v1462 = vmul.f32 %v1461, %v1459
        %v1463 = vmul.f32 %v1461, %v1458
        %v1464 = vmul.f32 %v1461, %v1457
        %v1465 = vmul.f32 %v1461, %v1460
        %v1466 = vadd.f32 %v1444, %v1462
        %v1467 = vadd.f32 %v1445, %v1463
        %v1468 = vadd.f32 %v1446, %v1464
        %v1469 = vadd.f32 %v1447, %v1465
        %s1470 = sld [smem:[#allocation4 + $0x30]]
        %1471 = vrot.lane.b32.xlu0 %v935, 87
        %v1472 = vpop.permute.xlu0 %1471
        %1473 = vrot.lane.b32.xlu0 %v938, 87
        %v1474 = vpop.permute.xlu0 %1473
        %1475 = vrot.lane.b32.xlu0 %v941, 87
        %v1476 = vpop.permute.xlu0 %1475
        %1477 = vrot.lane.b32.xlu0 %v944, 87
        %v1478 = vpop.permute.xlu0 %1477
        %v1479 = vsel %vm878, %v1476, %v1478
        %v1480 = vsel %vm878, %v1474, %v1476
        %v1481 = vsel %vm878, %v1472, %v1474
        %v1482 = vsel %vm878, %v1478, %v1472
        %v1483 = vstv %s1470
        %v1484 = vmul.f32 %v1483, %v1481
        %v1485 = vmul.f32 %v1483, %v1480
        %v1486 = vmul.f32 %v1483, %v1479
        %v1487 = vmul.f32 %v1483, %v1482
        %v1488 = vadd.f32 %v1466, %v1484
        %v1489 = vadd.f32 %v1467, %v1485
        %v1490 = vadd.f32 %v1468, %v1486
        %v1491 = vadd.f32 %v1469, %v1487
        %s1492 = sld [smem:[#allocation4 + $0x31]]
        %1493 = vrot.lane.b32.xlu0 %v935, 86
        %v1494 = vpop.permute.xlu0 %1493
        %1495 = vrot.lane.b32.xlu0 %v938, 86
        %v1496 = vpop.permute.xlu0 %1495
        %1497 = vrot.lane.b32.xlu0 %v941, 86
        %v1498 = vpop.permute.xlu0 %1497
        %1499 = vrot.lane.b32.xlu0 %v944, 86
        %v1500 = vpop.permute.xlu0 %1499
        %v1501 = vsel %vm901, %v1498, %v1500
        %v1502 = vsel %vm901, %v1496, %v1498
        %v1503 = vsel %vm901, %v1494, %v1496
        %v1504 = vsel %vm901, %v1500, %v1494
        %v1505 = vstv %s1492
        %v1506 = vmul.f32 %v1505, %v1503
        %v1507 = vmul.f32 %v1505, %v1502
        %v1508 = vmul.f32 %v1505, %v1501
        %v1509 = vmul.f32 %v1505, %v1504
        %v1510 = vadd.f32 %v1488, %v1506
        %v1511 = vadd.f32 %v1489, %v1507
        %v1512 = vadd.f32 %v1490, %v1508
        %v1513 = vadd.f32 %v1491, %v1509
        %v1514 = vld [vmem:[#allocation2] sm:$0xfc]
        %v1515 = vld [vmem:[#allocation2 + $0x8] sm:$0xfc]
        %v1516 = vld [vmem:[#allocation2 + $0x10] sm:$0xfc]
        %v1517 = vld [vmem:[#allocation2 + $0x18] sm:$0xfc]
        %v1518 = vld [vmem:[#allocation2 + $0x20] sm:$0x3]
        %v1519 = vld [vmem:[#allocation2 + $0x28] sm:$0x3]
        %v1520 = vld [vmem:[#allocation2 + $0x30] sm:$0x3]
        %v1521 = vld [vmem:[#allocation2 + $0x38] sm:$0x3]
        %s1522 = sld [smem:[#allocation4 + $0x32]]
        %vm1531 = vcmask 1045504
        %v1532 = vrot.slane %v1514, 2
        %v1533 = vrot.slane %v1518, 2
        %v1534 = vsel %vm1531, %v1532, %v1533
        %v1535 = vrot.slane %v1515, 2
        %v1536 = vrot.slane %v1519, 2
        %v1537 = vsel %vm1531, %v1535, %v1536
        %v1538 = vrot.slane %v1516, 2
        %v1539 = vrot.slane %v1520, 2
        %v1540 = vsel %vm1531, %v1538, %v1539
        %v1541 = vrot.slane %v1517, 2
        %v1542 = vrot.slane %v1521, 2
        %v1543 = vsel %vm1531, %v1541, %v1542
        %1548 = vrot.lane.b32.xlu0 %v1534, 42
        %v1549 = vpop.permute.xlu0 %1548
        %1550 = vrot.lane.b32.xlu0 %v1537, 42
        %v1551 = vpop.permute.xlu0 %1550
        %1552 = vrot.lane.b32.xlu0 %v1540, 42
        %v1553 = vpop.permute.xlu0 %1552
        %1554 = vrot.lane.b32.xlu0 %v1543, 42
        %v1555 = vpop.permute.xlu0 %1554
        %v1556 = vsel %vm362, %v1553, %v1555
        %v1557 = vsel %vm362, %v1551, %v1553
        %v1558 = vsel %vm362, %v1549, %v1551
        %v1559 = vsel %vm362, %v1555, %v1549
        %v1560 = vstv %s1522
        %v1561 = vmul.f32 %v1560, %v1559
        %v1562 = vmul.f32 %v1560, %v1558
        %v1563 = vmul.f32 %v1560, %v1557
        %v1564 = vmul.f32 %v1560, %v1556
        %v1565 = vadd.f32 %v1510, %v1561
        %v1566 = vadd.f32 %v1511, %v1562
        %v1567 = vadd.f32 %v1512, %v1563
        %v1568 = vadd.f32 %v1513, %v1564
        %s1569 = sld [smem:[#allocation4 + $0x33]]
        %1570 = vrot.lane.b32.xlu0 %v1534, 41
        %v1571 = vpop.permute.xlu0 %1570
        %1572 = vrot.lane.b32.xlu0 %v1537, 41
        %v1573 = vpop.permute.xlu0 %1572
        %1574 = vrot.lane.b32.xlu0 %v1540, 41
        %v1575 = vpop.permute.xlu0 %1574
        %1576 = vrot.lane.b32.xlu0 %v1543, 41
        %v1577 = vpop.permute.xlu0 %1576
        %v1578 = vsel %vm385, %v1575, %v1577
        %v1579 = vsel %vm385, %v1573, %v1575
        %v1580 = vsel %vm385, %v1571, %v1573
        %v1581 = vsel %vm385, %v1577, %v1571
        %v1582 = vstv %s1569
        %v1583 = vmul.f32 %v1582, %v1581
        %v1584 = vmul.f32 %v1582, %v1580
        %v1585 = vmul.f32 %v1582, %v1579
        %v1586 = vmul.f32 %v1582, %v1578
        %v1587 = vadd.f32 %v1565, %v1583
        %v1588 = vadd.f32 %v1566, %v1584
        %v1589 = vadd.f32 %v1567, %v1585
        %v1590 = vadd.f32 %v1568, %v1586
        %s1591 = sld [smem:[#allocation4 + $0x34]]
        %1592 = vrot.lane.b32.xlu0 %v1534, 40
        %v1593 = vpop.permute.xlu0 %1592
        %1594 = vrot.lane.b32.xlu0 %v1537, 40
        %v1595 = vpop.permute.xlu0 %1594
        %1596 = vrot.lane.b32.xlu0 %v1540, 40
        %v1597 = vpop.permute.xlu0 %1596
        %1598 = vrot.lane.b32.xlu0 %v1543, 40
        %v1599 = vpop.permute.xlu0 %1598
        %v1600 = vsel %vm408, %v1597, %v1599
        %v1601 = vsel %vm408, %v1595, %v1597
        %v1602 = vsel %vm408, %v1593, %v1595
        %v1603 = vsel %vm408, %v1599, %v1593
        %v1604 = vstv %s1591
        %v1605 = vmul.f32 %v1604, %v1603
        %v1606 = vmul.f32 %v1604, %v1602
        %v1607 = vmul.f32 %v1604, %v1601
        %v1608 = vmul.f32 %v1604, %v1600
        %v1609 = vadd.f32 %v1587, %v1605
        %v1610 = vadd.f32 %v1588, %v1606
        %v1611 = vadd.f32 %v1589, %v1607
        %v1612 = vadd.f32 %v1590, %v1608
        %s1613 = sld [smem:[#allocation4 + $0x35]]
        %1614 = vrot.lane.b32.xlu0 %v1534, 39
        %v1615 = vpop.permute.xlu0 %1614
        %1616 = vrot.lane.b32.xlu0 %v1537, 39
        %v1617 = vpop.permute.xlu0 %1616
        %1618 = vrot.lane.b32.xlu0 %v1540, 39
        %v1619 = vpop.permute.xlu0 %1618
        %1620 = vrot.lane.b32.xlu0 %v1543, 39
        %v1621 = vpop.permute.xlu0 %1620
        %v1622 = vsel %vm431, %v1619, %v1621
        %v1623 = vsel %vm431, %v1617, %v1619
        %v1624 = vsel %vm431, %v1615, %v1617
        %v1625 = vsel %vm431, %v1621, %v1615
        %v1626 = vstv %s1613
        %v1627 = vmul.f32 %v1626, %v1625
        %v1628 = vmul.f32 %v1626, %v1624
        %v1629 = vmul.f32 %v1626, %v1623
        %v1630 = vmul.f32 %v1626, %v1622
        %v1631 = vadd.f32 %v1609, %v1627
        %v1632 = vadd.f32 %v1610, %v1628
        %v1633 = vadd.f32 %v1611, %v1629
        %v1634 = vadd.f32 %v1612, %v1630
        %s1635 = sld [smem:[#allocation4 + $0x36]]
        %1636 = vrot.lane.b32.xlu0 %v1534, 38
        %v1637 = vpop.permute.xlu0 %1636
        %1638 = vrot.lane.b32.xlu0 %v1537, 38
        %v1639 = vpop.permute.xlu0 %1638
        %1640 = vrot.lane.b32.xlu0 %v1540, 38
        %v1641 = vpop.permute.xlu0 %1640
        %1642 = vrot.lane.b32.xlu0 %v1543, 38
        %v1643 = vpop.permute.xlu0 %1642
        %v1644 = vsel %vm454, %v1641, %v1643
        %v1645 = vsel %vm454, %v1639, %v1641
        %v1646 = vsel %vm454, %v1637, %v1639
        %v1647 = vsel %vm454, %v1643, %v1637
        %v1648 = vstv %s1635
        %v1649 = vmul.f32 %v1648, %v1647
        %v1650 = vmul.f32 %v1648, %v1646
        %v1651 = vmul.f32 %v1648, %v1645
        %v1652 = vmul.f32 %v1648, %v1644
        %v1653 = vadd.f32 %v1631, %v1649
        %v1654 = vadd.f32 %v1632, %v1650
        %v1655 = vadd.f32 %v1633, %v1651
        %v1656 = vadd.f32 %v1634, %v1652
        %s1657 = sld [smem:[#allocation4 + $0x37]]
        %1658 = vrot.lane.b32.xlu0 %v1534, 22
        %v1659 = vpop.permute.xlu0 %1658
        %1660 = vrot.lane.b32.xlu0 %v1537, 22
        %v1661 = vpop.permute.xlu0 %1660
        %1662 = vrot.lane.b32.xlu0 %v1540, 22
        %v1663 = vpop.permute.xlu0 %1662
        %1664 = vrot.lane.b32.xlu0 %v1543, 22
        %v1665 = vpop.permute.xlu0 %1664
        %v1666 = vsel %vm477, %v1663, %v1665
        %v1667 = vsel %vm477, %v1661, %v1663
        %v1668 = vsel %vm477, %v1659, %v1661
        %v1669 = vsel %vm477, %v1665, %v1659
        %v1670 = vstv %s1657
        %v1671 = vmul.f32 %v1670, %v1669
        %v1672 = vmul.f32 %v1670, %v1668
        %v1673 = vmul.f32 %v1670, %v1667
        %v1674 = vmul.f32 %v1670, %v1666
        %v1675 = vadd.f32 %v1653, %v1671
        %v1676 = vadd.f32 %v1654, %v1672
        %v1677 = vadd.f32 %v1655, %v1673
        %v1678 = vadd.f32 %v1656, %v1674
        %s1679 = sld [smem:[#allocation4 + $0x38]]
        %1680 = vrot.lane.b32.xlu0 %v1534, 21
        %v1681 = vpop.permute.xlu0 %1680
        %1682 = vrot.lane.b32.xlu0 %v1537, 21
        %v1683 = vpop.permute.xlu0 %1682
        %1684 = vrot.lane.b32.xlu0 %v1540, 21
        %v1685 = vpop.permute.xlu0 %1684
        %1686 = vrot.lane.b32.xlu0 %v1543, 21
        %v1687 = vpop.permute.xlu0 %1686
        %v1688 = vsel %vm500, %v1685, %v1687
        %v1689 = vsel %vm500, %v1683, %v1685
        %v1690 = vsel %vm500, %v1681, %v1683
        %v1691 = vsel %vm500, %v1687, %v1681
        %v1692 = vstv %s1679
        %v1693 = vmul.f32 %v1692, %v1691
        %v1694 = vmul.f32 %v1692, %v1690
        %v1695 = vmul.f32 %v1692, %v1689
        %v1696 = vmul.f32 %v1692, %v1688
        %v1697 = vadd.f32 %v1675, %v1693
        %v1698 = vadd.f32 %v1676, %v1694
        %v1699 = vadd.f32 %v1677, %v1695
        %v1700 = vadd.f32 %v1678, %v1696
        %s1701 = sld [smem:[#allocation4 + $0x39]]
        %1702 = vrot.lane.b32.xlu0 %v1534, 20
        %v1703 = vpop.permute.xlu0 %1702
        %1704 = vrot.lane.b32.xlu0 %v1537, 20
        %v1705 = vpop.permute.xlu0 %1704
        %1706 = vrot.lane.b32.xlu0 %v1540, 20
        %v1707 = vpop.permute.xlu0 %1706
        %1708 = vrot.lane.b32.xlu0 %v1543, 20
        %v1709 = vpop.permute.xlu0 %1708
        %v1710 = vsel %vm523, %v1707, %v1709
        %v1711 = vsel %vm523, %v1705, %v1707
        %v1712 = vsel %vm523, %v1703, %v1705
        %v1713 = vsel %vm523, %v1709, %v1703
        %v1714 = vstv %s1701
        %v1715 = vmul.f32 %v1714, %v1713
        %v1716 = vmul.f32 %v1714, %v1712
        %v1717 = vmul.f32 %v1714, %v1711
        %v1718 = vmul.f32 %v1714, %v1710
        %v1719 = vadd.f32 %v1697, %v1715
        %v1720 = vadd.f32 %v1698, %v1716
        %v1721 = vadd.f32 %v1699, %v1717
        %v1722 = vadd.f32 %v1700, %v1718
        %s1723 = sld [smem:[#allocation4 + $0x3a]]
        %1724 = vrot.lane.b32.xlu0 %v1534, 19
        %v1725 = vpop.permute.xlu0 %1724
        %1726 = vrot.lane.b32.xlu0 %v1537, 19
        %v1727 = vpop.permute.xlu0 %1726
        %1728 = vrot.lane.b32.xlu0 %v1540, 19
        %v1729 = vpop.permute.xlu0 %1728
        %1730 = vrot.lane.b32.xlu0 %v1543, 19
        %v1731 = vpop.permute.xlu0 %1730
        %v1732 = vsel %vm546, %v1729, %v1731
        %v1733 = vsel %vm546, %v1727, %v1729
        %v1734 = vsel %vm546, %v1725, %v1727
        %v1735 = vsel %vm546, %v1731, %v1725
        %v1736 = vstv %s1723
        %v1737 = vmul.f32 %v1736, %v1735
        %v1738 = vmul.f32 %v1736, %v1734
        %v1739 = vmul.f32 %v1736, %v1733
        %v1740 = vmul.f32 %v1736, %v1732
        %v1741 = vadd.f32 %v1719, %v1737
        %v1742 = vadd.f32 %v1720, %v1738
        %v1743 = vadd.f32 %v1721, %v1739
        %v1744 = vadd.f32 %v1722, %v1740
        %s1745 = sld [smem:[#allocation4 + $0x3b]]
        %1746 = vrot.lane.b32.xlu0 %v1534, 18
        %v1747 = vpop.permute.xlu0 %1746
        %1748 = vrot.lane.b32.xlu0 %v1537, 18
        %v1749 = vpop.permute.xlu0 %1748
        %1750 = vrot.lane.b32.xlu0 %v1540, 18
        %v1751 = vpop.permute.xlu0 %1750
        %1752 = vrot.lane.b32.xlu0 %v1543, 18
        %v1753 = vpop.permute.xlu0 %1752
        %v1754 = vsel %vm569, %v1751, %v1753
        %v1755 = vsel %vm569, %v1749, %v1751
        %v1756 = vsel %vm569, %v1747, %v1749
        %v1757 = vsel %vm569, %v1753, %v1747
        %v1758 = vstv %s1745
        %v1759 = vmul.f32 %v1758, %v1757
        %v1760 = vmul.f32 %v1758, %v1756
        %v1761 = vmul.f32 %v1758, %v1755
        %v1762 = vmul.f32 %v1758, %v1754
        %v1763 = vadd.f32 %v1741, %v1759
        %v1764 = vadd.f32 %v1742, %v1760
        %v1765 = vadd.f32 %v1743, %v1761
        %v1766 = vadd.f32 %v1744, %v1762
        %s1767 = sld [smem:[#allocation4 + $0x3c]]
        %1768 = vrot.lane.b32.xlu0 %v1534, 2
        %v1769 = vpop.permute.xlu0 %1768
        %1770 = vrot.lane.b32.xlu0 %v1537, 2
        %v1771 = vpop.permute.xlu0 %1770
        %1772 = vrot.lane.b32.xlu0 %v1540, 2
        %v1773 = vpop.permute.xlu0 %1772
        %1774 = vrot.lane.b32.xlu0 %v1543, 2
        %v1775 = vpop.permute.xlu0 %1774
        %v1776 = vsel %vm592, %v1773, %v1775
        %v1777 = vsel %vm592, %v1771, %v1773
        %v1778 = vsel %vm592, %v1769, %v1771
        %v1779 = vsel %vm592, %v1775, %v1769
        %v1780 = vstv %s1767
        %v1781 = vmul.f32 %v1780, %v1779
        %v1782 = vmul.f32 %v1780, %v1778
        %v1783 = vmul.f32 %v1780, %v1777
        %v1784 = vmul.f32 %v1780, %v1776
        %v1785 = vadd.f32 %v1763, %v1781
        %v1786 = vadd.f32 %v1764, %v1782
        %v1787 = vadd.f32 %v1765, %v1783
        %v1788 = vadd.f32 %v1766, %v1784
        %s1789 = sld [smem:[#allocation4 + $0x3d]]
        %1790 = vrot.lane.b32.xlu0 %v1534, 1
        %v1791 = vpop.permute.xlu0 %1790
        %1792 = vrot.lane.b32.xlu0 %v1537, 1
        %v1793 = vpop.permute.xlu0 %1792
        %1794 = vrot.lane.b32.xlu0 %v1540, 1
        %v1795 = vpop.permute.xlu0 %1794
        %1796 = vrot.lane.b32.xlu0 %v1543, 1
        %v1797 = vpop.permute.xlu0 %1796
        %v1798 = vsel %vm615, %v1795, %v1797
        %v1799 = vsel %vm615, %v1793, %v1795
        %v1800 = vsel %vm615, %v1791, %v1793
        %v1801 = vsel %vm615, %v1797, %v1791
        %v1802 = vstv %s1789
        %v1803 = vmul.f32 %v1802, %v1801
        %v1804 = vmul.f32 %v1802, %v1800
        %v1805 = vmul.f32 %v1802, %v1799
        %v1806 = vmul.f32 %v1802, %v1798
        %v1807 = vadd.f32 %v1785, %v1803
        %v1808 = vadd.f32 %v1786, %v1804
        %v1809 = vadd.f32 %v1787, %v1805
        %v1810 = vadd.f32 %v1788, %v1806
        %s1811 = sld [smem:[#allocation4 + $0x3e]]
        %v1812 = vstv %s1811
        %v1813 = vmul.f32 %v1812, %v1514
        %v1814 = vmul.f32 %v1812, %v1515
        %v1815 = vmul.f32 %v1812, %v1516
        %v1816 = vmul.f32 %v1812, %v1517
        %v1817 = vmul.f32 %v1812, %v1518
        %v1818 = vmul.f32 %v1812, %v1519
        %v1819 = vmul.f32 %v1812, %v1520
        %v1820 = vmul.f32 %v1812, %v1521
        %v1829 = vrot.slane %v1813, 2
        %v1830 = vrot.slane %v1817, 2
        %v1831 = vsel %vm1531, %v1829, %v1830
        %v1832 = vrot.slane %v1814, 2
        %v1833 = vrot.slane %v1818, 2
        %v1834 = vsel %vm1531, %v1832, %v1833
        %v1835 = vrot.slane %v1815, 2
        %v1836 = vrot.slane %v1819, 2
        %v1837 = vsel %vm1531, %v1835, %v1836
        %v1838 = vrot.slane %v1816, 2
        %v1839 = vrot.slane %v1820, 2
        %v1840 = vsel %vm1531, %v1838, %v1839
        %v1845 = vadd.f32 %v1807, %v1831
        %v1846 = vadd.f32 %v1808, %v1834
        %v1847 = vadd.f32 %v1809, %v1837
        %v1848 = vadd.f32 %v1810, %v1840
        %s1849 = sld [smem:[#allocation4 + $0x3f]]
        %1850 = vrot.lane.b32.xlu0 %v1534, 127
        %v1851 = vpop.permute.xlu0 %1850
        %1852 = vrot.lane.b32.xlu0 %v1537, 127
        %v1853 = vpop.permute.xlu0 %1852
        %1854 = vrot.lane.b32.xlu0 %v1540, 127
        %v1855 = vpop.permute.xlu0 %1854
        %1856 = vrot.lane.b32.xlu0 %v1543, 127
        %v1857 = vpop.permute.xlu0 %1856
        %v1858 = vsel %vm648, %v1855, %v1857
        %v1859 = vsel %vm648, %v1853, %v1855
        %v1860 = vsel %vm648, %v1851, %v1853
        %v1861 = vsel %vm648, %v1857, %v1851
        %v1862 = vstv %s1849
        %v1863 = vmul.f32 %v1862, %v1860
        %v1864 = vmul.f32 %v1862, %v1859
        %v1865 = vmul.f32 %v1862, %v1858
        %v1866 = vmul.f32 %v1862, %v1861
        %v1867 = vadd.f32 %v1845, %v1863
        %v1868 = vadd.f32 %v1846, %v1864
        %v1869 = vadd.f32 %v1847, %v1865
        %v1870 = vadd.f32 %v1848, %v1866
        %s1871 = sld [smem:[#allocation4 + $0x40]]
        %1872 = vrot.lane.b32.xlu0 %v1534, 126
        %v1873 = vpop.permute.xlu0 %1872
        %1874 = vrot.lane.b32.xlu0 %v1537, 126
        %v1875 = vpop.permute.xlu0 %1874
        %1876 = vrot.lane.b32.xlu0 %v1540, 126
        %v1877 = vpop.permute.xlu0 %1876
        %1878 = vrot.lane.b32.xlu0 %v1543, 126
        %v1879 = vpop.permute.xlu0 %1878
        %v1880 = vsel %vm671, %v1877, %v1879
        %v1881 = vsel %vm671, %v1875, %v1877
        %v1882 = vsel %vm671, %v1873, %v1875
        %v1883 = vsel %vm671, %v1879, %v1873
        %v1884 = vstv %s1871
        %v1885 = vmul.f32 %v1884, %v1882
        %v1886 = vmul.f32 %v1884, %v1881
        %v1887 = vmul.f32 %v1884, %v1880
        %v1888 = vmul.f32 %v1884, %v1883
        %v1889 = vadd.f32 %v1867, %v1885
        %v1890 = vadd.f32 %v1868, %v1886
        %v1891 = vadd.f32 %v1869, %v1887
        %v1892 = vadd.f32 %v1870, %v1888
        %s1893 = sld [smem:[#allocation4 + $0x41]]
        %1894 = vrot.lane.b32.xlu0 %v1534, 110
        %v1895 = vpop.permute.xlu0 %1894
        %1896 = vrot.lane.b32.xlu0 %v1537, 110
        %v1897 = vpop.permute.xlu0 %1896
        %1898 = vrot.lane.b32.xlu0 %v1540, 110
        %v1899 = vpop.permute.xlu0 %1898
        %1900 = vrot.lane.b32.xlu0 %v1543, 110
        %v1901 = vpop.permute.xlu0 %1900
        %v1902 = vsel %vm694, %v1899, %v1901
        %v1903 = vsel %vm694, %v1897, %v1899
        %v1904 = vsel %vm694, %v1895, %v1897
        %v1905 = vsel %vm694, %v1901, %v1895
        %v1906 = vstv %s1893
        %v1907 = vmul.f32 %v1906, %v1904
        %v1908 = vmul.f32 %v1906, %v1903
        %v1909 = vmul.f32 %v1906, %v1902
        %v1910 = vmul.f32 %v1906, %v1905
        %v1911 = vadd.f32 %v1889, %v1907
        %v1912 = vadd.f32 %v1890, %v1908
        %v1913 = vadd.f32 %v1891, %v1909
        %v1914 = vadd.f32 %v1892, %v1910
        %s1915 = sld [smem:[#allocation4 + $0x42]]
        %1916 = vrot.lane.b32.xlu0 %v1534, 109
        %v1917 = vpop.permute.xlu0 %1916
        %1918 = vrot.lane.b32.xlu0 %v1537, 109
        %v1919 = vpop.permute.xlu0 %1918
        %1920 = vrot.lane.b32.xlu0 %v1540, 109
        %v1921 = vpop.permute.xlu0 %1920
        %1922 = vrot.lane.b32.xlu0 %v1543, 109
        %v1923 = vpop.permute.xlu0 %1922
        %v1924 = vsel %vm717, %v1921, %v1923
        %v1925 = vsel %vm717, %v1919, %v1921
        %v1926 = vsel %vm717, %v1917, %v1919
        %v1927 = vsel %vm717, %v1923, %v1917
        %v1928 = vstv %s1915
        %v1929 = vmul.f32 %v1928, %v1926
        %v1930 = vmul.f32 %v1928, %v1925
        %v1931 = vmul.f32 %v1928, %v1924
        %v1932 = vmul.f32 %v1928, %v1927
        %v1933 = vadd.f32 %v1911, %v1929
        %v1934 = vadd.f32 %v1912, %v1930
        %v1935 = vadd.f32 %v1913, %v1931
        %v1936 = vadd.f32 %v1914, %v1932
        %s1937 = sld [smem:[#allocation4 + $0x43]]
        %1938 = vrot.lane.b32.xlu0 %v1534, 108
        %v1939 = vpop.permute.xlu0 %1938
        %1940 = vrot.lane.b32.xlu0 %v1537, 108
        %v1941 = vpop.permute.xlu0 %1940
        %1942 = vrot.lane.b32.xlu0 %v1540, 108
        %v1943 = vpop.permute.xlu0 %1942
        %1944 = vrot.lane.b32.xlu0 %v1543, 108
        %v1945 = vpop.permute.xlu0 %1944
        %v1946 = vsel %vm740, %v1943, %v1945
        %v1947 = vsel %vm740, %v1941, %v1943
        %v1948 = vsel %vm740, %v1939, %v1941
        %v1949 = vsel %vm740, %v1945, %v1939
        %v1950 = vstv %s1937
        %v1951 = vmul.f32 %v1950, %v1948
        %v1952 = vmul.f32 %v1950, %v1947
        %v1953 = vmul.f32 %v1950, %v1946
        %v1954 = vmul.f32 %v1950, %v1949
        %v1955 = vadd.f32 %v1933, %v1951
        %v1956 = vadd.f32 %v1934, %v1952
        %v1957 = vadd.f32 %v1935, %v1953
        %v1958 = vadd.f32 %v1936, %v1954
        %s1959 = sld [smem:[#allocation4 + $0x44]]
        %1960 = vrot.lane.b32.xlu0 %v1534, 107
        %v1961 = vpop.permute.xlu0 %1960
        %1962 = vrot.lane.b32.xlu0 %v1537, 107
        %v1963 = vpop.permute.xlu0 %1962
        %1964 = vrot.lane.b32.xlu0 %v1540, 107
        %v1965 = vpop.permute.xlu0 %1964
        %1966 = vrot.lane.b32.xlu0 %v1543, 107
        %v1967 = vpop.permute.xlu0 %1966
        %v1968 = vsel %vm763, %v1965, %v1967
        %v1969 = vsel %vm763, %v1963, %v1965
        %v1970 = vsel %vm763, %v1961, %v1963
        %v1971 = vsel %vm763, %v1967, %v1961
        %v1972 = vstv %s1959
        %v1973 = vmul.f32 %v1972, %v1970
        %v1974 = vmul.f32 %v1972, %v1969
        %v1975 = vmul.f32 %v1972, %v1968
        %v1976 = vmul.f32 %v1972, %v1971
        %v1977 = vadd.f32 %v1955, %v1973
        %v1978 = vadd.f32 %v1956, %v1974
        %v1979 = vadd.f32 %v1957, %v1975
        %v1980 = vadd.f32 %v1958, %v1976
        %s1981 = sld [smem:[#allocation4 + $0x45]]
        %1982 = vrot.lane.b32.xlu0 %v1534, 106
        %v1983 = vpop.permute.xlu0 %1982
        %1984 = vrot.lane.b32.xlu0 %v1537, 106
        %v1985 = vpop.permute.xlu0 %1984
        %1986 = vrot.lane.b32.xlu0 %v1540, 106
        %v1987 = vpop.permute.xlu0 %1986
        %1988 = vrot.lane.b32.xlu0 %v1543, 106
        %v1989 = vpop.permute.xlu0 %1988
        %v1990 = vsel %vm786, %v1987, %v1989
        %v1991 = vsel %vm786, %v1985, %v1987
        %v1992 = vsel %vm786, %v1983, %v1985
        %v1993 = vsel %vm786, %v1989, %v1983
        %v1994 = vstv %s1981
        %v1995 = vmul.f32 %v1994, %v1992
        %v1996 = vmul.f32 %v1994, %v1991
        %v1997 = vmul.f32 %v1994, %v1990
        %v1998 = vmul.f32 %v1994, %v1993
        %v1999 = vadd.f32 %v1977, %v1995
        %v2000 = vadd.f32 %v1978, %v1996
        %v2001 = vadd.f32 %v1979, %v1997
        %v2002 = vadd.f32 %v1980, %v1998
        %s2003 = sld [smem:[#allocation4 + $0x46]]
        %2004 = vrot.lane.b32.xlu0 %v1534, 90
        %v2005 = vpop.permute.xlu0 %2004
        %2006 = vrot.lane.b32.xlu0 %v1537, 90
        %v2007 = vpop.permute.xlu0 %2006
        %2008 = vrot.lane.b32.xlu0 %v1540, 90
        %v2009 = vpop.permute.xlu0 %2008
        %2010 = vrot.lane.b32.xlu0 %v1543, 90
        %v2011 = vpop.permute.xlu0 %2010
        %v2012 = vsel %vm809, %v2009, %v2011
        %v2013 = vsel %vm809, %v2007, %v2009
        %v2014 = vsel %vm809, %v2005, %v2007
        %v2015 = vsel %vm809, %v2011, %v2005
        %v2016 = vstv %s2003
        %v2017 = vmul.f32 %v2016, %v2014
        %v2018 = vmul.f32 %v2016, %v2013
        %v2019 = vmul.f32 %v2016, %v2012
        %v2020 = vmul.f32 %v2016, %v2015
        %v2021 = vadd.f32 %v1999, %v2017
        %v2022 = vadd.f32 %v2000, %v2018
        %v2023 = vadd.f32 %v2001, %v2019
        %v2024 = vadd.f32 %v2002, %v2020
        %s2025 = sld [smem:[#allocation4 + $0x47]]
        %2026 = vrot.lane.b32.xlu0 %v1534, 89
        %v2027 = vpop.permute.xlu0 %2026
        %2028 = vrot.lane.b32.xlu0 %v1537, 89
        %v2029 = vpop.permute.xlu0 %2028
        %2030 = vrot.lane.b32.xlu0 %v1540, 89
        %v2031 = vpop.permute.xlu0 %2030
        %2032 = vrot.lane.b32.xlu0 %v1543, 89
        %v2033 = vpop.permute.xlu0 %2032
        %v2034 = vsel %vm832, %v2031, %v2033
        %v2035 = vsel %vm832, %v2029, %v2031
        %v2036 = vsel %vm832, %v2027, %v2029
        %v2037 = vsel %vm832, %v2033, %v2027
        %v2038 = vstv %s2025
        %v2039 = vmul.f32 %v2038, %v2036
        %v2040 = vmul.f32 %v2038, %v2035
        %v2041 = vmul.f32 %v2038, %v2034
        %v2042 = vmul.f32 %v2038, %v2037
        %v2043 = vadd.f32 %v2021, %v2039
        %v2044 = vadd.f32 %v2022, %v2040
        %v2045 = vadd.f32 %v2023, %v2041
        %v2046 = vadd.f32 %v2024, %v2042
        %s2047 = sld [smem:[#allocation4 + $0x48]]
        %2048 = vrot.lane.b32.xlu0 %v1534, 88
        %v2049 = vpop.permute.xlu0 %2048
        %2050 = vrot.lane.b32.xlu0 %v1537, 88
        %v2051 = vpop.permute.xlu0 %2050
        %2052 = vrot.lane.b32.xlu0 %v1540, 88
        %v2053 = vpop.permute.xlu0 %2052
        %2054 = vrot.lane.b32.xlu0 %v1543, 88
        %v2055 = vpop.permute.xlu0 %2054
        %v2056 = vsel %vm855, %v2053, %v2055
        %v2057 = vsel %vm855, %v2051, %v2053
        %v2058 = vsel %vm855, %v2049, %v2051
        %v2059 = vsel %vm855, %v2055, %v2049
        %v2060 = vstv %s2047
        %v2061 = vmul.f32 %v2060, %v2058
        %v2062 = vmul.f32 %v2060, %v2057
        %v2063 = vmul.f32 %v2060, %v2056
        %v2064 = vmul.f32 %v2060, %v2059
        %v2065 = vadd.f32 %v2043, %v2061
        %v2066 = vadd.f32 %v2044, %v2062
        %v2067 = vadd.f32 %v2045, %v2063
        %v2068 = vadd.f32 %v2046, %v2064
        %s2069 = sld [smem:[#allocation4 + $0x49]]
        %2070 = vrot.lane.b32.xlu0 %v1534, 87
        %v2071 = vpop.permute.xlu0 %2070
        %2072 = vrot.lane.b32.xlu0 %v1537, 87
        %v2073 = vpop.permute.xlu0 %2072
        %2074 = vrot.lane.b32.xlu0 %v1540, 87
        %v2075 = vpop.permute.xlu0 %2074
        %2076 = vrot.lane.b32.xlu0 %v1543, 87
        %v2077 = vpop.permute.xlu0 %2076
        %v2078 = vsel %vm878, %v2075, %v2077
        %v2079 = vsel %vm878, %v2073, %v2075
        %v2080 = vsel %vm878, %v2071, %v2073
        %v2081 = vsel %vm878, %v2077, %v2071
        %v2082 = vstv %s2069
        %v2083 = vmul.f32 %v2082, %v2080
        %v2084 = vmul.f32 %v2082, %v2079
        %v2085 = vmul.f32 %v2082, %v2078
        %v2086 = vmul.f32 %v2082, %v2081
        %v2087 = vadd.f32 %v2065, %v2083
        %v2088 = vadd.f32 %v2066, %v2084
        %v2089 = vadd.f32 %v2067, %v2085
        %v2090 = vadd.f32 %v2068, %v2086
        %s2091 = sld [smem:[#allocation4 + $0x4a]]
        %2092 = vrot.lane.b32.xlu0 %v1534, 86
        %v2093 = vpop.permute.xlu0 %2092
        %2094 = vrot.lane.b32.xlu0 %v1537, 86
        %v2095 = vpop.permute.xlu0 %2094
        %2096 = vrot.lane.b32.xlu0 %v1540, 86
        %v2097 = vpop.permute.xlu0 %2096
        %2098 = vrot.lane.b32.xlu0 %v1543, 86
        %v2099 = vpop.permute.xlu0 %2098
        %v2100 = vsel %vm901, %v2097, %v2099
        %v2101 = vsel %vm901, %v2095, %v2097
        %v2102 = vsel %vm901, %v2093, %v2095
        %v2103 = vsel %vm901, %v2099, %v2093
        %v2104 = vstv %s2091
        %v2105 = vmul.f32 %v2104, %v2102
        %v2106 = vmul.f32 %v2104, %v2101
        %v2107 = vmul.f32 %v2104, %v2100
        %v2108 = vmul.f32 %v2104, %v2103
        %v2109 = vadd.f32 %v2087, %v2105
        %v2110 = vadd.f32 %v2088, %v2106
        %v2111 = vadd.f32 %v2089, %v2107
        %v2112 = vadd.f32 %v2090, %v2108
        %v2113 = vld [vmem:[#allocation2] sm:$0xf8]
        %v2114 = vld [vmem:[#allocation2 + $0x8] sm:$0xf8]
        %v2115 = vld [vmem:[#allocation2 + $0x10] sm:$0xf8]
        %v2116 = vld [vmem:[#allocation2 + $0x18] sm:$0xf8]
        %v2117 = vld [vmem:[#allocation2 + $0x20] sm:$0x7]
        %v2118 = vld [vmem:[#allocation2 + $0x28] sm:$0x7]
        %v2119 = vld [vmem:[#allocation2 + $0x30] sm:$0x7]
        %v2120 = vld [vmem:[#allocation2 + $0x38] sm:$0x7]
        %s2121 = sld [smem:[#allocation4 + $0x4b]]
        %vm2130 = vcmask 1044480
        %v2131 = vrot.slane %v2113, 3
        %v2132 = vrot.slane %v2117, 3
        %v2133 = vsel %vm2130, %v2131, %v2132
        %v2134 = vrot.slane %v2114, 3
        %v2135 = vrot.slane %v2118, 3
        %v2136 = vsel %vm2130, %v2134, %v2135
        %v2137 = vrot.slane %v2115, 3
        %v2138 = vrot.slane %v2119, 3
        %v2139 = vsel %vm2130, %v2137, %v2138
        %v2140 = vrot.slane %v2116, 3
        %v2141 = vrot.slane %v2120, 3
        %v2142 = vsel %vm2130, %v2140, %v2141
        %2147 = vrot.lane.b32.xlu0 %v2133, 42
        %v2148 = vpop.permute.xlu0 %2147
        %2149 = vrot.lane.b32.xlu0 %v2136, 42
        %v2150 = vpop.permute.xlu0 %2149
        %2151 = vrot.lane.b32.xlu0 %v2139, 42
        %v2152 = vpop.permute.xlu0 %2151
        %2153 = vrot.lane.b32.xlu0 %v2142, 42
        %v2154 = vpop.permute.xlu0 %2153
        %v2155 = vsel %vm362, %v2152, %v2154
        %v2156 = vsel %vm362, %v2150, %v2152
        %v2157 = vsel %vm362, %v2148, %v2150
        %v2158 = vsel %vm362, %v2154, %v2148
        %v2159 = vstv %s2121
        %v2160 = vmul.f32 %v2159, %v2158
        %v2161 = vmul.f32 %v2159, %v2157
        %v2162 = vmul.f32 %v2159, %v2156
        %v2163 = vmul.f32 %v2159, %v2155
        %v2164 = vadd.f32 %v2109, %v2160
        %v2165 = vadd.f32 %v2110, %v2161
        %v2166 = vadd.f32 %v2111, %v2162
        %v2167 = vadd.f32 %v2112, %v2163
        %s2168 = sld [smem:[#allocation4 + $0x4c]]
        %2169 = vrot.lane.b32.xlu0 %v2133, 41
        %v2170 = vpop.permute.xlu0 %2169
        %2171 = vrot.lane.b32.xlu0 %v2136, 41
        %v2172 = vpop.permute.xlu0 %2171
        %2173 = vrot.lane.b32.xlu0 %v2139, 41
        %v2174 = vpop.permute.xlu0 %2173
        %2175 = vrot.lane.b32.xlu0 %v2142, 41
        %v2176 = vpop.permute.xlu0 %2175
        %v2177 = vsel %vm385, %v2174, %v2176
        %v2178 = vsel %vm385, %v2172, %v2174
        %v2179 = vsel %vm385, %v2170, %v2172
        %v2180 = vsel %vm385, %v2176, %v2170
        %v2181 = vstv %s2168
        %v2182 = vmul.f32 %v2181, %v2180
        %v2183 = vmul.f32 %v2181, %v2179
        %v2184 = vmul.f32 %v2181, %v2178
        %v2185 = vmul.f32 %v2181, %v2177
        %v2186 = vadd.f32 %v2164, %v2182
        %v2187 = vadd.f32 %v2165, %v2183
        %v2188 = vadd.f32 %v2166, %v2184
        %v2189 = vadd.f32 %v2167, %v2185
        %s2190 = sld [smem:[#allocation4 + $0x4d]]
        %2191 = vrot.lane.b32.xlu0 %v2133, 40
        %v2192 = vpop.permute.xlu0 %2191
        %2193 = vrot.lane.b32.xlu0 %v2136, 40
        %v2194 = vpop.permute.xlu0 %2193
        %2195 = vrot.lane.b32.xlu0 %v2139, 40
        %v2196 = vpop.permute.xlu0 %2195
        %2197 = vrot.lane.b32.xlu0 %v2142, 40
        %v2198 = vpop.permute.xlu0 %2197
        %v2199 = vsel %vm408, %v2196, %v2198
        %v2200 = vsel %vm408, %v2194, %v2196
        %v2201 = vsel %vm408, %v2192, %v2194
        %v2202 = vsel %vm408, %v2198, %v2192
        %v2203 = vstv %s2190
        %v2204 = vmul.f32 %v2203, %v2202
        %v2205 = vmul.f32 %v2203, %v2201
        %v2206 = vmul.f32 %v2203, %v2200
        %v2207 = vmul.f32 %v2203, %v2199
        %v2208 = vadd.f32 %v2186, %v2204
        %v2209 = vadd.f32 %v2187, %v2205
        %v2210 = vadd.f32 %v2188, %v2206
        %v2211 = vadd.f32 %v2189, %v2207
        %s2212 = sld [smem:[#allocation4 + $0x4e]]
        %2213 = vrot.lane.b32.xlu0 %v2133, 39
        %v2214 = vpop.permute.xlu0 %2213
        %2215 = vrot.lane.b32.xlu0 %v2136, 39
        %v2216 = vpop.permute.xlu0 %2215
        %2217 = vrot.lane.b32.xlu0 %v2139, 39
        %v2218 = vpop.permute.xlu0 %2217
        %2219 = vrot.lane.b32.xlu0 %v2142, 39
        %v2220 = vpop.permute.xlu0 %2219
        %v2221 = vsel %vm431, %v2218, %v2220
        %v2222 = vsel %vm431, %v2216, %v2218
        %v2223 = vsel %vm431, %v2214, %v2216
        %v2224 = vsel %vm431, %v2220, %v2214
        %v2225 = vstv %s2212
        %v2226 = vmul.f32 %v2225, %v2224
        %v2227 = vmul.f32 %v2225, %v2223
        %v2228 = vmul.f32 %v2225, %v2222
        %v2229 = vmul.f32 %v2225, %v2221
        %v2230 = vadd.f32 %v2208, %v2226
        %v2231 = vadd.f32 %v2209, %v2227
        %v2232 = vadd.f32 %v2210, %v2228
        %v2233 = vadd.f32 %v2211, %v2229
        %s2234 = sld [smem:[#allocation4 + $0x4f]]
        %2235 = vrot.lane.b32.xlu0 %v2133, 38
        %v2236 = vpop.permute.xlu0 %2235
        %2237 = vrot.lane.b32.xlu0 %v2136, 38
        %v2238 = vpop.permute.xlu0 %2237
        %2239 = vrot.lane.b32.xlu0 %v2139, 38
        %v2240 = vpop.permute.xlu0 %2239
        %2241 = vrot.lane.b32.xlu0 %v2142, 38
        %v2242 = vpop.permute.xlu0 %2241
        %v2243 = vsel %vm454, %v2240, %v2242
        %v2244 = vsel %vm454, %v2238, %v2240
        %v2245 = vsel %vm454, %v2236, %v2238
        %v2246 = vsel %vm454, %v2242, %v2236
        %v2247 = vstv %s2234
        %v2248 = vmul.f32 %v2247, %v2246
        %v2249 = vmul.f32 %v2247, %v2245
        %v2250 = vmul.f32 %v2247, %v2244
        %v2251 = vmul.f32 %v2247, %v2243
        %v2252 = vadd.f32 %v2230, %v2248
        %v2253 = vadd.f32 %v2231, %v2249
        %v2254 = vadd.f32 %v2232, %v2250
        %v2255 = vadd.f32 %v2233, %v2251
        %s2256 = sld [smem:[#allocation4 + $0x50]]
        %2257 = vrot.lane.b32.xlu0 %v2133, 22
        %v2258 = vpop.permute.xlu0 %2257
        %2259 = vrot.lane.b32.xlu0 %v2136, 22
        %v2260 = vpop.permute.xlu0 %2259
        %2261 = vrot.lane.b32.xlu0 %v2139, 22
        %v2262 = vpop.permute.xlu0 %2261
        %2263 = vrot.lane.b32.xlu0 %v2142, 22
        %v2264 = vpop.permute.xlu0 %2263
        %v2265 = vsel %vm477, %v2262, %v2264
        %v2266 = vsel %vm477, %v2260, %v2262
        %v2267 = vsel %vm477, %v2258, %v2260
        %v2268 = vsel %vm477, %v2264, %v2258
        %v2269 = vstv %s2256
        %v2270 = vmul.f32 %v2269, %v2268
        %v2271 = vmul.f32 %v2269, %v2267
        %v2272 = vmul.f32 %v2269, %v2266
        %v2273 = vmul.f32 %v2269, %v2265
        %v2274 = vadd.f32 %v2252, %v2270
        %v2275 = vadd.f32 %v2253, %v2271
        %v2276 = vadd.f32 %v2254, %v2272
        %v2277 = vadd.f32 %v2255, %v2273
        %s2278 = sld [smem:[#allocation4 + $0x51]]
        %2279 = vrot.lane.b32.xlu0 %v2133, 21
        %v2280 = vpop.permute.xlu0 %2279
        %2281 = vrot.lane.b32.xlu0 %v2136, 21
        %v2282 = vpop.permute.xlu0 %2281
        %2283 = vrot.lane.b32.xlu0 %v2139, 21
        %v2284 = vpop.permute.xlu0 %2283
        %2285 = vrot.lane.b32.xlu0 %v2142, 21
        %v2286 = vpop.permute.xlu0 %2285
        %v2287 = vsel %vm500, %v2284, %v2286
        %v2288 = vsel %vm500, %v2282, %v2284
        %v2289 = vsel %vm500, %v2280, %v2282
        %v2290 = vsel %vm500, %v2286, %v2280
        %v2291 = vstv %s2278
        %v2292 = vmul.f32 %v2291, %v2290
        %v2293 = vmul.f32 %v2291, %v2289
        %v2294 = vmul.f32 %v2291, %v2288
        %v2295 = vmul.f32 %v2291, %v2287
        %v2296 = vadd.f32 %v2274, %v2292
        %v2297 = vadd.f32 %v2275, %v2293
        %v2298 = vadd.f32 %v2276, %v2294
        %v2299 = vadd.f32 %v2277, %v2295
        %s2300 = sld [smem:[#allocation4 + $0x52]]
        %2301 = vrot.lane.b32.xlu0 %v2133, 20
        %v2302 = vpop.permute.xlu0 %2301
        %2303 = vrot.lane.b32.xlu0 %v2136, 20
        %v2304 = vpop.permute.xlu0 %2303
        %2305 = vrot.lane.b32.xlu0 %v2139, 20
        %v2306 = vpop.permute.xlu0 %2305
        %2307 = vrot.lane.b32.xlu0 %v2142, 20
        %v2308 = vpop.permute.xlu0 %2307
        %v2309 = vsel %vm523, %v2306, %v2308
        %v2310 = vsel %vm523, %v2304, %v2306
        %v2311 = vsel %vm523, %v2302, %v2304
        %v2312 = vsel %vm523, %v2308, %v2302
        %v2313 = vstv %s2300
        %v2314 = vmul.f32 %v2313, %v2312
        %v2315 = vmul.f32 %v2313, %v2311
        %v2316 = vmul.f32 %v2313, %v2310
        %v2317 = vmul.f32 %v2313, %v2309
        %v2318 = vadd.f32 %v2296, %v2314
        %v2319 = vadd.f32 %v2297, %v2315
        %v2320 = vadd.f32 %v2298, %v2316
        %v2321 = vadd.f32 %v2299, %v2317
        %s2322 = sld [smem:[#allocation4 + $0x53]]
        %2323 = vrot.lane.b32.xlu0 %v2133, 19
        %v2324 = vpop.permute.xlu0 %2323
        %2325 = vrot.lane.b32.xlu0 %v2136, 19
        %v2326 = vpop.permute.xlu0 %2325
        %2327 = vrot.lane.b32.xlu0 %v2139, 19
        %v2328 = vpop.permute.xlu0 %2327
        %2329 = vrot.lane.b32.xlu0 %v2142, 19
        %v2330 = vpop.permute.xlu0 %2329
        %v2331 = vsel %vm546, %v2328, %v2330
        %v2332 = vsel %vm546, %v2326, %v2328
        %v2333 = vsel %vm546, %v2324, %v2326
        %v2334 = vsel %vm546, %v2330, %v2324
        %v2335 = vstv %s2322
        %v2336 = vmul.f32 %v2335, %v2334
        %v2337 = vmul.f32 %v2335, %v2333
        %v2338 = vmul.f32 %v2335, %v2332
        %v2339 = vmul.f32 %v2335, %v2331
        %v2340 = vadd.f32 %v2318, %v2336
        %v2341 = vadd.f32 %v2319, %v2337
        %v2342 = vadd.f32 %v2320, %v2338
        %v2343 = vadd.f32 %v2321, %v2339
        %s2344 = sld [smem:[#allocation4 + $0x54]]
        %2345 = vrot.lane.b32.xlu0 %v2133, 18
        %v2346 = vpop.permute.xlu0 %2345
        %2347 = vrot.lane.b32.xlu0 %v2136, 18
        %v2348 = vpop.permute.xlu0 %2347
        %2349 = vrot.lane.b32.xlu0 %v2139, 18
        %v2350 = vpop.permute.xlu0 %2349
        %2351 = vrot.lane.b32.xlu0 %v2142, 18
        %v2352 = vpop.permute.xlu0 %2351
        %v2353 = vsel %vm569, %v2350, %v2352
        %v2354 = vsel %vm569, %v2348, %v2350
        %v2355 = vsel %vm569, %v2346, %v2348
        %v2356 = vsel %vm569, %v2352, %v2346
        %v2357 = vstv %s2344
        %v2358 = vmul.f32 %v2357, %v2356
        %v2359 = vmul.f32 %v2357, %v2355
        %v2360 = vmul.f32 %v2357, %v2354
        %v2361 = vmul.f32 %v2357, %v2353
        %v2362 = vadd.f32 %v2340, %v2358
        %v2363 = vadd.f32 %v2341, %v2359
        %v2364 = vadd.f32 %v2342, %v2360
        %v2365 = vadd.f32 %v2343, %v2361
        %s2366 = sld [smem:[#allocation4 + $0x55]]
        %2367 = vrot.lane.b32.xlu0 %v2133, 2
        %v2368 = vpop.permute.xlu0 %2367
        %2369 = vrot.lane.b32.xlu0 %v2136, 2
        %v2370 = vpop.permute.xlu0 %2369
        %2371 = vrot.lane.b32.xlu0 %v2139, 2
        %v2372 = vpop.permute.xlu0 %2371
        %2373 = vrot.lane.b32.xlu0 %v2142, 2
        %v2374 = vpop.permute.xlu0 %2373
        %v2375 = vsel %vm592, %v2372, %v2374
        %v2376 = vsel %vm592, %v2370, %v2372
        %v2377 = vsel %vm592, %v2368, %v2370
        %v2378 = vsel %vm592, %v2374, %v2368
        %v2379 = vstv %s2366
        %v2380 = vmul.f32 %v2379, %v2378
        %v2381 = vmul.f32 %v2379, %v2377
        %v2382 = vmul.f32 %v2379, %v2376
        %v2383 = vmul.f32 %v2379, %v2375
        %v2384 = vadd.f32 %v2362, %v2380
        %v2385 = vadd.f32 %v2363, %v2381
        %v2386 = vadd.f32 %v2364, %v2382
        %v2387 = vadd.f32 %v2365, %v2383
        %s2388 = sld [smem:[#allocation4 + $0x56]]
        %2389 = vrot.lane.b32.xlu0 %v2133, 1
        %v2390 = vpop.permute.xlu0 %2389
        %2391 = vrot.lane.b32.xlu0 %v2136, 1
        %v2392 = vpop.permute.xlu0 %2391
        %2393 = vrot.lane.b32.xlu0 %v2139, 1
        %v2394 = vpop.permute.xlu0 %2393
        %2395 = vrot.lane.b32.xlu0 %v2142, 1
        %v2396 = vpop.permute.xlu0 %2395
        %v2397 = vsel %vm615, %v2394, %v2396
        %v2398 = vsel %vm615, %v2392, %v2394
        %v2399 = vsel %vm615, %v2390, %v2392
        %v2400 = vsel %vm615, %v2396, %v2390
        %v2401 = vstv %s2388
        %v2402 = vmul.f32 %v2401, %v2400
        %v2403 = vmul.f32 %v2401, %v2399
        %v2404 = vmul.f32 %v2401, %v2398
        %v2405 = vmul.f32 %v2401, %v2397
        %v2406 = vadd.f32 %v2384, %v2402
        %v2407 = vadd.f32 %v2385, %v2403
        %v2408 = vadd.f32 %v2386, %v2404
        %v2409 = vadd.f32 %v2387, %v2405
        %s2410 = sld [smem:[#allocation4 + $0x57]]
        %v2411 = vstv %s2410
        %v2412 = vmul.f32 %v2411, %v2113
        %v2413 = vmul.f32 %v2411, %v2114
        %v2414 = vmul.f32 %v2411, %v2115
        %v2415 = vmul.f32 %v2411, %v2116
        %v2416 = vmul.f32 %v2411, %v2117
        %v2417 = vmul.f32 %v2411, %v2118
        %v2418 = vmul.f32 %v2411, %v2119
        %v2419 = vmul.f32 %v2411, %v2120
        %v2428 = vrot.slane %v2412, 3
        %v2429 = vrot.slane %v2416, 3
        %v2430 = vsel %vm2130, %v2428, %v2429
        %v2431 = vrot.slane %v2413, 3
        %v2432 = vrot.slane %v2417, 3
        %v2433 = vsel %vm2130, %v2431, %v2432
        %v2434 = vrot.slane %v2414, 3
        %v2435 = vrot.slane %v2418, 3
        %v2436 = vsel %vm2130, %v2434, %v2435
        %v2437 = vrot.slane %v2415, 3
        %v2438 = vrot.slane %v2419, 3
        %v2439 = vsel %vm2130, %v2437, %v2438
        %v2444 = vadd.f32 %v2406, %v2430
        %v2445 = vadd.f32 %v2407, %v2433
        %v2446 = vadd.f32 %v2408, %v2436
        %v2447 = vadd.f32 %v2409, %v2439
        %s2448 = sld [smem:[#allocation4 + $0x58]]
        %2449 = vrot.lane.b32.xlu0 %v2133, 127
        %v2450 = vpop.permute.xlu0 %2449
        %2451 = vrot.lane.b32.xlu0 %v2136, 127
        %v2452 = vpop.permute.xlu0 %2451
        %2453 = vrot.lane.b32.xlu0 %v2139, 127
        %v2454 = vpop.permute.xlu0 %2453
        %2455 = vrot.lane.b32.xlu0 %v2142, 127
        %v2456 = vpop.permute.xlu0 %2455
        %v2457 = vsel %vm648, %v2454, %v2456
        %v2458 = vsel %vm648, %v2452, %v2454
        %v2459 = vsel %vm648, %v2450, %v2452
        %v2460 = vsel %vm648, %v2456, %v2450
        %v2461 = vstv %s2448
        %v2462 = vmul.f32 %v2461, %v2459
        %v2463 = vmul.f32 %v2461, %v2458
        %v2464 = vmul.f32 %v2461, %v2457
        %v2465 = vmul.f32 %v2461, %v2460
        %v2466 = vadd.f32 %v2444, %v2462
        %v2467 = vadd.f32 %v2445, %v2463
        %v2468 = vadd.f32 %v2446, %v2464
        %v2469 = vadd.f32 %v2447, %v2465
        %s2470 = sld [smem:[#allocation4 + $0x59]]
        %2471 = vrot.lane.b32.xlu0 %v2133, 126
        %v2472 = vpop.permute.xlu0 %2471
        %2473 = vrot.lane.b32.xlu0 %v2136, 126
        %v2474 = vpop.permute.xlu0 %2473
        %2475 = vrot.lane.b32.xlu0 %v2139, 126
        %v2476 = vpop.permute.xlu0 %2475
        %2477 = vrot.lane.b32.xlu0 %v2142, 126
        %v2478 = vpop.permute.xlu0 %2477
        %v2479 = vsel %vm671, %v2476, %v2478
        %v2480 = vsel %vm671, %v2474, %v2476
        %v2481 = vsel %vm671, %v2472, %v2474
        %v2482 = vsel %vm671, %v2478, %v2472
        %v2483 = vstv %s2470
        %v2484 = vmul.f32 %v2483, %v2481
        %v2485 = vmul.f32 %v2483, %v2480
        %v2486 = vmul.f32 %v2483, %v2479
        %v2487 = vmul.f32 %v2483, %v2482
        %v2488 = vadd.f32 %v2466, %v2484
        %v2489 = vadd.f32 %v2467, %v2485
        %v2490 = vadd.f32 %v2468, %v2486
        %v2491 = vadd.f32 %v2469, %v2487
        %s2492 = sld [smem:[#allocation4 + $0x5a]]
        %2493 = vrot.lane.b32.xlu0 %v2133, 110
        %v2494 = vpop.permute.xlu0 %2493
        %2495 = vrot.lane.b32.xlu0 %v2136, 110
        %v2496 = vpop.permute.xlu0 %2495
        %2497 = vrot.lane.b32.xlu0 %v2139, 110
        %v2498 = vpop.permute.xlu0 %2497
        %2499 = vrot.lane.b32.xlu0 %v2142, 110
        %v2500 = vpop.permute.xlu0 %2499
        %v2501 = vsel %vm694, %v2498, %v2500
        %v2502 = vsel %vm694, %v2496, %v2498
        %v2503 = vsel %vm694, %v2494, %v2496
        %v2504 = vsel %vm694, %v2500, %v2494
        %v2505 = vstv %s2492
        %v2506 = vmul.f32 %v2505, %v2503
        %v2507 = vmul.f32 %v2505, %v2502
        %v2508 = vmul.f32 %v2505, %v2501
        %v2509 = vmul.f32 %v2505, %v2504
        %v2510 = vadd.f32 %v2488, %v2506
        %v2511 = vadd.f32 %v2489, %v2507
        %v2512 = vadd.f32 %v2490, %v2508
        %v2513 = vadd.f32 %v2491, %v2509
        %s2514 = sld [smem:[#allocation4 + $0x5b]]
        %2515 = vrot.lane.b32.xlu0 %v2133, 109
        %v2516 = vpop.permute.xlu0 %2515
        %2517 = vrot.lane.b32.xlu0 %v2136, 109
        %v2518 = vpop.permute.xlu0 %2517
        %2519 = vrot.lane.b32.xlu0 %v2139, 109
        %v2520 = vpop.permute.xlu0 %2519
        %2521 = vrot.lane.b32.xlu0 %v2142, 109
        %v2522 = vpop.permute.xlu0 %2521
        %v2523 = vsel %vm717, %v2520, %v2522
        %v2524 = vsel %vm717, %v2518, %v2520
        %v2525 = vsel %vm717, %v2516, %v2518
        %v2526 = vsel %vm717, %v2522, %v2516
        %v2527 = vstv %s2514
        %v2528 = vmul.f32 %v2527, %v2525
        %v2529 = vmul.f32 %v2527, %v2524
        %v2530 = vmul.f32 %v2527, %v2523
        %v2531 = vmul.f32 %v2527, %v2526
        %v2532 = vadd.f32 %v2510, %v2528
        %v2533 = vadd.f32 %v2511, %v2529
        %v2534 = vadd.f32 %v2512, %v2530
        %v2535 = vadd.f32 %v2513, %v2531
        %s2536 = sld [smem:[#allocation4 + $0x5c]]
        %2537 = vrot.lane.b32.xlu0 %v2133, 108
        %v2538 = vpop.permute.xlu0 %2537
        %2539 = vrot.lane.b32.xlu0 %v2136, 108
        %v2540 = vpop.permute.xlu0 %2539
        %2541 = vrot.lane.b32.xlu0 %v2139, 108
        %v2542 = vpop.permute.xlu0 %2541
        %2543 = vrot.lane.b32.xlu0 %v2142, 108
        %v2544 = vpop.permute.xlu0 %2543
        %v2545 = vsel %vm740, %v2542, %v2544
        %v2546 = vsel %vm740, %v2540, %v2542
        %v2547 = vsel %vm740, %v2538, %v2540
        %v2548 = vsel %vm740, %v2544, %v2538
        %v2549 = vstv %s2536
        %v2550 = vmul.f32 %v2549, %v2547
        %v2551 = vmul.f32 %v2549, %v2546
        %v2552 = vmul.f32 %v2549, %v2545
        %v2553 = vmul.f32 %v2549, %v2548
        %v2554 = vadd.f32 %v2532, %v2550
        %v2555 = vadd.f32 %v2533, %v2551
        %v2556 = vadd.f32 %v2534, %v2552
        %v2557 = vadd.f32 %v2535, %v2553
        %s2558 = sld [smem:[#allocation4 + $0x5d]]
        %2559 = vrot.lane.b32.xlu0 %v2133, 107
        %v2560 = vpop.permute.xlu0 %2559
        %2561 = vrot.lane.b32.xlu0 %v2136, 107
        %v2562 = vpop.permute.xlu0 %2561
        %2563 = vrot.lane.b32.xlu0 %v2139, 107
        %v2564 = vpop.permute.xlu0 %2563
        %2565 = vrot.lane.b32.xlu0 %v2142, 107
        %v2566 = vpop.permute.xlu0 %2565
        %v2567 = vsel %vm763, %v2564, %v2566
        %v2568 = vsel %vm763, %v2562, %v2564
        %v2569 = vsel %vm763, %v2560, %v2562
        %v2570 = vsel %vm763, %v2566, %v2560
        %v2571 = vstv %s2558
        %v2572 = vmul.f32 %v2571, %v2569
        %v2573 = vmul.f32 %v2571, %v2568
        %v2574 = vmul.f32 %v2571, %v2567
        %v2575 = vmul.f32 %v2571, %v2570
        %v2576 = vadd.f32 %v2554, %v2572
        %v2577 = vadd.f32 %v2555, %v2573
        %v2578 = vadd.f32 %v2556, %v2574
        %v2579 = vadd.f32 %v2557, %v2575
        %s2580 = sld [smem:[#allocation4 + $0x5e]]
        %2581 = vrot.lane.b32.xlu0 %v2133, 106
        %v2582 = vpop.permute.xlu0 %2581
        %2583 = vrot.lane.b32.xlu0 %v2136, 106
        %v2584 = vpop.permute.xlu0 %2583
        %2585 = vrot.lane.b32.xlu0 %v2139, 106
        %v2586 = vpop.permute.xlu0 %2585
        %2587 = vrot.lane.b32.xlu0 %v2142, 106
        %v2588 = vpop.permute.xlu0 %2587
        %v2589 = vsel %vm786, %v2586, %v2588
        %v2590 = vsel %vm786, %v2584, %v2586
        %v2591 = vsel %vm786, %v2582, %v2584
        %v2592 = vsel %vm786, %v2588, %v2582
        %v2593 = vstv %s2580
        %v2594 = vmul.f32 %v2593, %v2591
        %v2595 = vmul.f32 %v2593, %v2590
        %v2596 = vmul.f32 %v2593, %v2589
        %v2597 = vmul.f32 %v2593, %v2592
        %v2598 = vadd.f32 %v2576, %v2594
        %v2599 = vadd.f32 %v2577, %v2595
        %v2600 = vadd.f32 %v2578, %v2596
        %v2601 = vadd.f32 %v2579, %v2597
        %s2602 = sld [smem:[#allocation4 + $0x5f]]
        %2603 = vrot.lane.b32.xlu0 %v2133, 90
        %v2604 = vpop.permute.xlu0 %2603
        %2605 = vrot.lane.b32.xlu0 %v2136, 90
        %v2606 = vpop.permute.xlu0 %2605
        %2607 = vrot.lane.b32.xlu0 %v2139, 90
        %v2608 = vpop.permute.xlu0 %2607
        %2609 = vrot.lane.b32.xlu0 %v2142, 90
        %v2610 = vpop.permute.xlu0 %2609
        %v2611 = vsel %vm809, %v2608, %v2610
        %v2612 = vsel %vm809, %v2606, %v2608
        %v2613 = vsel %vm809, %v2604, %v2606
        %v2614 = vsel %vm809, %v2610, %v2604
        %v2615 = vstv %s2602
        %v2616 = vmul.f32 %v2615, %v2613
        %v2617 = vmul.f32 %v2615, %v2612
        %v2618 = vmul.f32 %v2615, %v2611
        %v2619 = vmul.f32 %v2615, %v2614
        %v2620 = vadd.f32 %v2598, %v2616
        %v2621 = vadd.f32 %v2599, %v2617
        %v2622 = vadd.f32 %v2600, %v2618
        %v2623 = vadd.f32 %v2601, %v2619
        %s2624 = sld [smem:[#allocation4 + $0x60]]
        %2625 = vrot.lane.b32.xlu0 %v2133, 89
        %v2626 = vpop.permute.xlu0 %2625
        %2627 = vrot.lane.b32.xlu0 %v2136, 89
        %v2628 = vpop.permute.xlu0 %2627
        %2629 = vrot.lane.b32.xlu0 %v2139, 89
        %v2630 = vpop.permute.xlu0 %2629
        %2631 = vrot.lane.b32.xlu0 %v2142, 89
        %v2632 = vpop.permute.xlu0 %2631
        %v2633 = vsel %vm832, %v2630, %v2632
        %v2634 = vsel %vm832, %v2628, %v2630
        %v2635 = vsel %vm832, %v2626, %v2628
        %v2636 = vsel %vm832, %v2632, %v2626
        %v2637 = vstv %s2624
        %v2638 = vmul.f32 %v2637, %v2635
        %v2639 = vmul.f32 %v2637, %v2634
        %v2640 = vmul.f32 %v2637, %v2633
        %v2641 = vmul.f32 %v2637, %v2636
        %v2642 = vadd.f32 %v2620, %v2638
        %v2643 = vadd.f32 %v2621, %v2639
        %v2644 = vadd.f32 %v2622, %v2640
        %v2645 = vadd.f32 %v2623, %v2641
        %s2646 = sld [smem:[#allocation4 + $0x61]]
        %2647 = vrot.lane.b32.xlu0 %v2133, 88
        %v2648 = vpop.permute.xlu0 %2647
        %2649 = vrot.lane.b32.xlu0 %v2136, 88
        %v2650 = vpop.permute.xlu0 %2649
        %2651 = vrot.lane.b32.xlu0 %v2139, 88
        %v2652 = vpop.permute.xlu0 %2651
        %2653 = vrot.lane.b32.xlu0 %v2142, 88
        %v2654 = vpop.permute.xlu0 %2653
        %v2655 = vsel %vm855, %v2652, %v2654
        %v2656 = vsel %vm855, %v2650, %v2652
        %v2657 = vsel %vm855, %v2648, %v2650
        %v2658 = vsel %vm855, %v2654, %v2648
        %v2659 = vstv %s2646
        %v2660 = vmul.f32 %v2659, %v2657
        %v2661 = vmul.f32 %v2659, %v2656
        %v2662 = vmul.f32 %v2659, %v2655
        %v2663 = vmul.f32 %v2659, %v2658
        %v2664 = vadd.f32 %v2642, %v2660
        %v2665 = vadd.f32 %v2643, %v2661
        %v2666 = vadd.f32 %v2644, %v2662
        %v2667 = vadd.f32 %v2645, %v2663
        %s2668 = sld [smem:[#allocation4 + $0x62]]
        %2669 = vrot.lane.b32.xlu0 %v2133, 87
        %v2670 = vpop.permute.xlu0 %2669
        %2671 = vrot.lane.b32.xlu0 %v2136, 87
        %v2672 = vpop.permute.xlu0 %2671
        %2673 = vrot.lane.b32.xlu0 %v2139, 87
        %v2674 = vpop.permute.xlu0 %2673
        %2675 = vrot.lane.b32.xlu0 %v2142, 87
        %v2676 = vpop.permute.xlu0 %2675
        %v2677 = vsel %vm878, %v2674, %v2676
        %v2678 = vsel %vm878, %v2672, %v2674
        %v2679 = vsel %vm878, %v2670, %v2672
        %v2680 = vsel %vm878, %v2676, %v2670
        %v2681 = vstv %s2668
        %v2682 = vmul.f32 %v2681, %v2679
        %v2683 = vmul.f32 %v2681, %v2678
        %v2684 = vmul.f32 %v2681, %v2677
        %v2685 = vmul.f32 %v2681, %v2680
        %v2686 = vadd.f32 %v2664, %v2682
        %v2687 = vadd.f32 %v2665, %v2683
        %v2688 = vadd.f32 %v2666, %v2684
        %v2689 = vadd.f32 %v2667, %v2685
        %s2690 = sld [smem:[#allocation4 + $0x63]]
        %2691 = vrot.lane.b32.xlu0 %v2133, 86
        %v2692 = vpop.permute.xlu0 %2691
        %2693 = vrot.lane.b32.xlu0 %v2136, 86
        %v2694 = vpop.permute.xlu0 %2693
        %2695 = vrot.lane.b32.xlu0 %v2139, 86
        %v2696 = vpop.permute.xlu0 %2695
        %2697 = vrot.lane.b32.xlu0 %v2142, 86
        %v2698 = vpop.permute.xlu0 %2697
        %v2699 = vsel %vm901, %v2696, %v2698
        %v2700 = vsel %vm901, %v2694, %v2696
        %v2701 = vsel %vm901, %v2692, %v2694
        %v2702 = vsel %vm901, %v2698, %v2692
        %v2703 = vstv %s2690
        %v2704 = vmul.f32 %v2703, %v2701
        %v2705 = vmul.f32 %v2703, %v2700
        %v2706 = vmul.f32 %v2703, %v2699
        %v2707 = vmul.f32 %v2703, %v2702
        %v2708 = vadd.f32 %v2686, %v2704
        %v2709 = vadd.f32 %v2687, %v2705
        %v2710 = vadd.f32 %v2688, %v2706
        %v2711 = vadd.f32 %v2689, %v2707
        %v2712 = vld [vmem:[#allocation2] sm:$0xf0]
        %v2713 = vld [vmem:[#allocation2 + $0x8] sm:$0xf0]
        %v2714 = vld [vmem:[#allocation2 + $0x10] sm:$0xf0]
        %v2715 = vld [vmem:[#allocation2 + $0x18] sm:$0xf0]
        %v2716 = vld [vmem:[#allocation2 + $0x20] sm:$0xf]
        %v2717 = vld [vmem:[#allocation2 + $0x28] sm:$0xf]
        %v2718 = vld [vmem:[#allocation2 + $0x30] sm:$0xf]
        %v2719 = vld [vmem:[#allocation2 + $0x38] sm:$0xf]
        %s2720 = sld [smem:[#allocation4 + $0x64]]
        %vm2729 = vcmask 1043456
        %v2730 = vrot.slane %v2712, 4
        %v2731 = vrot.slane %v2716, 4
        %v2732 = vsel %vm2729, %v2730, %v2731
        %v2733 = vrot.slane %v2713, 4
        %v2734 = vrot.slane %v2717, 4
        %v2735 = vsel %vm2729, %v2733, %v2734
        %v2736 = vrot.slane %v2714, 4
        %v2737 = vrot.slane %v2718, 4
        %v2738 = vsel %vm2729, %v2736, %v2737
        %v2739 = vrot.slane %v2715, 4
        %v2740 = vrot.slane %v2719, 4
        %v2741 = vsel %vm2729, %v2739, %v2740
        %2746 = vrot.lane.b32.xlu0 %v2732, 42
        %v2747 = vpop.permute.xlu0 %2746
        %2748 = vrot.lane.b32.xlu0 %v2735, 42
        %v2749 = vpop.permute.xlu0 %2748
        %2750 = vrot.lane.b32.xlu0 %v2738, 42
        %v2751 = vpop.permute.xlu0 %2750
        %2752 = vrot.lane.b32.xlu0 %v2741, 42
        %v2753 = vpop.permute.xlu0 %2752
        %v2754 = vsel %vm362, %v2751, %v2753
        %v2755 = vsel %vm362, %v2749, %v2751
        %v2756 = vsel %vm362, %v2747, %v2749
        %v2757 = vsel %vm362, %v2753, %v2747
        %v2758 = vstv %s2720
        %v2759 = vmul.f32 %v2758, %v2757
        %v2760 = vmul.f32 %v2758, %v2756
        %v2761 = vmul.f32 %v2758, %v2755
        %v2762 = vmul.f32 %v2758, %v2754
        %v2763 = vadd.f32 %v2708, %v2759
        %v2764 = vadd.f32 %v2709, %v2760
        %v2765 = vadd.f32 %v2710, %v2761
        %v2766 = vadd.f32 %v2711, %v2762
        %s2767 = sld [smem:[#allocation4 + $0x65]]
        %2768 = vrot.lane.b32.xlu0 %v2732, 41
        %v2769 = vpop.permute.xlu0 %2768
        %2770 = vrot.lane.b32.xlu0 %v2735, 41
        %v2771 = vpop.permute.xlu0 %2770
        %2772 = vrot.lane.b32.xlu0 %v2738, 41
        %v2773 = vpop.permute.xlu0 %2772
        %2774 = vrot.lane.b32.xlu0 %v2741, 41
        %v2775 = vpop.permute.xlu0 %2774
        %v2776 = vsel %vm385, %v2773, %v2775
        %v2777 = vsel %vm385, %v2771, %v2773
        %v2778 = vsel %vm385, %v2769, %v2771
        %v2779 = vsel %vm385, %v2775, %v2769
        %v2780 = vstv %s2767
        %v2781 = vmul.f32 %v2780, %v2779
        %v2782 = vmul.f32 %v2780, %v2778
        %v2783 = vmul.f32 %v2780, %v2777
        %v2784 = vmul.f32 %v2780, %v2776
        %v2785 = vadd.f32 %v2763, %v2781
        %v2786 = vadd.f32 %v2764, %v2782
        %v2787 = vadd.f32 %v2765, %v2783
        %v2788 = vadd.f32 %v2766, %v2784
        %s2789 = sld [smem:[#allocation4 + $0x66]]
        %2790 = vrot.lane.b32.xlu0 %v2732, 40
        %v2791 = vpop.permute.xlu0 %2790
        %2792 = vrot.lane.b32.xlu0 %v2735, 40
        %v2793 = vpop.permute.xlu0 %2792
        %2794 = vrot.lane.b32.xlu0 %v2738, 40
        %v2795 = vpop.permute.xlu0 %2794
        %2796 = vrot.lane.b32.xlu0 %v2741, 40
        %v2797 = vpop.permute.xlu0 %2796
        %v2798 = vsel %vm408, %v2795, %v2797
        %v2799 = vsel %vm408, %v2793, %v2795
        %v2800 = vsel %vm408, %v2791, %v2793
        %v2801 = vsel %vm408, %v2797, %v2791
        %v2802 = vstv %s2789
        %v2803 = vmul.f32 %v2802, %v2801
        %v2804 = vmul.f32 %v2802, %v2800
        %v2805 = vmul.f32 %v2802, %v2799
        %v2806 = vmul.f32 %v2802, %v2798
        %v2807 = vadd.f32 %v2785, %v2803
        %v2808 = vadd.f32 %v2786, %v2804
        %v2809 = vadd.f32 %v2787, %v2805
        %v2810 = vadd.f32 %v2788, %v2806
        %s2811 = sld [smem:[#allocation4 + $0x67]]
        %2812 = vrot.lane.b32.xlu0 %v2732, 39
        %v2813 = vpop.permute.xlu0 %2812
        %2814 = vrot.lane.b32.xlu0 %v2735, 39
        %v2815 = vpop.permute.xlu0 %2814
        %2816 = vrot.lane.b32.xlu0 %v2738, 39
        %v2817 = vpop.permute.xlu0 %2816
        %2818 = vrot.lane.b32.xlu0 %v2741, 39
        %v2819 = vpop.permute.xlu0 %2818
        %v2820 = vsel %vm431, %v2817, %v2819
        %v2821 = vsel %vm431, %v2815, %v2817
        %v2822 = vsel %vm431, %v2813, %v2815
        %v2823 = vsel %vm431, %v2819, %v2813
        %v2824 = vstv %s2811
        %v2825 = vmul.f32 %v2824, %v2823
        %v2826 = vmul.f32 %v2824, %v2822
        %v2827 = vmul.f32 %v2824, %v2821
        %v2828 = vmul.f32 %v2824, %v2820
        %v2829 = vadd.f32 %v2807, %v2825
        %v2830 = vadd.f32 %v2808, %v2826
        %v2831 = vadd.f32 %v2809, %v2827
        %v2832 = vadd.f32 %v2810, %v2828
        %s2833 = sld [smem:[#allocation4 + $0x68]]
        %2834 = vrot.lane.b32.xlu0 %v2732, 38
        %v2835 = vpop.permute.xlu0 %2834
        %2836 = vrot.lane.b32.xlu0 %v2735, 38
        %v2837 = vpop.permute.xlu0 %2836
        %2838 = vrot.lane.b32.xlu0 %v2738, 38
        %v2839 = vpop.permute.xlu0 %2838
        %2840 = vrot.lane.b32.xlu0 %v2741, 38
        %v2841 = vpop.permute.xlu0 %2840
        %v2842 = vsel %vm454, %v2839, %v2841
        %v2843 = vsel %vm454, %v2837, %v2839
        %v2844 = vsel %vm454, %v2835, %v2837
        %v2845 = vsel %vm454, %v2841, %v2835
        %v2846 = vstv %s2833
        %v2847 = vmul.f32 %v2846, %v2845
        %v2848 = vmul.f32 %v2846, %v2844
        %v2849 = vmul.f32 %v2846, %v2843
        %v2850 = vmul.f32 %v2846, %v2842
        %v2851 = vadd.f32 %v2829, %v2847
        %v2852 = vadd.f32 %v2830, %v2848
        %v2853 = vadd.f32 %v2831, %v2849
        %v2854 = vadd.f32 %v2832, %v2850
        %s2855 = sld [smem:[#allocation4 + $0x69]]
        %2856 = vrot.lane.b32.xlu0 %v2732, 22
        %v2857 = vpop.permute.xlu0 %2856
        %2858 = vrot.lane.b32.xlu0 %v2735, 22
        %v2859 = vpop.permute.xlu0 %2858
        %2860 = vrot.lane.b32.xlu0 %v2738, 22
        %v2861 = vpop.permute.xlu0 %2860
        %2862 = vrot.lane.b32.xlu0 %v2741, 22
        %v2863 = vpop.permute.xlu0 %2862
        %v2864 = vsel %vm477, %v2861, %v2863
        %v2865 = vsel %vm477, %v2859, %v2861
        %v2866 = vsel %vm477, %v2857, %v2859
        %v2867 = vsel %vm477, %v2863, %v2857
        %v2868 = vstv %s2855
        %v2869 = vmul.f32 %v2868, %v2867
        %v2870 = vmul.f32 %v2868, %v2866
        %v2871 = vmul.f32 %v2868, %v2865
        %v2872 = vmul.f32 %v2868, %v2864
        %v2873 = vadd.f32 %v2851, %v2869
        %v2874 = vadd.f32 %v2852, %v2870
        %v2875 = vadd.f32 %v2853, %v2871
        %v2876 = vadd.f32 %v2854, %v2872
        %s2877 = sld [smem:[#allocation4 + $0x6a]]
        %2878 = vrot.lane.b32.xlu0 %v2732, 21
        %v2879 = vpop.permute.xlu0 %2878
        %2880 = vrot.lane.b32.xlu0 %v2735, 21
        %v2881 = vpop.permute.xlu0 %2880
        %2882 = vrot.lane.b32.xlu0 %v2738, 21
        %v2883 = vpop.permute.xlu0 %2882
        %2884 = vrot.lane.b32.xlu0 %v2741, 21
        %v2885 = vpop.permute.xlu0 %2884
        %v2886 = vsel %vm500, %v2883, %v2885
        %v2887 = vsel %vm500, %v2881, %v2883
        %v2888 = vsel %vm500, %v2879, %v2881
        %v2889 = vsel %vm500, %v2885, %v2879
        %v2890 = vstv %s2877
        %v2891 = vmul.f32 %v2890, %v2889
        %v2892 = vmul.f32 %v2890, %v2888
        %v2893 = vmul.f32 %v2890, %v2887
        %v2894 = vmul.f32 %v2890, %v2886
        %v2895 = vadd.f32 %v2873, %v2891
        %v2896 = vadd.f32 %v2874, %v2892
        %v2897 = vadd.f32 %v2875, %v2893
        %v2898 = vadd.f32 %v2876, %v2894
        %s2899 = sld [smem:[#allocation4 + $0x6b]]
        %2900 = vrot.lane.b32.xlu0 %v2732, 20
        %v2901 = vpop.permute.xlu0 %2900
        %2902 = vrot.lane.b32.xlu0 %v2735, 20
        %v2903 = vpop.permute.xlu0 %2902
        %2904 = vrot.lane.b32.xlu0 %v2738, 20
        %v2905 = vpop.permute.xlu0 %2904
        %2906 = vrot.lane.b32.xlu0 %v2741, 20
        %v2907 = vpop.permute.xlu0 %2906
        %v2908 = vsel %vm523, %v2905, %v2907
        %v2909 = vsel %vm523, %v2903, %v2905
        %v2910 = vsel %vm523, %v2901, %v2903
        %v2911 = vsel %vm523, %v2907, %v2901
        %v2912 = vstv %s2899
        %v2913 = vmul.f32 %v2912, %v2911
        %v2914 = vmul.f32 %v2912, %v2910
        %v2915 = vmul.f32 %v2912, %v2909
        %v2916 = vmul.f32 %v2912, %v2908
        %v2917 = vadd.f32 %v2895, %v2913
        %v2918 = vadd.f32 %v2896, %v2914
        %v2919 = vadd.f32 %v2897, %v2915
        %v2920 = vadd.f32 %v2898, %v2916
        %s2921 = sld [smem:[#allocation4 + $0x6c]]
        %2922 = vrot.lane.b32.xlu0 %v2732, 19
        %v2923 = vpop.permute.xlu0 %2922
        %2924 = vrot.lane.b32.xlu0 %v2735, 19
        %v2925 = vpop.permute.xlu0 %2924
        %2926 = vrot.lane.b32.xlu0 %v2738, 19
        %v2927 = vpop.permute.xlu0 %2926
        %2928 = vrot.lane.b32.xlu0 %v2741, 19
        %v2929 = vpop.permute.xlu0 %2928
        %v2930 = vsel %vm546, %v2927, %v2929
        %v2931 = vsel %vm546, %v2925, %v2927
        %v2932 = vsel %vm546, %v2923, %v2925
        %v2933 = vsel %vm546, %v2929, %v2923
        %v2934 = vstv %s2921
        %v2935 = vmul.f32 %v2934, %v2933
        %v2936 = vmul.f32 %v2934, %v2932
        %v2937 = vmul.f32 %v2934, %v2931
        %v2938 = vmul.f32 %v2934, %v2930
        %v2939 = vadd.f32 %v2917, %v2935
        %v2940 = vadd.f32 %v2918, %v2936
        %v2941 = vadd.f32 %v2919, %v2937
        %v2942 = vadd.f32 %v2920, %v2938
        %s2943 = sld [smem:[#allocation4 + $0x6d]]
        %2944 = vrot.lane.b32.xlu0 %v2732, 18
        %v2945 = vpop.permute.xlu0 %2944
        %2946 = vrot.lane.b32.xlu0 %v2735, 18
        %v2947 = vpop.permute.xlu0 %2946
        %2948 = vrot.lane.b32.xlu0 %v2738, 18
        %v2949 = vpop.permute.xlu0 %2948
        %2950 = vrot.lane.b32.xlu0 %v2741, 18
        %v2951 = vpop.permute.xlu0 %2950
        %v2952 = vsel %vm569, %v2949, %v2951
        %v2953 = vsel %vm569, %v2947, %v2949
        %v2954 = vsel %vm569, %v2945, %v2947
        %v2955 = vsel %vm569, %v2951, %v2945
        %v2956 = vstv %s2943
        %v2957 = vmul.f32 %v2956, %v2955
        %v2958 = vmul.f32 %v2956, %v2954
        %v2959 = vmul.f32 %v2956, %v2953
        %v2960 = vmul.f32 %v2956, %v2952
        %v2961 = vadd.f32 %v2939, %v2957
        %v2962 = vadd.f32 %v2940, %v2958
        %v2963 = vadd.f32 %v2941, %v2959
        %v2964 = vadd.f32 %v2942, %v2960
        %s2965 = sld [smem:[#allocation4 + $0x6e]]
        %2966 = vrot.lane.b32.xlu0 %v2732, 2
        %v2967 = vpop.permute.xlu0 %2966
        %2968 = vrot.lane.b32.xlu0 %v2735, 2
        %v2969 = vpop.permute.xlu0 %2968
        %2970 = vrot.lane.b32.xlu0 %v2738, 2
        %v2971 = vpop.permute.xlu0 %2970
        %2972 = vrot.lane.b32.xlu0 %v2741, 2
        %v2973 = vpop.permute.xlu0 %2972
        %v2974 = vsel %vm592, %v2971, %v2973
        %v2975 = vsel %vm592, %v2969, %v2971
        %v2976 = vsel %vm592, %v2967, %v2969
        %v2977 = vsel %vm592, %v2973, %v2967
        %v2978 = vstv %s2965
        %v2979 = vmul.f32 %v2978, %v2977
        %v2980 = vmul.f32 %v2978, %v2976
        %v2981 = vmul.f32 %v2978, %v2975
        %v2982 = vmul.f32 %v2978, %v2974
        %v2983 = vadd.f32 %v2961, %v2979
        %v2984 = vadd.f32 %v2962, %v2980
        %v2985 = vadd.f32 %v2963, %v2981
        %v2986 = vadd.f32 %v2964, %v2982
        %s2987 = sld [smem:[#allocation4 + $0x6f]]
        %2988 = vrot.lane.b32.xlu0 %v2732, 1
        %v2989 = vpop.permute.xlu0 %2988
        %2990 = vrot.lane.b32.xlu0 %v2735, 1
        %v2991 = vpop.permute.xlu0 %2990
        %2992 = vrot.lane.b32.xlu0 %v2738, 1
        %v2993 = vpop.permute.xlu0 %2992
        %2994 = vrot.lane.b32.xlu0 %v2741, 1
        %v2995 = vpop.permute.xlu0 %2994
        %v2996 = vsel %vm615, %v2993, %v2995
        %v2997 = vsel %vm615, %v2991, %v2993
        %v2998 = vsel %vm615, %v2989, %v2991
        %v2999 = vsel %vm615, %v2995, %v2989
        %v3000 = vstv %s2987
        %v3001 = vmul.f32 %v3000, %v2999
        %v3002 = vmul.f32 %v3000, %v2998
        %v3003 = vmul.f32 %v3000, %v2997
        %v3004 = vmul.f32 %v3000, %v2996
        %v3005 = vadd.f32 %v2983, %v3001
        %v3006 = vadd.f32 %v2984, %v3002
        %v3007 = vadd.f32 %v2985, %v3003
        %v3008 = vadd.f32 %v2986, %v3004
        %s3009 = sld [smem:[#allocation4 + $0x70]]
        %v3010 = vstv %s3009
        %v3011 = vmul.f32 %v3010, %v2712
        %v3012 = vmul.f32 %v3010, %v2713
        %v3013 = vmul.f32 %v3010, %v2714
        %v3014 = vmul.f32 %v3010, %v2715
        %v3015 = vmul.f32 %v3010, %v2716
        %v3016 = vmul.f32 %v3010, %v2717
        %v3017 = vmul.f32 %v3010, %v2718
        %v3018 = vmul.f32 %v3010, %v2719
        %v3027 = vrot.slane %v3011, 4
        %v3028 = vrot.slane %v3015, 4
        %v3029 = vsel %vm2729, %v3027, %v3028
        %v3030 = vrot.slane %v3012, 4
        %v3031 = vrot.slane %v3016, 4
        %v3032 = vsel %vm2729, %v3030, %v3031
        %v3033 = vrot.slane %v3013, 4
        %v3034 = vrot.slane %v3017, 4
        %v3035 = vsel %vm2729, %v3033, %v3034
        %v3036 = vrot.slane %v3014, 4
        %v3037 = vrot.slane %v3018, 4
        %v3038 = vsel %vm2729, %v3036, %v3037
        %v3043 = vadd.f32 %v3005, %v3029
        %v3044 = vadd.f32 %v3006, %v3032
        %v3045 = vadd.f32 %v3007, %v3035
        %v3046 = vadd.f32 %v3008, %v3038
        %s3047 = sld [smem:[#allocation4 + $0x71]]
        %3048 = vrot.lane.b32.xlu0 %v2732, 127
        %v3049 = vpop.permute.xlu0 %3048
        %3050 = vrot.lane.b32.xlu0 %v2735, 127
        %v3051 = vpop.permute.xlu0 %3050
        %3052 = vrot.lane.b32.xlu0 %v2738, 127
        %v3053 = vpop.permute.xlu0 %3052
        %3054 = vrot.lane.b32.xlu0 %v2741, 127
        %v3055 = vpop.permute.xlu0 %3054
        %v3056 = vsel %vm648, %v3053, %v3055
        %v3057 = vsel %vm648, %v3051, %v3053
        %v3058 = vsel %vm648, %v3049, %v3051
        %v3059 = vsel %vm648, %v3055, %v3049
        %v3060 = vstv %s3047
        %v3061 = vmul.f32 %v3060, %v3058
        %v3062 = vmul.f32 %v3060, %v3057
        %v3063 = vmul.f32 %v3060, %v3056
        %v3064 = vmul.f32 %v3060, %v3059
        %v3065 = vadd.f32 %v3043, %v3061
        %v3066 = vadd.f32 %v3044, %v3062
        %v3067 = vadd.f32 %v3045, %v3063
        %v3068 = vadd.f32 %v3046, %v3064
        %s3069 = sld [smem:[#allocation4 + $0x72]]
        %3070 = vrot.lane.b32.xlu0 %v2732, 126
        %v3071 = vpop.permute.xlu0 %3070
        %3072 = vrot.lane.b32.xlu0 %v2735, 126
        %v3073 = vpop.permute.xlu0 %3072
        %3074 = vrot.lane.b32.xlu0 %v2738, 126
        %v3075 = vpop.permute.xlu0 %3074
        %3076 = vrot.lane.b32.xlu0 %v2741, 126
        %v3077 = vpop.permute.xlu0 %3076
        %v3078 = vsel %vm671, %v3075, %v3077
        %v3079 = vsel %vm671, %v3073, %v3075
        %v3080 = vsel %vm671, %v3071, %v3073
        %v3081 = vsel %vm671, %v3077, %v3071
        %v3082 = vstv %s3069
        %v3083 = vmul.f32 %v3082, %v3080
        %v3084 = vmul.f32 %v3082, %v3079
        %v3085 = vmul.f32 %v3082, %v3078
        %v3086 = vmul.f32 %v3082, %v3081
        %v3087 = vadd.f32 %v3065, %v3083
        %v3088 = vadd.f32 %v3066, %v3084
        %v3089 = vadd.f32 %v3067, %v3085
        %v3090 = vadd.f32 %v3068, %v3086
        %s3091 = sld [smem:[#allocation4 + $0x73]]
        %3092 = vrot.lane.b32.xlu0 %v2732, 110
        %v3093 = vpop.permute.xlu0 %3092
        %3094 = vrot.lane.b32.xlu0 %v2735, 110
        %v3095 = vpop.permute.xlu0 %3094
        %3096 = vrot.lane.b32.xlu0 %v2738, 110
        %v3097 = vpop.permute.xlu0 %3096
        %3098 = vrot.lane.b32.xlu0 %v2741, 110
        %v3099 = vpop.permute.xlu0 %3098
        %v3100 = vsel %vm694, %v3097, %v3099
        %v3101 = vsel %vm694, %v3095, %v3097
        %v3102 = vsel %vm694, %v3093, %v3095
        %v3103 = vsel %vm694, %v3099, %v3093
        %v3104 = vstv %s3091
        %v3105 = vmul.f32 %v3104, %v3102
        %v3106 = vmul.f32 %v3104, %v3101
        %v3107 = vmul.f32 %v3104, %v3100
        %v3108 = vmul.f32 %v3104, %v3103
        %v3109 = vadd.f32 %v3087, %v3105
        %v3110 = vadd.f32 %v3088, %v3106
        %v3111 = vadd.f32 %v3089, %v3107
        %v3112 = vadd.f32 %v3090, %v3108
        %s3113 = sld [smem:[#allocation4 + $0x74]]
        %3114 = vrot.lane.b32.xlu0 %v2732, 109
        %v3115 = vpop.permute.xlu0 %3114
        %3116 = vrot.lane.b32.xlu0 %v2735, 109
        %v3117 = vpop.permute.xlu0 %3116
        %3118 = vrot.lane.b32.xlu0 %v2738, 109
        %v3119 = vpop.permute.xlu0 %3118
        %3120 = vrot.lane.b32.xlu0 %v2741, 109
        %v3121 = vpop.permute.xlu0 %3120
        %v3122 = vsel %vm717, %v3119, %v3121
        %v3123 = vsel %vm717, %v3117, %v3119
        %v3124 = vsel %vm717, %v3115, %v3117
        %v3125 = vsel %vm717, %v3121, %v3115
        %v3126 = vstv %s3113
        %v3127 = vmul.f32 %v3126, %v3124
        %v3128 = vmul.f32 %v3126, %v3123
        %v3129 = vmul.f32 %v3126, %v3122
        %v3130 = vmul.f32 %v3126, %v3125
        %v3131 = vadd.f32 %v3109, %v3127
        %v3132 = vadd.f32 %v3110, %v3128
        %v3133 = vadd.f32 %v3111, %v3129
        %v3134 = vadd.f32 %v3112, %v3130
        %s3135 = sld [smem:[#allocation4 + $0x75]]
        %3136 = vrot.lane.b32.xlu0 %v2732, 108
        %v3137 = vpop.permute.xlu0 %3136
        %3138 = vrot.lane.b32.xlu0 %v2735, 108
        %v3139 = vpop.permute.xlu0 %3138
        %3140 = vrot.lane.b32.xlu0 %v2738, 108
        %v3141 = vpop.permute.xlu0 %3140
        %3142 = vrot.lane.b32.xlu0 %v2741, 108
        %v3143 = vpop.permute.xlu0 %3142
        %v3144 = vsel %vm740, %v3141, %v3143
        %v3145 = vsel %vm740, %v3139, %v3141
        %v3146 = vsel %vm740, %v3137, %v3139
        %v3147 = vsel %vm740, %v3143, %v3137
        %v3148 = vstv %s3135
        %v3149 = vmul.f32 %v3148, %v3146
        %v3150 = vmul.f32 %v3148, %v3145
        %v3151 = vmul.f32 %v3148, %v3144
        %v3152 = vmul.f32 %v3148, %v3147
        %v3153 = vadd.f32 %v3131, %v3149
        %v3154 = vadd.f32 %v3132, %v3150
        %v3155 = vadd.f32 %v3133, %v3151
        %v3156 = vadd.f32 %v3134, %v3152
        %s3157 = sld [smem:[#allocation4 + $0x76]]
        %3158 = vrot.lane.b32.xlu0 %v2732, 107
        %v3159 = vpop.permute.xlu0 %3158
        %3160 = vrot.lane.b32.xlu0 %v2735, 107
        %v3161 = vpop.permute.xlu0 %3160
        %3162 = vrot.lane.b32.xlu0 %v2738, 107
        %v3163 = vpop.permute.xlu0 %3162
        %3164 = vrot.lane.b32.xlu0 %v2741, 107
        %v3165 = vpop.permute.xlu0 %3164
        %v3166 = vsel %vm763, %v3163, %v3165
        %v3167 = vsel %vm763, %v3161, %v3163
        %v3168 = vsel %vm763, %v3159, %v3161
        %v3169 = vsel %vm763, %v3165, %v3159
        %v3170 = vstv %s3157
        %v3171 = vmul.f32 %v3170, %v3168
        %v3172 = vmul.f32 %v3170, %v3167
        %v3173 = vmul.f32 %v3170, %v3166
        %v3174 = vmul.f32 %v3170, %v3169
        %v3175 = vadd.f32 %v3153, %v3171
        %v3176 = vadd.f32 %v3154, %v3172
        %v3177 = vadd.f32 %v3155, %v3173
        %v3178 = vadd.f32 %v3156, %v3174
        %s3179 = sld [smem:[#allocation4 + $0x77]]
        %3180 = vrot.lane.b32.xlu0 %v2732, 106
        %v3181 = vpop.permute.xlu0 %3180
        %3182 = vrot.lane.b32.xlu0 %v2735, 106
        %v3183 = vpop.permute.xlu0 %3182
        %3184 = vrot.lane.b32.xlu0 %v2738, 106
        %v3185 = vpop.permute.xlu0 %3184
        %3186 = vrot.lane.b32.xlu0 %v2741, 106
        %v3187 = vpop.permute.xlu0 %3186
        %v3188 = vsel %vm786, %v3185, %v3187
        %v3189 = vsel %vm786, %v3183, %v3185
        %v3190 = vsel %vm786, %v3181, %v3183
        %v3191 = vsel %vm786, %v3187, %v3181
        %v3192 = vstv %s3179
        %v3193 = vmul.f32 %v3192, %v3190
        %v3194 = vmul.f32 %v3192, %v3189
        %v3195 = vmul.f32 %v3192, %v3188
        %v3196 = vmul.f32 %v3192, %v3191
        %v3197 = vadd.f32 %v3175, %v3193
        %v3198 = vadd.f32 %v3176, %v3194
        %v3199 = vadd.f32 %v3177, %v3195
        %v3200 = vadd.f32 %v3178, %v3196
        %s3201 = sld [smem:[#allocation4 + $0x78]]
        %3202 = vrot.lane.b32.xlu0 %v2732, 90
        %v3203 = vpop.permute.xlu0 %3202
        %3204 = vrot.lane.b32.xlu0 %v2735, 90
        %v3205 = vpop.permute.xlu0 %3204
        %3206 = vrot.lane.b32.xlu0 %v2738, 90
        %v3207 = vpop.permute.xlu0 %3206
        %3208 = vrot.lane.b32.xlu0 %v2741, 90
        %v3209 = vpop.permute.xlu0 %3208
        %v3210 = vsel %vm809, %v3207, %v3209
        %v3211 = vsel %vm809, %v3205, %v3207
        %v3212 = vsel %vm809, %v3203, %v3205
        %v3213 = vsel %vm809, %v3209, %v3203
        %v3214 = vstv %s3201
        %v3215 = vmul.f32 %v3214, %v3212
        %v3216 = vmul.f32 %v3214, %v3211
        %v3217 = vmul.f32 %v3214, %v3210
        %v3218 = vmul.f32 %v3214, %v3213
        %v3219 = vadd.f32 %v3197, %v3215
        %v3220 = vadd.f32 %v3198, %v3216
        %v3221 = vadd.f32 %v3199, %v3217
        %v3222 = vadd.f32 %v3200, %v3218
        %s3223 = sld [smem:[#allocation4 + $0x79]]
        %3224 = vrot.lane.b32.xlu0 %v2732, 89
        %v3225 = vpop.permute.xlu0 %3224
        %3226 = vrot.lane.b32.xlu0 %v2735, 89
        %v3227 = vpop.permute.xlu0 %3226
        %3228 = vrot.lane.b32.xlu0 %v2738, 89
        %v3229 = vpop.permute.xlu0 %3228
        %3230 = vrot.lane.b32.xlu0 %v2741, 89
        %v3231 = vpop.permute.xlu0 %3230
        %v3232 = vsel %vm832, %v3229, %v3231
        %v3233 = vsel %vm832, %v3227, %v3229
        %v3234 = vsel %vm832, %v3225, %v3227
        %v3235 = vsel %vm832, %v3231, %v3225
        %v3236 = vstv %s3223
        %v3237 = vmul.f32 %v3236, %v3234
        %v3238 = vmul.f32 %v3236, %v3233
        %v3239 = vmul.f32 %v3236, %v3232
        %v3240 = vmul.f32 %v3236, %v3235
        %v3241 = vadd.f32 %v3219, %v3237
        %v3242 = vadd.f32 %v3220, %v3238
        %v3243 = vadd.f32 %v3221, %v3239
        %v3244 = vadd.f32 %v3222, %v3240
        %s3245 = sld [smem:[#allocation4 + $0x7a]]
        %3246 = vrot.lane.b32.xlu0 %v2732, 88
        %v3247 = vpop.permute.xlu0 %3246
        %3248 = vrot.lane.b32.xlu0 %v2735, 88
        %v3249 = vpop.permute.xlu0 %3248
        %3250 = vrot.lane.b32.xlu0 %v2738, 88
        %v3251 = vpop.permute.xlu0 %3250
        %3252 = vrot.lane.b32.xlu0 %v2741, 88
        %v3253 = vpop.permute.xlu0 %3252
        %v3254 = vsel %vm855, %v3251, %v3253
        %v3255 = vsel %vm855, %v3249, %v3251
        %v3256 = vsel %vm855, %v3247, %v3249
        %v3257 = vsel %vm855, %v3253, %v3247
        %v3258 = vstv %s3245
        %v3259 = vmul.f32 %v3258, %v3256
        %v3260 = vmul.f32 %v3258, %v3255
        %v3261 = vmul.f32 %v3258, %v3254
        %v3262 = vmul.f32 %v3258, %v3257
        %v3263 = vadd.f32 %v3241, %v3259
        %v3264 = vadd.f32 %v3242, %v3260
        %v3265 = vadd.f32 %v3243, %v3261
        %v3266 = vadd.f32 %v3244, %v3262
        %s3267 = sld [smem:[#allocation4 + $0x7b]]
        %3268 = vrot.lane.b32.xlu0 %v2732, 87
        %v3269 = vpop.permute.xlu0 %3268
        %3270 = vrot.lane.b32.xlu0 %v2735, 87
        %v3271 = vpop.permute.xlu0 %3270
        %3272 = vrot.lane.b32.xlu0 %v2738, 87
        %v3273 = vpop.permute.xlu0 %3272
        %3274 = vrot.lane.b32.xlu0 %v2741, 87
        %v3275 = vpop.permute.xlu0 %3274
        %v3276 = vsel %vm878, %v3273, %v3275
        %v3277 = vsel %vm878, %v3271, %v3273
        %v3278 = vsel %vm878, %v3269, %v3271
        %v3279 = vsel %vm878, %v3275, %v3269
        %v3280 = vstv %s3267
        %v3281 = vmul.f32 %v3280, %v3278
        %v3282 = vmul.f32 %v3280, %v3277
        %v3283 = vmul.f32 %v3280, %v3276
        %v3284 = vmul.f32 %v3280, %v3279
        %v3285 = vadd.f32 %v3263, %v3281
        %v3286 = vadd.f32 %v3264, %v3282
        %v3287 = vadd.f32 %v3265, %v3283
        %v3288 = vadd.f32 %v3266, %v3284
        %s3289 = sld [smem:[#allocation4 + $0x7c]]
        %3290 = vrot.lane.b32.xlu0 %v2732, 86
        %v3291 = vpop.permute.xlu0 %3290
        %3292 = vrot.lane.b32.xlu0 %v2735, 86
        %v3293 = vpop.permute.xlu0 %3292
        %3294 = vrot.lane.b32.xlu0 %v2738, 86
        %v3295 = vpop.permute.xlu0 %3294
        %3296 = vrot.lane.b32.xlu0 %v2741, 86
        %v3297 = vpop.permute.xlu0 %3296
        %v3298 = vsel %vm901, %v3295, %v3297
        %v3299 = vsel %vm901, %v3293, %v3295
        %v3300 = vsel %vm901, %v3291, %v3293
        %v3301 = vsel %vm901, %v3297, %v3291
        %v3302 = vstv %s3289
        %v3303 = vmul.f32 %v3302, %v3300
        %v3304 = vmul.f32 %v3302, %v3299
        %v3305 = vmul.f32 %v3302, %v3298
        %v3306 = vmul.f32 %v3302, %v3301
        %v3307 = vadd.f32 %v3285, %v3303
        %v3308 = vadd.f32 %v3286, %v3304
        %v3309 = vadd.f32 %v3287, %v3305
        %v3310 = vadd.f32 %v3288, %v3306
        %3311 = vst [vmem:[%s206] sm:$0xff] %v3307
        %3312 = vst [vmem:[%s206 + $0x8] sm:$0xff] %v3308
        %3313 = vst [vmem:[%s206 + $0x10] sm:$0xff] %v3309
        %3314 = vst [vmem:[%s206 + $0x18] sm:$0xff] %v3310
        %s3315 = sand.u32 %s91, 1
        %s3316 = scalar_lea.sflag [#allocation8], %s3315
        %s3317 = sand.u32 %s91, 1
        %s3318 = smul.addr %s3317, 32
        %s3319 = scalar_lea.vmem [#allocation11], %s3318
        // Predicated region
        $region37: #{tpu_custom_call.1} parent=27 // pred_check
          %p3320 = pneg %p101
        $region38: #{tpu_custom_call.1} parent=27 // pred_check_branch
          %3322 = sbr.rel (%p3320) target = $region40
        $region39: #{tpu_custom_call.1} parent=27 // pred_region
          %s3324 = ssub.s32 512, 512
          %3325 = vsyncadd %s3316, %s3324
          %s3326 = smul.addr %s31, 4
          %s3327 = smul.addr %s3326, 128
          %s3328 = scalar_lea.hbm %s4, %s3327
          %s3330 = sshll.u32 %s3319, 4
          %s3331 = int_to_ptr.vmem [resolvable:$true] %s3330
          %3333 = dma.vmem_to_hbm [thread:$0]  %s3331, 512, %s3328, %s3316
        $region40: #{tpu_custom_call.1} parent=27 // pred_fallthru
          _
      $region28: #{tpu_custom_call.1} parent=5 // pred_fallthru
        _
      %p3334 = scmp.le.s32.totalorder 2, %s26
      // Predicated region
      $region41: #{tpu_custom_call.1} parent=5 // pred_check
        %p3335 = pneg %p3334
      $region42: #{tpu_custom_call.1} parent=5 // pred_check_branch
        %3337 = sbr.rel (%p3335) target = $region44
      $region43: #{tpu_custom_call.1} parent=5 // pred_region
        %s3338 = ssub.s32 %s26, 2
        // Predicated region
        $region45: #{tpu_custom_call.1} parent=43 // pred_check
          %p3339 = pneg %p107
        $region46: #{tpu_custom_call.1} parent=43 // pred_check_branch
          %3341 = sbr.rel (%p3339) target = $region48
        $region47: #{tpu_custom_call.1} parent=43 // pred_region
          %s3342 = sand.u32 %s92, 1
          %s3343 = scalar_lea.sflag [#allocation8], %s3342
          %s3344 = sand.u32 %s92, 1
          %s3345 = smul.addr %s3344, 32
          %s3346 = scalar_lea.vmem [#allocation11], %s3345
          %3347 = dma.done %s3343, 512
        $region48: #{tpu_custom_call.1} parent=43 // pred_fallthru
          _
      $region44: #{tpu_custom_call.1} parent=5 // pred_fallthru
        _
    $region6: #{tpu_custom_call.1} parent=1 // loop_footer
      %s30 = sadd.s32 1, %s26
    $region7: #{tpu_custom_call.1} parent=1 // loop_footer_branch
      %25 = sbr.rel target = $region3
    $region8: #{tpu_custom_call.1} parent=1 // loop_exit
      _
    %3348 = vsyncpa [#allocation7], 1
    %s3349 = scalar_lea.sflag [#allocation7], 1
    %3350 = vsyncpa %s3349, 1
    %3351 = vsyncpa [#allocation10], 1
    %s3352 = scalar_lea.sflag [#allocation10], 1
    %3353 = vsyncpa %s3352, 1
    %3354 = vsyncpa [#allocation8], 1
    %s3355 = scalar_lea.sflag [#allocation8], 1
    %3356 = vsyncpa %s3355, 1

</llo_original>
